<compile_context>
chip_gen: v6e
topology: v6e:2x2x1
jax: 0.10.0
libtpu: 0.0.40
codegen_flags: <defaults>
</compile_context>

<pallas_src>
import functools

import jax
import jax.numpy as jnp
import numpy as np
from jax.experimental import pallas as pl
from jax.experimental.pallas import tpu as pltpu


# ------------------------------- kernel body -------------------------------- #

def _attention_tile(x_ref, wq_ref, wk_ref, wv_ref, wo_ref,
                    bq_ref, bk_ref, bv_ref, bo_ref, rpb_ref, mask_ref, o_ref,
                    *, num_heads, n_mask_windows):
    """One tile of `tb` windows, fully fused: QKV proj -> attention -> out proj."""
    tb, N, C = x_ref.shape
    hd = C // num_heads
    cdt = x_ref.dtype                         # MXU operand dtype (bf16 or f32)
    use_approx = jnp.dtype(cdt) != jnp.float32

    x2 = x_ref[...].reshape(tb * N, C)        # leading-dim merge only (no relayout)

    # Mask tile built once (hoisted out of the head loop): window j uses
    # mask[j % nW]; tb is a multiple of nW so a pure leading-dim broadcast works.
    if mask_ref is not None:
        nW = n_mask_windows
        mask_tile = jnp.broadcast_to(
            mask_ref[...][None], (tb // nW, nW, N, N)).reshape(tb, N, N)
    else:
        mask_tile = None

    # Head-merge fused into the output projection: accumulate o_h @ Wproj[h].
    acc = jnp.zeros((tb * N, C), jnp.float32)

    for h in range(num_heads):                # static unroll; num_heads is small;
        # all per-head slices below are leading-dim indexed (no lane slicing).
        q = jnp.dot(x2, wq_ref[h], preferred_element_type=jnp.float32) + bq_ref[h]
        k = jnp.dot(x2, wk_ref[h], preferred_element_type=jnp.float32) + bk_ref[h]
        v = jnp.dot(x2, wv_ref[h], preferred_element_type=jnp.float32) + bv_ref[h]
        q3 = q.astype(cdt).reshape(tb, N, hd)
        k3 = k.astype(cdt).reshape(tb, N, hd)
        v3 = v.astype(cdt).reshape(tb, N, hd)

        # scores (batched over the window tile), f32 accumulation
        s = jnp.einsum("bqd,bkd->bqk", q3, k3,
                       preferred_element_type=jnp.float32)
        s = s + rpb_ref[h][None]              # relative position bias (N, N)
        if mask_tile is not None:
            s = s + mask_tile

        # numerically stable softmax, kept in f32 (VPU/EUP); EUP reciprocal
        m = jnp.max(s, axis=-1, keepdims=True)
        p = jnp.exp(s - m)
        p = p * pl.reciprocal(jnp.sum(p, axis=-1, keepdims=True),
                              approx=use_approx)

        o3 = jnp.einsum("bqk,bkd->bqd", p.astype(cdt), v3,
                        preferred_element_type=jnp.float32)
        acc = acc + jnp.dot(o3.reshape(tb * N, hd).astype(cdt), wo_ref[h],
                            preferred_element_type=jnp.float32)

    y = acc + bo_ref[...]
    o_ref[...] = y.reshape(tb, N, C).astype(o_ref.dtype)


def _wattn_kernel(x_ref, wq_ref, wk_ref, wv_ref, wo_ref,
                  bq_ref, bk_ref, bv_ref, bo_ref, rpb_ref, o_ref,
                  *, num_heads):
    _attention_tile(x_ref, wq_ref, wk_ref, wv_ref, wo_ref,
                    bq_ref, bk_ref, bv_ref, bo_ref, rpb_ref, None, o_ref,
                    num_heads=num_heads, n_mask_windows=1)


def _wattn_kernel_masked(x_ref, wq_ref, wk_ref, wv_ref, wo_ref,
                         bq_ref, bk_ref, bv_ref, bo_ref, rpb_ref, mask_ref, o_ref,
                         *, num_heads, n_mask_windows):
    _attention_tile(x_ref, wq_ref, wk_ref, wv_ref, wo_ref,
                    bq_ref, bk_ref, bv_ref, bo_ref, rpb_ref, mask_ref, o_ref,
                    num_heads=num_heads, n_mask_windows=n_mask_windows)


# ------------------------------ tile selection ------------------------------- #

def _choose_tb(B_, group, tb_cap, target_steps=4):
    """Largest divisor of B_ that is a multiple of `group`, fits the VMEM cap,
    and (preferably) keeps at least `target_steps` grid steps for pipelining /
    megacore sharding (v7x has 2 TensorCores)."""
    group = max(1, group)
    cands = [d for d in range(group, B_ + 1, group) if B_ % d == 0]
    if not cands:
        return B_
    fit = [d for d in cands if d <= tb_cap] or [cands[0]]
    for steps in (target_steps, 2, 1):
        ok = [d for d in fit if B_ // d >= steps]
        if ok:
            return max(ok)
    return fit[0]


# ------------------------------ kernel wrapper ------------------------------- #

def window_attention_forward(params, x, mask=None, *, compute_dtype=None):
    """x: (B_, N, C) windows; mask: optional (nW, N, N) additive mask (B_ % nW == 0).

    MXU operands run in `compute_dtype` (default: x.dtype); softmax is f32."""
    B_, N, C = x.shape
    nH = int(params["num_heads"])
    hd = C // nH
    scale = params["scale"]
    cdt = jnp.dtype(compute_dtype) if compute_dtype is not None else x.dtype

    nW = None
    if mask is not None:
        nW = int(mask.shape[0])
        if B_ % nW != 0:
            raise ValueError("B_ must be a multiple of mask.shape[0]")

    # ---- parameter prep (tiny, evaluated once outside the kernel) ---------- #
    # relative position bias (parameter-only gather) -> (nH, N, N), f32
    rpb = params["relative_position_bias_table"][
        params["relative_position_index"].reshape(-1)]
    rpb = rpb.reshape(N, N, nH).transpose(2, 0, 1).astype(jnp.float32)

    w_qkv = params["w_qkv"]                      # (C, 3C), columns [3, head, hd]
    b_qkv = params["b_qkv"]                      # (3C,)

    def head_split(w):                           # (C, C) [head,hd cols] -> (nH, C, hd)
        return jnp.transpose(w.reshape(C, nH, hd), (1, 0, 2))

    wq = (head_split(w_qkv[:, 0 * C:1 * C]) * scale).astype(cdt)  # scale folded in
    wk = head_split(w_qkv[:, 1 * C:2 * C]).astype(cdt)
    wv = head_split(w_qkv[:, 2 * C:3 * C]).astype(cdt)
    wo = params["w_proj"].reshape(nH, hd, C).astype(cdt)          # row-split by head

    bq = (b_qkv[0 * C:1 * C].reshape(nH, 1, hd) * scale).astype(jnp.float32)
    bk = b_qkv[1 * C:2 * C].reshape(nH, 1, hd).astype(jnp.float32)
    bv = b_qkv[2 * C:3 * C].reshape(nH, 1, hd).astype(jnp.float32)
    bo = params["b_proj"].reshape(1, C).astype(jnp.float32)

    x_c = x.astype(cdt)

    # ---- generation-aware VMEM budget and tile size ------------------------ #
    try:
        vmem_cap = int(pltpu.get_tpu_info().vmem_capacity_bytes)
    except Exception:
        vmem_cap = 64 * 1024 * 1024              # v7x-safe fallback
    vmem_limit = max(32 * 1024 * 1024,
                     min(96 * 1024 * 1024, vmem_cap * 3 // 4))

    cbytes = jnp.dtype(cdt).itemsize
    resident = (cbytes * 4 * C * C               # wq/wk/wv/wo
                + 4 * (3 * nH * hd + C)          # biases (f32)
                + 4 * nH * N * N                 # rel-pos bias
                + (4 * nW * N * N if nW else 0))
    per_win = (2 * 2 * N * C * cbytes            # double-buffered x / out tiles
               + N * C * cbytes                  # x2 copy
               + 4 * (3 * N * hd                 # q, k, v (f32 pre-downcast)
                      + 2 * N * N                # scores + probs (f32)
                      + N * hd                   # per-head attention output
                      + N * C))                  # projection accumulator
    tb_cap = max(1, (int(vmem_limit * 0.8) - resident) // max(per_win, 1))
    tb = _choose_tb(B_, nW or 1, tb_cap, target_steps=4)

    # ---- pallas_call -------------------------------------------------------- #
    const3 = lambda i: (0, 0, 0)
    in_specs = [
        pl.BlockSpec((tb, N, C), lambda i: (i, 0, 0)),   # x tile (pipelined)
        pl.BlockSpec((nH, C, hd), const3),               # Wq (resident, scaled)
        pl.BlockSpec((nH, C, hd), const3),               # Wk
        pl.BlockSpec((nH, C, hd), const3),               # Wv
        pl.BlockSpec((nH, hd, C), const3),               # Wproj (row-split by head)
        pl.BlockSpec((nH, 1, hd), const3),               # bq (scaled)
        pl.BlockSpec((nH, 1, hd), const3),               # bk
        pl.BlockSpec((nH, 1, hd), const3),               # bv
        pl.BlockSpec((1, C), lambda i: (0, 0)),          # bproj
        pl.BlockSpec((nH, N, N), const3),                # rel-pos bias
    ]
    args = [x_c, wq, wk, wv, wo, bq, bk, bv, bo, rpb]

    if mask is None:
        kernel = functools.partial(_wattn_kernel, num_heads=nH)
    else:
        # Mask stays fully resident at (nW, N, N); never tiled/duplicated to B_.
        in_specs.append(pl.BlockSpec((nW, N, N), const3))
        args.append(mask.astype(jnp.float32))
        kernel = functools.partial(_wattn_kernel_masked, num_heads=nH,
                                   n_mask_windows=nW)

    return pl.pallas_call(
        kernel,
        out_shape=jax.ShapeDtypeStruct((B_, N, C), x.dtype),
        grid=(B_ // tb,),
        in_specs=in_specs,
        out_specs=pl.BlockSpec((tb, N, C), lambda i: (i, 0, 0)),
        compiler_params=pltpu.CompilerParams(
            dimension_semantics=("parallel",),
            vmem_limit_bytes=vmem_limit,
        ),
    )(*args)


# -------------------------------- parameters --------------------------------- #

def make_relative_position_index(window_size):
    Wh, Ww = window_size
    coords = np.stack(np.meshgrid(np.arange(Wh), np.arange(Ww), indexing="ij"))
    coords_flatten = coords.reshape(2, -1)                         # (2, N)
    rel = coords_flatten[:, :, None] - coords_flatten[:, None, :]  # (2, N, N)
    rel = rel.transpose(1, 2, 0).astype(np.int64)
    rel[:, :, 0] += Wh - 1
    rel[:, :, 1] += Ww - 1
    rel[:, :, 0] *= 2 * Ww - 1
    return jnp.asarray(rel.sum(-1), dtype=jnp.int32)               # (N, N)


def init_window_attention(key, dim, window_size, num_heads, qkv_bias=True,
                          qk_scale=None):
    Wh, Ww = window_size
    hd = dim // num_heads
    k1, k2, k3, k4, k5 = jax.random.split(key, 5)
    return {
        "num_heads": num_heads,
        "window_size": window_size,
        "scale": float(qk_scale) if qk_scale is not None else float(hd) ** (-0.5),
        "relative_position_bias_table":
            0.02 * jax.random.normal(k1, ((2 * Wh - 1) * (2 * Ww - 1), num_heads),
                                     jnp.float32),
        "relative_position_index": make_relative_position_index(window_size),
        # weights stored (in, out): y = x @ W + b; qkv columns ordered [3, head, hd]
        "w_qkv": jax.random.normal(k2, (dim, 3 * dim), jnp.float32) / np.sqrt(dim),
        "b_qkv": (0.02 * jax.random.normal(k3, (3 * dim,), jnp.float32)) if qkv_bias
                 else jnp.zeros((3 * dim,), jnp.float32),
        "w_proj": jax.random.normal(k4, (dim, dim), jnp.float32) / np.sqrt(dim),
        "b_proj": 0.02 * jax.random.normal(k5, (dim,), jnp.float32),
    }


# ---------------------------- pure-JAX reference ------------------------------ #

def window_attention_reference(params, x, mask=None):
    B_, N, C = x.shape
    nH = params["num_heads"]
    hd = C // nH
    scale = params["scale"]
    hp = jax.lax.Precision.HIGHEST

    qkv = jnp.einsum("bnc,cd->bnd", x, params["w_qkv"], precision=hp) + params["b_qkv"]
    qkv = qkv.reshape(B_, N, 3, nH, hd).transpose(2, 0, 3, 1, 4)
    q, k, v = qkv[0] * scale, qkv[1], qkv[2]

    attn = jnp.einsum("bhqd,bhkd->bhqk", q, k, precision=hp)
    rpb = params["relative_position_bias_table"][
        params["relative_position_index"].reshape(-1)]
    rpb = rpb.reshape(N, N, nH).transpose(2, 0, 1)
    attn = attn + rpb[None]
    if mask is not None:
        nW = mask.shape[0]
        attn = attn.reshape(B_ // nW, nW, nH, N, N) + mask[None, :, None]
        attn = attn.reshape(-1, nH, N, N)
    attn = jax.nn.softmax(attn, axis=-1)

    out = jnp.einsum("bhqk,bhkd->bhqd", attn, v, precision=hp)
    out = out.transpose(0, 2, 1, 3).reshape(B_, N, C)
    return jnp.einsum("bnc,cd->bnd", out, params["w_proj"], precision=hp) + params["b_proj"]


# ----------------------------------- main ------------------------------------- #

if __name__ == "__main__":
    key = jax.random.PRNGKey(0)
    kx, kp, km = jax.random.split(key, 3)

    dim, num_heads, window_size = 32, 4, (4, 4)
    N = window_size[0] * window_size[1]
    B_ = 8  # number of windows in the batch
    x = jax.random.normal(kx, (B_, N, dim), jnp.float32)
    params = init_window_attention(kp, dim, window_size, num_heads)

    # f32 path (exact parity with the reference), mask=None
    out = jax.block_until_ready(window_attention_forward(params, x))
    assert out.shape == (B_, N, dim), out.shape
    ref = window_attention_reference(params, x)
    np.testing.assert_allclose(np.asarray(out), np.asarray(ref),
                               rtol=1e-3, atol=1e-3)

    # masked (shifted-window) path; mask is kept resident at (nW, N, N)
    nW = 2
    mask = jnp.where(jax.random.uniform(km, (nW, N, N)) > 0.5, 0.0, -100.0)
    mask = mask.astype(jnp.float32)
    out_m = jax.block_until_ready(window_attention_forward(params, x, mask))
    ref_m = window_attention_reference(params, x, mask)
    np.testing.assert_allclose(np.asarray(out_m), np.asarray(ref_m),
                               rtol=1e-3, atol=1e-3)

    # bf16 MXU path (f32 softmax / accumulation) — performance configuration
    out_bf = jax.block_until_ready(
        window_attention_forward(params, x.astype(jnp.bfloat16), mask))
    np.testing.assert_allclose(np.asarray(out_bf.astype(jnp.float32)),
                               np.asarray(ref_m), rtol=1e-1, atol=1e-1)

    print("KERNEL_OK")
</pallas_src>

<mosaic_0001>
module attributes {stable_mosaic.version = 11 : i64} {
  func.func @_wattn_kernel(%arg0: i32, %arg1: memref<2x16x32xf32, #tpu.memory_space<vmem>>, %arg2: memref<4x32x8xf32, #tpu.memory_space<vmem>>, %arg3: memref<4x32x8xf32, #tpu.memory_space<vmem>>, %arg4: memref<4x32x8xf32, #tpu.memory_space<vmem>>, %arg5: memref<4x8x32xf32, #tpu.memory_space<vmem>>, %arg6: memref<4x1x8xf32, #tpu.memory_space<vmem>>, %arg7: memref<4x1x8xf32, #tpu.memory_space<vmem>>, %arg8: memref<4x1x8xf32, #tpu.memory_space<vmem>>, %arg9: memref<1x32xf32, #tpu.memory_space<vmem>>, %arg10: memref<4x16x16xf32, #tpu.memory_space<vmem>>, %arg11: memref<2x16x32xf32, #tpu.memory_space<vmem>>) attributes {dimension_semantics = [#tpu.dimension_semantics<parallel>], iteration_bounds = array<i64: 4>, scalar_prefetch = 0 : i64, scratch_operands = 0 : i64, tpu.core_type = #tpu.core_type<tc>, window_params = [{transform_indices = @transform_0, window_bounds = array<i64: 2, 16, 32>}, {pipeline_mode = #tpu.pipeline_mode<synchronous>, transform_indices = @transform_1, window_bounds = array<i64: 4, 32, 8>}, {pipeline_mode = #tpu.pipeline_mode<synchronous>, transform_indices = @transform_2, window_bounds = array<i64: 4, 32, 8>}, {pipeline_mode = #tpu.pipeline_mode<synchronous>, transform_indices = @transform_3, window_bounds = array<i64: 4, 32, 8>}, {pipeline_mode = #tpu.pipeline_mode<synchronous>, transform_indices = @transform_4, window_bounds = array<i64: 4, 8, 32>}, {pipeline_mode = #tpu.pipeline_mode<synchronous>, transform_indices = @transform_5, window_bounds = array<i64: 4, 1, 8>}, {pipeline_mode = #tpu.pipeline_mode<synchronous>, transform_indices = @transform_6, window_bounds = array<i64: 4, 1, 8>}, {pipeline_mode = #tpu.pipeline_mode<synchronous>, transform_indices = @transform_7, window_bounds = array<i64: 4, 1, 8>}, {pipeline_mode = #tpu.pipeline_mode<synchronous>, transform_indices = @transform_8, window_bounds = array<i64: 1, 32>}, {pipeline_mode = #tpu.pipeline_mode<synchronous>, transform_indices = @transform_9, window_bounds = array<i64: 4, 16, 16>}, {transform_indices = @transform_10, window_bounds = array<i64: 2, 16, 32>}]} {
    %c0 = arith.constant 0 : index
    %c0_0 = arith.constant 0 : index
    %c0_1 = arith.constant 0 : index
    %0 = vector.load %arg1[%c0, %c0_0, %c0_1] : memref<2x16x32xf32, #tpu.memory_space<vmem>>, vector<2x16x32xf32>
    %1 = vector.shape_cast %0 : vector<2x16x32xf32> to vector<32x32xf32>
    %cst = arith.constant 0.000000e+00 : f32
    %2 = vector.broadcast %cst : f32 to vector<32x32xf32>
    %c0_2 = arith.constant 0 : index
    %c0_3 = arith.constant 0 : index
    %c0_4 = arith.constant 0 : index
    %3 = vector.load %arg2[%c0_2, %c0_3, %c0_4] : memref<4x32x8xf32, #tpu.memory_space<vmem>>, vector<1x32x8xf32>
    %4 = vector.shape_cast %3 : vector<1x32x8xf32> to vector<32x8xf32>
    %cst_5 = arith.constant dense<0.000000e+00> : vector<32x8xf32>
    %5 = tpu.matmul %1, %4, %cst_5 {dimension_numbers = #tpu.dot_dimension_numbers<[1], [0], [0], [1], [0, 0, 1, 1], [], []>} : vector<32x32xf32>, vector<32x8xf32>, vector<32x8xf32> -> vector<32x8xf32>
    %c0_6 = arith.constant 0 : index
    %c0_7 = arith.constant 0 : index
    %c0_8 = arith.constant 0 : index
    %6 = vector.load %arg6[%c0_6, %c0_7, %c0_8] : memref<4x1x8xf32, #tpu.memory_space<vmem>>, vector<1x1x8xf32>
    %7 = vector.shape_cast %6 : vector<1x1x8xf32> to vector<1x8xf32>
    %8 = vector.broadcast %7 : vector<1x8xf32> to vector<32x8xf32>
    %9 = arith.addf %5, %8 : vector<32x8xf32>
    %c0_9 = arith.constant 0 : index
    %c0_10 = arith.constant 0 : index
    %c0_11 = arith.constant 0 : index
    %10 = vector.load %arg3[%c0_9, %c0_10, %c0_11] : memref<4x32x8xf32, #tpu.memory_space<vmem>>, vector<1x32x8xf32>
    %11 = vector.shape_cast %10 : vector<1x32x8xf32> to vector<32x8xf32>
    %cst_12 = arith.constant dense<0.000000e+00> : vector<32x8xf32>
    %12 = tpu.matmul %1, %11, %cst_12 {dimension_numbers = #tpu.dot_dimension_numbers<[1], [0], [0], [1], [0, 0, 1, 1], [], []>} : vector<32x32xf32>, vector<32x8xf32>, vector<32x8xf32> -> vector<32x8xf32>
    %c0_13 = arith.constant 0 : index
    %c0_14 = arith.constant 0 : index
    %c0_15 = arith.constant 0 : index
    %13 = vector.load %arg7[%c0_13, %c0_14, %c0_15] : memref<4x1x8xf32, #tpu.memory_space<vmem>>, vector<1x1x8xf32>
    %14 = vector.shape_cast %13 : vector<1x1x8xf32> to vector<1x8xf32>
    %15 = vector.broadcast %14 : vector<1x8xf32> to vector<32x8xf32>
    %16 = arith.addf %12, %15 : vector<32x8xf32>
    %c0_16 = arith.constant 0 : index
    %c0_17 = arith.constant 0 : index
    %c0_18 = arith.constant 0 : index
    %17 = vector.load %arg4[%c0_16, %c0_17, %c0_18] : memref<4x32x8xf32, #tpu.memory_space<vmem>>, vector<1x32x8xf32>
    %18 = vector.shape_cast %17 : vector<1x32x8xf32> to vector<32x8xf32>
    %cst_19 = arith.constant dense<0.000000e+00> : vector<32x8xf32>
    %19 = tpu.matmul %1, %18, %cst_19 {dimension_numbers = #tpu.dot_dimension_numbers<[1], [0], [0], [1], [0, 0, 1, 1], [], []>} : vector<32x32xf32>, vector<32x8xf32>, vector<32x8xf32> -> vector<32x8xf32>
    %c0_20 = arith.constant 0 : index
    %c0_21 = arith.constant 0 : index
    %c0_22 = arith.constant 0 : index
    %20 = vector.load %arg8[%c0_20, %c0_21, %c0_22] : memref<4x1x8xf32, #tpu.memory_space<vmem>>, vector<1x1x8xf32>
    %21 = vector.shape_cast %20 : vector<1x1x8xf32> to vector<1x8xf32>
    %22 = vector.broadcast %21 : vector<1x8xf32> to vector<32x8xf32>
    %23 = arith.addf %19, %22 : vector<32x8xf32>
    %24 = vector.shape_cast %9 : vector<32x8xf32> to vector<2x16x8xf32>
    %25 = vector.shape_cast %16 : vector<32x8xf32> to vector<2x16x8xf32>
    %26 = vector.shape_cast %23 : vector<32x8xf32> to vector<2x16x8xf32>
    "tpu.trace_start"() <{level = 10 : i32, message = "bqd,bkd->bqk"}> : () -> ()
    %cst_23 = arith.constant dense<0.000000e+00> : vector<2x16x16xf32>
    %27 = tpu.matmul %24, %25, %cst_23 {dimension_numbers = #tpu.dot_dimension_numbers<[2], [2], [1], [1], [0, 0, 0, 1, 1, 1], [0], [0]>} : vector<2x16x8xf32>, vector<2x16x8xf32>, vector<2x16x16xf32> -> vector<2x16x16xf32>
    "tpu.trace_stop"() : () -> ()
    %c0_24 = arith.constant 0 : index
    %c0_25 = arith.constant 0 : index
    %c0_26 = arith.constant 0 : index
    %28 = vector.load %arg10[%c0_24, %c0_25, %c0_26] : memref<4x16x16xf32, #tpu.memory_space<vmem>>, vector<1x16x16xf32>
    %29 = vector.shape_cast %28 : vector<1x16x16xf32> to vector<16x16xf32>
    %30 = vector.shape_cast %29 : vector<16x16xf32> to vector<1x16x16xf32>
    %31 = vector.broadcast %30 : vector<1x16x16xf32> to vector<2x16x16xf32>
    %32 = arith.addf %27, %31 : vector<2x16x16xf32>
    %cst_27 = arith.constant dense<0xFF800000> : vector<2x16xf32>
    %33 = vector.multi_reduction <maximumf>, %32, %cst_27 [2] : vector<2x16x16xf32> to vector<2x16xf32>
    %34 = vector.shape_cast %33 : vector<2x16xf32> to vector<2x16x1xf32>
    %35 = vector.broadcast %34 : vector<2x16x1xf32> to vector<2x16x16xf32>
    %36 = arith.subf %32, %35 : vector<2x16x16xf32>
    %37 = math.exp %36 : vector<2x16x16xf32>
    %cst_28 = arith.constant dense<0.000000e+00> : vector<2x16xf32>
    %38 = vector.multi_reduction <add>, %37, %cst_28 [2] : vector<2x16x16xf32> to vector<2x16xf32>
    %39 = vector.shape_cast %38 : vector<2x16xf32> to vector<2x16x1xf32>
    %40 = tpu.reciprocal %39 : vector<2x16x1xf32> -> vector<2x16x1xf32>
    %41 = vector.broadcast %40 : vector<2x16x1xf32> to vector<2x16x16xf32>
    %42 = arith.mulf %37, %41 : vector<2x16x16xf32>
    "tpu.trace_start"() <{level = 10 : i32, message = "bqk,bkd->bqd"}> : () -> ()
    %cst_29 = arith.constant dense<0.000000e+00> : vector<2x16x8xf32>
    %43 = tpu.matmul %42, %26, %cst_29 {dimension_numbers = #tpu.dot_dimension_numbers<[2], [1], [1], [2], [0, 0, 0, 1, 1, 2], [0], [0]>} : vector<2x16x16xf32>, vector<2x16x8xf32>, vector<2x16x8xf32> -> vector<2x16x8xf32>
    "tpu.trace_stop"() : () -> ()
    %44 = vector.shape_cast %43 : vector<2x16x8xf32> to vector<32x8xf32>
    %c0_30 = arith.constant 0 : index
    %c0_31 = arith.constant 0 : index
    %c0_32 = arith.constant 0 : index
    %45 = vector.load %arg5[%c0_30, %c0_31, %c0_32] : memref<4x8x32xf32, #tpu.memory_space<vmem>>, vector<1x8x32xf32>
    %46 = vector.shape_cast %45 : vector<1x8x32xf32> to vector<8x32xf32>
    %cst_33 = arith.constant dense<0.000000e+00> : vector<32x32xf32>
    %47 = tpu.matmul %44, %46, %cst_33 {dimension_numbers = #tpu.dot_dimension_numbers<[1], [0], [0], [1], [0, 0, 1, 1], [], []>} : vector<32x8xf32>, vector<8x32xf32>, vector<32x32xf32> -> vector<32x32xf32>
    %48 = arith.addf %2, %47 : vector<32x32xf32>
    %c1 = arith.constant 1 : index
    %c0_34 = arith.constant 0 : index
    %c0_35 = arith.constant 0 : index
    %49 = vector.load %arg2[%c1, %c0_34, %c0_35] : memref<4x32x8xf32, #tpu.memory_space<vmem>>, vector<1x32x8xf32>
    %50 = vector.shape_cast %49 : vector<1x32x8xf32> to vector<32x8xf32>
    %cst_36 = arith.constant dense<0.000000e+00> : vector<32x8xf32>
    %51 = tpu.matmul %1, %50, %cst_36 {dimension_numbers = #tpu.dot_dimension_numbers<[1], [0], [0], [1], [0, 0, 1, 1], [], []>} : vector<32x32xf32>, vector<32x8xf32>, vector<32x8xf32> -> vector<32x8xf32>
    %c1_37 = arith.constant 1 : index
    %c0_38 = arith.constant 0 : index
    %c0_39 = arith.constant 0 : index
    %52 = vector.load %arg6[%c1_37, %c0_38, %c0_39] : memref<4x1x8xf32, #tpu.memory_space<vmem>>, vector<1x1x8xf32>
    %53 = vector.shape_cast %52 : vector<1x1x8xf32> to vector<1x8xf32>
    %54 = vector.broadcast %53 : vector<1x8xf32> to vector<32x8xf32>
    %55 = arith.addf %51, %54 : vector<32x8xf32>
    %c1_40 = arith.constant 1 : index
    %c0_41 = arith.constant 0 : index
    %c0_42 = arith.constant 0 : index
    %56 = vector.load %arg3[%c1_40, %c0_41, %c0_42] : memref<4x32x8xf32, #tpu.memory_space<vmem>>, vector<1x32x8xf32>
    %57 = vector.shape_cast %56 : vector<1x32x8xf32> to vector<32x8xf32>
    %cst_43 = arith.constant dense<0.000000e+00> : vector<32x8xf32>
    %58 = tpu.matmul %1, %57, %cst_43 {dimension_numbers = #tpu.dot_dimension_numbers<[1], [0], [0], [1], [0, 0, 1, 1], [], []>} : vector<32x32xf32>, vector<32x8xf32>, vector<32x8xf32> -> vector<32x8xf32>
    %c1_44 = arith.constant 1 : index
    %c0_45 = arith.constant 0 : index
    %c0_46 = arith.constant 0 : index
    %59 = vector.load %arg7[%c1_44, %c0_45, %c0_46] : memref<4x1x8xf32, #tpu.memory_space<vmem>>, vector<1x1x8xf32>
    %60 = vector.shape_cast %59 : vector<1x1x8xf32> to vector<1x8xf32>
    %61 = vector.broadcast %60 : vector<1x8xf32> to vector<32x8xf32>
    %62 = arith.addf %58, %61 : vector<32x8xf32>
    %c1_47 = arith.constant 1 : index
    %c0_48 = arith.constant 0 : index
    %c0_49 = arith.constant 0 : index
    %63 = vector.load %arg4[%c1_47, %c0_48, %c0_49] : memref<4x32x8xf32, #tpu.memory_space<vmem>>, vector<1x32x8xf32>
    %64 = vector.shape_cast %63 : vector<1x32x8xf32> to vector<32x8xf32>
    %cst_50 = arith.constant dense<0.000000e+00> : vector<32x8xf32>
    %65 = tpu.matmul %1, %64, %cst_50 {dimension_numbers = #tpu.dot_dimension_numbers<[1], [0], [0], [1], [0, 0, 1, 1], [], []>} : vector<32x32xf32>, vector<32x8xf32>, vector<32x8xf32> -> vector<32x8xf32>
    %c1_51 = arith.constant 1 : index
    %c0_52 = arith.constant 0 : index
    %c0_53 = arith.constant 0 : index
    %66 = vector.load %arg8[%c1_51, %c0_52, %c0_53] : memref<4x1x8xf32, #tpu.memory_space<vmem>>, vector<1x1x8xf32>
    %67 = vector.shape_cast %66 : vector<1x1x8xf32> to vector<1x8xf32>
    %68 = vector.broadcast %67 : vector<1x8xf32> to vector<32x8xf32>
    %69 = arith.addf %65, %68 : vector<32x8xf32>
    %70 = vector.shape_cast %55 : vector<32x8xf32> to vector<2x16x8xf32>
    %71 = vector.shape_cast %62 : vector<32x8xf32> to vector<2x16x8xf32>
    %72 = vector.shape_cast %69 : vector<32x8xf32> to vector<2x16x8xf32>
    "tpu.trace_start"() <{level = 10 : i32, message = "bqd,bkd->bqk"}> : () -> ()
    %cst_54 = arith.constant dense<0.000000e+00> : vector<2x16x16xf32>
    %73 = tpu.matmul %70, %71, %cst_54 {dimension_numbers = #tpu.dot_dimension_numbers<[2], [2], [1], [1], [0, 0, 0, 1, 1, 1], [0], [0]>} : vector<2x16x8xf32>, vector<2x16x8xf32>, vector<2x16x16xf32> -> vector<2x16x16xf32>
    "tpu.trace_stop"() : () -> ()
    %c1_55 = arith.constant 1 : index
    %c0_56 = arith.constant 0 : index
    %c0_57 = arith.constant 0 : index
    %74 = vector.load %arg10[%c1_55, %c0_56, %c0_57] : memref<4x16x16xf32, #tpu.memory_space<vmem>>, vector<1x16x16xf32>
    %75 = vector.shape_cast %74 : vector<1x16x16xf32> to vector<16x16xf32>
    %76 = vector.shape_cast %75 : vector<16x16xf32> to vector<1x16x16xf32>
    %77 = vector.broadcast %76 : vector<1x16x16xf32> to vector<2x16x16xf32>
    %78 = arith.addf %73, %77 : vector<2x16x16xf32>
    %cst_58 = arith.constant dense<0xFF800000> : vector<2x16xf32>
    %79 = vector.multi_reduction <maximumf>, %78, %cst_58 [2] : vector<2x16x16xf32> to vector<2x16xf32>
    %80 = vector.shape_cast %79 : vector<2x16xf32> to vector<2x16x1xf32>
    %81 = vector.broadcast %80 : vector<2x16x1xf32> to vector<2x16x16xf32>
    %82 = arith.subf %78, %81 : vector<2x16x16xf32>
    %83 = math.exp %82 : vector<2x16x16xf32>
    %cst_59 = arith.constant dense<0.000000e+00> : vector<2x16xf32>
    %84 = vector.multi_reduction <add>, %83, %cst_59 [2] : vector<2x16x16xf32> to vector<2x16xf32>
    %85 = vector.shape_cast %84 : vector<2x16xf32> to vector<2x16x1xf32>
    %86 = tpu.reciprocal %85 : vector<2x16x1xf32> -> vector<2x16x1xf32>
    %87 = vector.broadcast %86 : vector<2x16x1xf32> to vector<2x16x16xf32>
    %88 = arith.mulf %83, %87 : vector<2x16x16xf32>
    "tpu.trace_start"() <{level = 10 : i32, message = "bqk,bkd->bqd"}> : () -> ()
    %cst_60 = arith.constant dense<0.000000e+00> : vector<2x16x8xf32>
    %89 = tpu.matmul %88, %72, %cst_60 {dimension_numbers = #tpu.dot_dimension_numbers<[2], [1], [1], [2], [0, 0, 0, 1, 1, 2], [0], [0]>} : vector<2x16x16xf32>, vector<2x16x8xf32>, vector<2x16x8xf32> -> vector<2x16x8xf32>
    "tpu.trace_stop"() : () -> ()
    %90 = vector.shape_cast %89 : vector<2x16x8xf32> to vector<32x8xf32>
    %c1_61 = arith.constant 1 : index
    %c0_62 = arith.constant 0 : index
    %c0_63 = arith.constant 0 : index
    %91 = vector.load %arg5[%c1_61, %c0_62, %c0_63] : memref<4x8x32xf32, #tpu.memory_space<vmem>>, vector<1x8x32xf32>
    %92 = vector.shape_cast %91 : vector<1x8x32xf32> to vector<8x32xf32>
    %cst_64 = arith.constant dense<0.000000e+00> : vector<32x32xf32>
    %93 = tpu.matmul %90, %92, %cst_64 {dimension_numbers = #tpu.dot_dimension_numbers<[1], [0], [0], [1], [0, 0, 1, 1], [], []>} : vector<32x8xf32>, vector<8x32xf32>, vector<32x32xf32> -> vector<32x32xf32>
    %94 = arith.addf %48, %93 : vector<32x32xf32>
    %c2 = arith.constant 2 : index
    %c0_65 = arith.constant 0 : index
    %c0_66 = arith.constant 0 : index
    %95 = vector.load %arg2[%c2, %c0_65, %c0_66] : memref<4x32x8xf32, #tpu.memory_space<vmem>>, vector<1x32x8xf32>
    %96 = vector.shape_cast %95 : vector<1x32x8xf32> to vector<32x8xf32>
    %cst_67 = arith.constant dense<0.000000e+00> : vector<32x8xf32>
    %97 = tpu.matmul %1, %96, %cst_67 {dimension_numbers = #tpu.dot_dimension_numbers<[1], [0], [0], [1], [0, 0, 1, 1], [], []>} : vector<32x32xf32>, vector<32x8xf32>, vector<32x8xf32> -> vector<32x8xf32>
    %c2_68 = arith.constant 2 : index
    %c0_69 = arith.constant 0 : index
    %c0_70 = arith.constant 0 : index
    %98 = vector.load %arg6[%c2_68, %c0_69, %c0_70] : memref<4x1x8xf32, #tpu.memory_space<vmem>>, vector<1x1x8xf32>
    %99 = vector.shape_cast %98 : vector<1x1x8xf32> to vector<1x8xf32>
    %100 = vector.broadcast %99 : vector<1x8xf32> to vector<32x8xf32>
    %101 = arith.addf %97, %100 : vector<32x8xf32>
    %c2_71 = arith.constant 2 : index
    %c0_72 = arith.constant 0 : index
    %c0_73 = arith.constant 0 : index
    %102 = vector.load %arg3[%c2_71, %c0_72, %c0_73] : memref<4x32x8xf32, #tpu.memory_space<vmem>>, vector<1x32x8xf32>
    %103 = vector.shape_cast %102 : vector<1x32x8xf32> to vector<32x8xf32>
    %cst_74 = arith.constant dense<0.000000e+00> : vector<32x8xf32>
    %104 = tpu.matmul %1, %103, %cst_74 {dimension_numbers = #tpu.dot_dimension_numbers<[1], [0], [0], [1], [0, 0, 1, 1], [], []>} : vector<32x32xf32>, vector<32x8xf32>, vector<32x8xf32> -> vector<32x8xf32>
    %c2_75 = arith.constant 2 : index
    %c0_76 = arith.constant 0 : index
    %c0_77 = arith.constant 0 : index
    %105 = vector.load %arg7[%c2_75, %c0_76, %c0_77] : memref<4x1x8xf32, #tpu.memory_space<vmem>>, vector<1x1x8xf32>
    %106 = vector.shape_cast %105 : vector<1x1x8xf32> to vector<1x8xf32>
    %107 = vector.broadcast %106 : vector<1x8xf32> to vector<32x8xf32>
    %108 = arith.addf %104, %107 : vector<32x8xf32>
    %c2_78 = arith.constant 2 : index
    %c0_79 = arith.constant 0 : index
    %c0_80 = arith.constant 0 : index
    %109 = vector.load %arg4[%c2_78, %c0_79, %c0_80] : memref<4x32x8xf32, #tpu.memory_space<vmem>>, vector<1x32x8xf32>
    %110 = vector.shape_cast %109 : vector<1x32x8xf32> to vector<32x8xf32>
    %cst_81 = arith.constant dense<0.000000e+00> : vector<32x8xf32>
    %111 = tpu.matmul %1, %110, %cst_81 {dimension_numbers = #tpu.dot_dimension_numbers<[1], [0], [0], [1], [0, 0, 1, 1], [], []>} : vector<32x32xf32>, vector<32x8xf32>, vector<32x8xf32> -> vector<32x8xf32>
    %c2_82 = arith.constant 2 : index
    %c0_83 = arith.constant 0 : index
    %c0_84 = arith.constant 0 : index
    %112 = vector.load %arg8[%c2_82, %c0_83, %c0_84] : memref<4x1x8xf32, #tpu.memory_space<vmem>>, vector<1x1x8xf32>
    %113 = vector.shape_cast %112 : vector<1x1x8xf32> to vector<1x8xf32>
    %114 = vector.broadcast %113 : vector<1x8xf32> to vector<32x8xf32>
    %115 = arith.addf %111, %114 : vector<32x8xf32>
    %116 = vector.shape_cast %101 : vector<32x8xf32> to vector<2x16x8xf32>
    %117 = vector.shape_cast %108 : vector<32x8xf32> to vector<2x16x8xf32>
    %118 = vector.shape_cast %115 : vector<32x8xf32> to vector<2x16x8xf32>
    "tpu.trace_start"() <{level = 10 : i32, message = "bqd,bkd->bqk"}> : () -> ()
    %cst_85 = arith.constant dense<0.000000e+00> : vector<2x16x16xf32>
    %119 = tpu.matmul %116, %117, %cst_85 {dimension_numbers = #tpu.dot_dimension_numbers<[2], [2], [1], [1], [0, 0, 0, 1, 1, 1], [0], [0]>} : vector<2x16x8xf32>, vector<2x16x8xf32>, vector<2x16x16xf32> -> vector<2x16x16xf32>
    "tpu.trace_stop"() : () -> ()
    %c2_86 = arith.constant 2 : index
    %c0_87 = arith.constant 0 : index
    %c0_88 = arith.constant 0 : index
    %120 = vector.load %arg10[%c2_86, %c0_87, %c0_88] : memref<4x16x16xf32, #tpu.memory_space<vmem>>, vector<1x16x16xf32>
    %121 = vector.shape_cast %120 : vector<1x16x16xf32> to vector<16x16xf32>
    %122 = vector.shape_cast %121 : vector<16x16xf32> to vector<1x16x16xf32>
    %123 = vector.broadcast %122 : vector<1x16x16xf32> to vector<2x16x16xf32>
    %124 = arith.addf %119, %123 : vector<2x16x16xf32>
    %cst_89 = arith.constant dense<0xFF800000> : vector<2x16xf32>
    %125 = vector.multi_reduction <maximumf>, %124, %cst_89 [2] : vector<2x16x16xf32> to vector<2x16xf32>
    %126 = vector.shape_cast %125 : vector<2x16xf32> to vector<2x16x1xf32>
    %127 = vector.broadcast %126 : vector<2x16x1xf32> to vector<2x16x16xf32>
    %128 = arith.subf %124, %127 : vector<2x16x16xf32>
    %129 = math.exp %128 : vector<2x16x16xf32>
    %cst_90 = arith.constant dense<0.000000e+00> : vector<2x16xf32>
    %130 = vector.multi_reduction <add>, %129, %cst_90 [2] : vector<2x16x16xf32> to vector<2x16xf32>
    %131 = vector.shape_cast %130 : vector<2x16xf32> to vector<2x16x1xf32>
    %132 = tpu.reciprocal %131 : vector<2x16x1xf32> -> vector<2x16x1xf32>
    %133 = vector.broadcast %132 : vector<2x16x1xf32> to vector<2x16x16xf32>
    %134 = arith.mulf %129, %133 : vector<2x16x16xf32>
    "tpu.trace_start"() <{level = 10 : i32, message = "bqk,bkd->bqd"}> : () -> ()
    %cst_91 = arith.constant dense<0.000000e+00> : vector<2x16x8xf32>
    %135 = tpu.matmul %134, %118, %cst_91 {dimension_numbers = #tpu.dot_dimension_numbers<[2], [1], [1], [2], [0, 0, 0, 1, 1, 2], [0], [0]>} : vector<2x16x16xf32>, vector<2x16x8xf32>, vector<2x16x8xf32> -> vector<2x16x8xf32>
    "tpu.trace_stop"() : () -> ()
    %136 = vector.shape_cast %135 : vector<2x16x8xf32> to vector<32x8xf32>
    %c2_92 = arith.constant 2 : index
    %c0_93 = arith.constant 0 : index
    %c0_94 = arith.constant 0 : index
    %137 = vector.load %arg5[%c2_92, %c0_93, %c0_94] : memref<4x8x32xf32, #tpu.memory_space<vmem>>, vector<1x8x32xf32>
    %138 = vector.shape_cast %137 : vector<1x8x32xf32> to vector<8x32xf32>
    %cst_95 = arith.constant dense<0.000000e+00> : vector<32x32xf32>
    %139 = tpu.matmul %136, %138, %cst_95 {dimension_numbers = #tpu.dot_dimension_numbers<[1], [0], [0], [1], [0, 0, 1, 1], [], []>} : vector<32x8xf32>, vector<8x32xf32>, vector<32x32xf32> -> vector<32x32xf32>
    %140 = arith.addf %94, %139 : vector<32x32xf32>
    %c3 = arith.constant 3 : index
    %c0_96 = arith.constant 0 : index
    %c0_97 = arith.constant 0 : index
    %141 = vector.load %arg2[%c3, %c0_96, %c0_97] : memref<4x32x8xf32, #tpu.memory_space<vmem>>, vector<1x32x8xf32>
    %142 = vector.shape_cast %141 : vector<1x32x8xf32> to vector<32x8xf32>
    %cst_98 = arith.constant dense<0.000000e+00> : vector<32x8xf32>
    %143 = tpu.matmul %1, %142, %cst_98 {dimension_numbers = #tpu.dot_dimension_numbers<[1], [0], [0], [1], [0, 0, 1, 1], [], []>} : vector<32x32xf32>, vector<32x8xf32>, vector<32x8xf32> -> vector<32x8xf32>
    %c3_99 = arith.constant 3 : index
    %c0_100 = arith.constant 0 : index
    %c0_101 = arith.constant 0 : index
    %144 = vector.load %arg6[%c3_99, %c0_100, %c0_101] : memref<4x1x8xf32, #tpu.memory_space<vmem>>, vector<1x1x8xf32>
    %145 = vector.shape_cast %144 : vector<1x1x8xf32> to vector<1x8xf32>
    %146 = vector.broadcast %145 : vector<1x8xf32> to vector<32x8xf32>
    %147 = arith.addf %143, %146 : vector<32x8xf32>
    %c3_102 = arith.constant 3 : index
    %c0_103 = arith.constant 0 : index
    %c0_104 = arith.constant 0 : index
    %148 = vector.load %arg3[%c3_102, %c0_103, %c0_104] : memref<4x32x8xf32, #tpu.memory_space<vmem>>, vector<1x32x8xf32>
    %149 = vector.shape_cast %148 : vector<1x32x8xf32> to vector<32x8xf32>
    %cst_105 = arith.constant dense<0.000000e+00> : vector<32x8xf32>
    %150 = tpu.matmul %1, %149, %cst_105 {dimension_numbers = #tpu.dot_dimension_numbers<[1], [0], [0], [1], [0, 0, 1, 1], [], []>} : vector<32x32xf32>, vector<32x8xf32>, vector<32x8xf32> -> vector<32x8xf32>
    %c3_106 = arith.constant 3 : index
    %c0_107 = arith.constant 0 : index
    %c0_108 = arith.constant 0 : index
    %151 = vector.load %arg7[%c3_106, %c0_107, %c0_108] : memref<4x1x8xf32, #tpu.memory_space<vmem>>, vector<1x1x8xf32>
    %152 = vector.shape_cast %151 : vector<1x1x8xf32> to vector<1x8xf32>
    %153 = vector.broadcast %152 : vector<1x8xf32> to vector<32x8xf32>
    %154 = arith.addf %150, %153 : vector<32x8xf32>
    %c3_109 = arith.constant 3 : index
    %c0_110 = arith.constant 0 : index
    %c0_111 = arith.constant 0 : index
    %155 = vector.load %arg4[%c3_109, %c0_110, %c0_111] : memref<4x32x8xf32, #tpu.memory_space<vmem>>, vector<1x32x8xf32>
    %156 = vector.shape_cast %155 : vector<1x32x8xf32> to vector<32x8xf32>
    %cst_112 = arith.constant dense<0.000000e+00> : vector<32x8xf32>
    %157 = tpu.matmul %1, %156, %cst_112 {dimension_numbers = #tpu.dot_dimension_numbers<[1], [0], [0], [1], [0, 0, 1, 1], [], []>} : vector<32x32xf32>, vector<32x8xf32>, vector<32x8xf32> -> vector<32x8xf32>
    %c3_113 = arith.constant 3 : index
    %c0_114 = arith.constant 0 : index
    %c0_115 = arith.constant 0 : index
    %158 = vector.load %arg8[%c3_113, %c0_114, %c0_115] : memref<4x1x8xf32, #tpu.memory_space<vmem>>, vector<1x1x8xf32>
    %159 = vector.shape_cast %158 : vector<1x1x8xf32> to vector<1x8xf32>
    %160 = vector.broadcast %159 : vector<1x8xf32> to vector<32x8xf32>
    %161 = arith.addf %157, %160 : vector<32x8xf32>
    %162 = vector.shape_cast %147 : vector<32x8xf32> to vector<2x16x8xf32>
    %163 = vector.shape_cast %154 : vector<32x8xf32> to vector<2x16x8xf32>
    %164 = vector.shape_cast %161 : vector<32x8xf32> to vector<2x16x8xf32>
    "tpu.trace_start"() <{level = 10 : i32, message = "bqd,bkd->bqk"}> : () -> ()
    %cst_116 = arith.constant dense<0.000000e+00> : vector<2x16x16xf32>
    %165 = tpu.matmul %162, %163, %cst_116 {dimension_numbers = #tpu.dot_dimension_numbers<[2], [2], [1], [1], [0, 0, 0, 1, 1, 1], [0], [0]>} : vector<2x16x8xf32>, vector<2x16x8xf32>, vector<2x16x16xf32> -> vector<2x16x16xf32>
    "tpu.trace_stop"() : () -> ()
    %c3_117 = arith.constant 3 : index
    %c0_118 = arith.constant 0 : index
    %c0_119 = arith.constant 0 : index
    %166 = vector.load %arg10[%c3_117, %c0_118, %c0_119] : memref<4x16x16xf32, #tpu.memory_space<vmem>>, vector<1x16x16xf32>
    %167 = vector.shape_cast %166 : vector<1x16x16xf32> to vector<16x16xf32>
    %168 = vector.shape_cast %167 : vector<16x16xf32> to vector<1x16x16xf32>
    %169 = vector.broadcast %168 : vector<1x16x16xf32> to vector<2x16x16xf32>
    %170 = arith.addf %165, %169 : vector<2x16x16xf32>
    %cst_120 = arith.constant dense<0xFF800000> : vector<2x16xf32>
    %171 = vector.multi_reduction <maximumf>, %170, %cst_120 [2] : vector<2x16x16xf32> to vector<2x16xf32>
    %172 = vector.shape_cast %171 : vector<2x16xf32> to vector<2x16x1xf32>
    %173 = vector.broadcast %172 : vector<2x16x1xf32> to vector<2x16x16xf32>
    %174 = arith.subf %170, %173 : vector<2x16x16xf32>
    %175 = math.exp %174 : vector<2x16x16xf32>
    %cst_121 = arith.constant dense<0.000000e+00> : vector<2x16xf32>
    %176 = vector.multi_reduction <add>, %175, %cst_121 [2] : vector<2x16x16xf32> to vector<2x16xf32>
    %177 = vector.shape_cast %176 : vector<2x16xf32> to vector<2x16x1xf32>
    %178 = tpu.reciprocal %177 : vector<2x16x1xf32> -> vector<2x16x1xf32>
    %179 = vector.broadcast %178 : vector<2x16x1xf32> to vector<2x16x16xf32>
    %180 = arith.mulf %175, %179 : vector<2x16x16xf32>
    "tpu.trace_start"() <{level = 10 : i32, message = "bqk,bkd->bqd"}> : () -> ()
    %cst_122 = arith.constant dense<0.000000e+00> : vector<2x16x8xf32>
    %181 = tpu.matmul %180, %164, %cst_122 {dimension_numbers = #tpu.dot_dimension_numbers<[2], [1], [1], [2], [0, 0, 0, 1, 1, 2], [0], [0]>} : vector<2x16x16xf32>, vector<2x16x8xf32>, vector<2x16x8xf32> -> vector<2x16x8xf32>
    "tpu.trace_stop"() : () -> ()
    %182 = vector.shape_cast %181 : vector<2x16x8xf32> to vector<32x8xf32>
    %c3_123 = arith.constant 3 : index
    %c0_124 = arith.constant 0 : index
    %c0_125 = arith.constant 0 : index
    %183 = vector.load %arg5[%c3_123, %c0_124, %c0_125] : memref<4x8x32xf32, #tpu.memory_space<vmem>>, vector<1x8x32xf32>
    %184 = vector.shape_cast %183 : vector<1x8x32xf32> to vector<8x32xf32>
    %cst_126 = arith.constant dense<0.000000e+00> : vector<32x32xf32>
    %185 = tpu.matmul %182, %184, %cst_126 {dimension_numbers = #tpu.dot_dimension_numbers<[1], [0], [0], [1], [0, 0, 1, 1], [], []>} : vector<32x8xf32>, vector<8x32xf32>, vector<32x32xf32> -> vector<32x32xf32>
    %186 = arith.addf %140, %185 : vector<32x32xf32>
    %c0_127 = arith.constant 0 : index
    %c0_128 = arith.constant 0 : index
    %187 = vector.load %arg9[%c0_127, %c0_128] : memref<1x32xf32, #tpu.memory_space<vmem>>, vector<1x32xf32>
    %188 = vector.broadcast %187 : vector<1x32xf32> to vector<32x32xf32>
    %189 = arith.addf %186, %188 : vector<32x32xf32>
    %190 = vector.shape_cast %189 : vector<32x32xf32> to vector<2x16x32xf32>
    %c0_129 = arith.constant 0 : index
    %c0_130 = arith.constant 0 : index
    %c0_131 = arith.constant 0 : index
    %191 = vector.load %arg11[%c0_129, %c0_130, %c0_131] : memref<2x16x32xf32, #tpu.memory_space<vmem>>, vector<2x16x32xf32>
    tpu.vector_store %arg11[%c0_129, %c0_130, %c0_131], %190 {strides = array<i32>} : memref<2x16x32xf32, #tpu.memory_space<vmem>>, vector<2x16x32xf32>,
    return
  }
  func.func @transform_0(%arg0: i32) -> (i32, i32, i32) {
    %c0_i32 = arith.constant 0 : i32
    %c0_i32_0 = arith.constant 0 : i32
    %c0_i32_1 = arith.constant 0 : i32
    return %arg0, %c0_i32, %c0_i32_0 : i32, i32, i32
  }
  func.func @transform_1(%arg0: i32) -> (i32, i32, i32) {
    %c0_i32 = arith.constant 0 : i32
    %c0_i32_0 = arith.constant 0 : i32
    %c0_i32_1 = arith.constant 0 : i32
    %c0_i32_2 = arith.constant 0 : i32
    return %c0_i32, %c0_i32_0, %c0_i32_1 : i32, i32, i32
  }
  func.func @transform_2(%arg0: i32) -> (i32, i32, i32) {
    %c0_i32 = arith.constant 0 : i32
    %c0_i32_0 = arith.constant 0 : i32
    %c0_i32_1 = arith.constant 0 : i32
    %c0_i32_2 = arith.constant 0 : i32
    return %c0_i32, %c0_i32_0, %c0_i32_1 : i32, i32, i32
  }
  func.func @transform_3(%arg0: i32) -> (i32, i32, i32) {
    %c0_i32 = arith.constant 0 : i32
    %c0_i32_0 = arith.constant 0 : i32
    %c0_i32_1 = arith.constant 0 : i32
    %c0_i32_2 = arith.constant 0 : i32
    return %c0_i32, %c0_i32_0, %c0_i32_1 : i32, i32, i32
  }
  func.func @transform_4(%arg0: i32) -> (i32, i32, i32) {
    %c0_i32 = arith.constant 0 : i32
    %c0_i32_0 = arith.constant 0 : i32
    %c0_i32_1 = arith.constant 0 : i32
    %c0_i32_2 = arith.constant 0 : i32
    return %c0_i32, %c0_i32_0, %c0_i32_1 : i32, i32, i32
  }
  func.func @transform_5(%arg0: i32) -> (i32, i32, i32) {
    %c0_i32 = arith.constant 0 : i32
    %c0_i32_0 = arith.constant 0 : i32
    %c0_i32_1 = arith.constant 0 : i32
    %c0_i32_2 = arith.constant 0 : i32
    return %c0_i32, %c0_i32_0, %c0_i32_1 : i32, i32, i32
  }
  func.func @transform_6(%arg0: i32) -> (i32, i32, i32) {
    %c0_i32 = arith.constant 0 : i32
    %c0_i32_0 = arith.constant 0 : i32
    %c0_i32_1 = arith.constant 0 : i32
    %c0_i32_2 = arith.constant 0 : i32
    return %c0_i32, %c0_i32_0, %c0_i32_1 : i32, i32, i32
  }
  func.func @transform_7(%arg0: i32) -> (i32, i32, i32) {
    %c0_i32 = arith.constant 0 : i32
    %c0_i32_0 = arith.constant 0 : i32
    %c0_i32_1 = arith.constant 0 : i32
    %c0_i32_2 = arith.constant 0 : i32
    return %c0_i32, %c0_i32_0, %c0_i32_1 : i32, i32, i32
  }
  func.func @transform_8(%arg0: i32) -> (i32, i32) {
    %c0_i32 = arith.constant 0 : i32
    %c0_i32_0 = arith.constant 0 : i32
    %c0_i32_1 = arith.constant 0 : i32
    return %c0_i32, %c0_i32_0 : i32, i32
  }
  func.func @transform_9(%arg0: i32) -> (i32, i32, i32) {
    %c0_i32 = arith.constant 0 : i32
    %c0_i32_0 = arith.constant 0 : i32
    %c0_i32_1 = arith.constant 0 : i32
    %c0_i32_2 = arith.constant 0 : i32
    return %c0_i32, %c0_i32_0, %c0_i32_1 : i32, i32, i32
  }
  func.func @transform_10(%arg0: i32) -> (i32, i32, i32) {
    %c0_i32 = arith.constant 0 : i32
    %c0_i32_0 = arith.constant 0 : i32
    %c0_i32_1 = arith.constant 0 : i32
    return %arg0, %c0_i32, %c0_i32_0 : i32, i32, i32
  }
}

</mosaic_0001>

<llo_original>
// kernel: tpu_custom_call.1
$region0: #{tpu_custom_call.1}
  #allocation0 [shape = 'u32[]', space=smem, size = 0x4, offset = 0x4, fixed_abs, tag = 'smem constant byte address 0x4 - core index']
  #allocation1 [shape = 'u32[144,128]{1,0:T(1,128)}', space=vmem, size = 0x12000, scoped, tag = 'internal scratch']
  %s0 = inlined_call_operand.vmem [shape: f32[8,16,32], index: 0, kind: input, shape index: {}]
  %s1 = inlined_call_operand.vmem [shape: f32[4,32,8], index: 1, kind: input, shape index: {}]
  %s2 = inlined_call_operand.vmem [shape: f32[4,32,8], index: 2, kind: input, shape index: {}]
  %s3 = inlined_call_operand.vmem [shape: f32[4,32,8], index: 3, kind: input, shape index: {}]
  %s4 = inlined_call_operand.vmem [shape: f32[4,8,32], index: 4, kind: input, shape index: {}]
  %s5 = inlined_call_operand.vmem [shape: f32[4,1,8], index: 5, kind: input, shape index: {}]
  %s6 = inlined_call_operand.vmem [shape: f32[4,1,8], index: 6, kind: input, shape index: {}]
  %s7 = inlined_call_operand.vmem [shape: f32[4,1,8], index: 7, kind: input, shape index: {}]
  %s8 = inlined_call_operand.vmem [shape: f32[1,32], index: 8, kind: input, shape index: {}]
  %s9 = inlined_call_operand.vmem [shape: f32[4,16,16], index: 9, kind: input, shape index: {}]
  %s10 = inlined_call_operand.hbm [shape: f32[8,16,32], index: 10, kind: output, shape index: {}]
  %s11 = sld [smem:[#allocation0]]
  $region73: #{tpu_custom_call.1} parent=0
    _
  %s13 = ssub.s32 1, %s11
  %s14 = scalar_select 0, %s13, %s11
  $region1: #{tpu_custom_call.1} parent=0
    #allocation2 [shape = 'u8[32768]{0}', space=vmem, size = 0x8000, scoped, tag = 'output window, operand 0']
    #allocation3 [shape = 's32[2]{0}', space=sflag, size = 0x8, scoped, tag = 'scoped memory for tpu_custom_call.1']
    %15 = vsyncpa [#allocation3], 0
    %s16 = scalar_lea.sflag [#allocation3], 1
    %17 = vsyncpa %s16, 0
    loop: start=0, step=1, limit=6
    $region2: #{tpu_custom_call.1} parent=1 // loop_pre_header
      _
    $region3: #{tpu_custom_call.1} parent=1 // loop_header
      %s19 = sphi 0, %s23
      %p20 = scmp.ge.s32.totalorder %s19, 6
      %s29 = sphi 0, %s31
      %s32 = sphi 0, %s29
      %s33 = sphi 0, %s32
      %s49 = sphi 0, %s33
      %s53 = sphi 0, %s53
      %s55 = sphi 0, %s53
      %s56 = sphi 0, %s55
      %s70 = sphi 0, %s56
      %s74 = sphi 0, %s74
      %s76 = sphi 0, %s74
      %s77 = sphi 0, %s76
      %s91 = sphi 0, %s77
      %s95 = sphi 0, %s95
      %s97 = sphi 0, %s95
      %s98 = sphi 0, %s97
      %s112 = sphi 0, %s98
      %s116 = sphi 0, %s116
      %s118 = sphi 0, %s116
      %s119 = sphi 0, %s118
      %s133 = sphi 0, %s119
      %s137 = sphi 0, %s137
      %s139 = sphi 0, %s137
      %s140 = sphi 0, %s139
      %s154 = sphi 0, %s140
      %s158 = sphi 0, %s158
      %s160 = sphi 0, %s158
      %s161 = sphi 0, %s160
      %s175 = sphi 0, %s161
      %s179 = sphi 0, %s179
      %s181 = sphi 0, %s179
      %s182 = sphi 0, %s181
      %s196 = sphi 0, %s182
      %s200 = sphi 0, %s200
      %s202 = sphi 0, %s200
      %s203 = sphi 0, %s202
      %s217 = sphi 0, %s203
      %s221 = sphi 0, %s221
      %s223 = sphi 0, %s221
      %s224 = sphi 0, %s223
      %s238 = sphi 0, %s224
      %s244 = sphi 0, %s246
      %s247 = sphi 0, %s244
      %s248 = sphi 0, %s247
      %s264 = sphi 0, %s248
    $region4: #{tpu_custom_call.1} parent=1 // loop_header_branch
      %22 = sbr.rel (%p20) target = $region8
    $region5: #{tpu_custom_call.1} parent=1 // loop_body
      %s24 = ssub.s32 %s19, 1
      %s25 = ssub.s32 %s19, 2
      %s26 = sadd.s32 %s19, 1
      %s27 = ssub.s32 %s19, %s26
      %p28 = scmp.eq.s32.totalorder %s27, 0
      %s30 = sadd.s32 %s29, 1
      %s31 = scalar_select %p28, %s29, %s30
      %p34 = pneg %p28
      %p35 = scmp.eq.s32.totalorder %s19, 3
      %p36 = por %p34, %p35
      %p37 = scmp.ne.s32.totalorder %s29, %s32
      %p38 = scmp.eq.s32.totalorder %s19, 0
      %p39 = por %p37, %p38
      %p40 = scmp.ne.s32.totalorder %s29, %s32
      %p41 = scmp.eq.s32.totalorder %s24, 3
      %p42 = por %p40, %p41
      %p43 = scmp.ne.s32.totalorder %s32, %s33
      %p44 = scmp.eq.s32.totalorder %s24, 0
      %p45 = por %p43, %p44
      %p46 = scmp.ne.s32.totalorder %s32, %s33
      %p47 = scmp.eq.s32.totalorder %s25, 3
      %p48 = por %p46, %p47
      %p50 = scmp.ne.s32.totalorder %s33, %s49
      %p51 = scmp.eq.s32.totalorder %s25, 0
      %p52 = por %p50, %p51
      %s54 = sadd.s32 %s53, 1
      %p57 = scmp.eq.s32.totalorder %s19, 3
      %p58 = scmp.ne.s32.totalorder %s53, %s55
      %p59 = scmp.eq.s32.totalorder %s19, 0
      %p60 = por %p58, %p59
      %p61 = scmp.ne.s32.totalorder %s53, %s55
      %p62 = scmp.eq.s32.totalorder %s24, 3
      %p63 = por %p61, %p62
      %p64 = scmp.ne.s32.totalorder %s55, %s56
      %p65 = scmp.eq.s32.totalorder %s24, 0
      %p66 = por %p64, %p65
      %p67 = scmp.ne.s32.totalorder %s55, %s56
      %p68 = scmp.eq.s32.totalorder %s25, 3
      %p69 = por %p67, %p68
      %p71 = scmp.ne.s32.totalorder %s56, %s70
      %p72 = scmp.eq.s32.totalorder %s25, 0
      %p73 = por %p71, %p72
      %s75 = sadd.s32 %s74, 1
      %p78 = scmp.eq.s32.totalorder %s19, 3
      %p79 = scmp.ne.s32.totalorder %s74, %s76
      %p80 = scmp.eq.s32.totalorder %s19, 0
      %p81 = por %p79, %p80
      %p82 = scmp.ne.s32.totalorder %s74, %s76
      %p83 = scmp.eq.s32.totalorder %s24, 3
      %p84 = por %p82, %p83
      %p85 = scmp.ne.s32.totalorder %s76, %s77
      %p86 = scmp.eq.s32.totalorder %s24, 0
      %p87 = por %p85, %p86
      %p88 = scmp.ne.s32.totalorder %s76, %s77
      %p89 = scmp.eq.s32.totalorder %s25, 3
      %p90 = por %p88, %p89
      %p92 = scmp.ne.s32.totalorder %s77, %s91
      %p93 = scmp.eq.s32.totalorder %s25, 0
      %p94 = por %p92, %p93
      %s96 = sadd.s32 %s95, 1
      %p99 = scmp.eq.s32.totalorder %s19, 3
      %p100 = scmp.ne.s32.totalorder %s95, %s97
      %p101 = scmp.eq.s32.totalorder %s19, 0
      %p102 = por %p100, %p101
      %p103 = scmp.ne.s32.totalorder %s95, %s97
      %p104 = scmp.eq.s32.totalorder %s24, 3
      %p105 = por %p103, %p104
      %p106 = scmp.ne.s32.totalorder %s97, %s98
      %p107 = scmp.eq.s32.totalorder %s24, 0
      %p108 = por %p106, %p107
      %p109 = scmp.ne.s32.totalorder %s97, %s98
      %p110 = scmp.eq.s32.totalorder %s25, 3
      %p111 = por %p109, %p110
      %p113 = scmp.ne.s32.totalorder %s98, %s112
      %p114 = scmp.eq.s32.totalorder %s25, 0
      %p115 = por %p113, %p114
      %s117 = sadd.s32 %s116, 1
      %p120 = scmp.eq.s32.totalorder %s19, 3
      %p121 = scmp.ne.s32.totalorder %s116, %s118
      %p122 = scmp.eq.s32.totalorder %s19, 0
      %p123 = por %p121, %p122
      %p124 = scmp.ne.s32.totalorder %s116, %s118
      %p125 = scmp.eq.s32.totalorder %s24, 3
      %p126 = por %p124, %p125
      %p127 = scmp.ne.s32.totalorder %s118, %s119
      %p128 = scmp.eq.s32.totalorder %s24, 0
      %p129 = por %p127, %p128
      %p130 = scmp.ne.s32.totalorder %s118, %s119
      %p131 = scmp.eq.s32.totalorder %s25, 3
      %p132 = por %p130, %p131
      %p134 = scmp.ne.s32.totalorder %s119, %s133
      %p135 = scmp.eq.s32.totalorder %s25, 0
      %p136 = por %p134, %p135
      %s138 = sadd.s32 %s137, 1
      %p141 = scmp.eq.s32.totalorder %s19, 3
      %p142 = scmp.ne.s32.totalorder %s137, %s139
      %p143 = scmp.eq.s32.totalorder %s19, 0
      %p144 = por %p142, %p143
      %p145 = scmp.ne.s32.totalorder %s137, %s139
      %p146 = scmp.eq.s32.totalorder %s24, 3
      %p147 = por %p145, %p146
      %p148 = scmp.ne.s32.totalorder %s139, %s140
      %p149 = scmp.eq.s32.totalorder %s24, 0
      %p150 = por %p148, %p149
      %p151 = scmp.ne.s32.totalorder %s139, %s140
      %p152 = scmp.eq.s32.totalorder %s25, 3
      %p153 = por %p151, %p152
      %p155 = scmp.ne.s32.totalorder %s140, %s154
      %p156 = scmp.eq.s32.totalorder %s25, 0
      %p157 = por %p155, %p156
      %s159 = sadd.s32 %s158, 1
      %p162 = scmp.eq.s32.totalorder %s19, 3
      %p163 = scmp.ne.s32.totalorder %s158, %s160
      %p164 = scmp.eq.s32.totalorder %s19, 0
      %p165 = por %p163, %p164
      %p166 = scmp.ne.s32.totalorder %s158, %s160
      %p167 = scmp.eq.s32.totalorder %s24, 3
      %p168 = por %p166, %p167
      %p169 = scmp.ne.s32.totalorder %s160, %s161
      %p170 = scmp.eq.s32.totalorder %s24, 0
      %p171 = por %p169, %p170
      %p172 = scmp.ne.s32.totalorder %s160, %s161
      %p173 = scmp.eq.s32.totalorder %s25, 3
      %p174 = por %p172, %p173
      %p176 = scmp.ne.s32.totalorder %s161, %s175
      %p177 = scmp.eq.s32.totalorder %s25, 0
      %p178 = por %p176, %p177
      %s180 = sadd.s32 %s179, 1
      %p183 = scmp.eq.s32.totalorder %s19, 3
      %p184 = scmp.ne.s32.totalorder %s179, %s181
      %p185 = scmp.eq.s32.totalorder %s19, 0
      %p186 = por %p184, %p185
      %p187 = scmp.ne.s32.totalorder %s179, %s181
      %p188 = scmp.eq.s32.totalorder %s24, 3
      %p189 = por %p187, %p188
      %p190 = scmp.ne.s32.totalorder %s181, %s182
      %p191 = scmp.eq.s32.totalorder %s24, 0
      %p192 = por %p190, %p191
      %p193 = scmp.ne.s32.totalorder %s181, %s182
      %p194 = scmp.eq.s32.totalorder %s25, 3
      %p195 = por %p193, %p194
      %p197 = scmp.ne.s32.totalorder %s182, %s196
      %p198 = scmp.eq.s32.totalorder %s25, 0
      %p199 = por %p197, %p198
      %s201 = sadd.s32 %s200, 1
      %p204 = scmp.eq.s32.totalorder %s19, 3
      %p205 = scmp.ne.s32.totalorder %s200, %s202
      %p206 = scmp.eq.s32.totalorder %s19, 0
      %p207 = por %p205, %p206
      %p208 = scmp.ne.s32.totalorder %s200, %s202
      %p209 = scmp.eq.s32.totalorder %s24, 3
      %p210 = por %p208, %p209
      %p211 = scmp.ne.s32.totalorder %s202, %s203
      %p212 = scmp.eq.s32.totalorder %s24, 0
      %p213 = por %p211, %p212
      %p214 = scmp.ne.s32.totalorder %s202, %s203
      %p215 = scmp.eq.s32.totalorder %s25, 3
      %p216 = por %p214, %p215
      %p218 = scmp.ne.s32.totalorder %s203, %s217
      %p219 = scmp.eq.s32.totalorder %s25, 0
      %p220 = por %p218, %p219
      %s222 = sadd.s32 %s221, 1
      %p225 = scmp.eq.s32.totalorder %s19, 3
      %p226 = scmp.ne.s32.totalorder %s221, %s223
      %p227 = scmp.eq.s32.totalorder %s19, 0
      %p228 = por %p226, %p227
      %p229 = scmp.ne.s32.totalorder %s221, %s223
      %p230 = scmp.eq.s32.totalorder %s24, 3
      %p231 = por %p229, %p230
      %p232 = scmp.ne.s32.totalorder %s223, %s224
      %p233 = scmp.eq.s32.totalorder %s24, 0
      %p234 = por %p232, %p233
      %p235 = scmp.ne.s32.totalorder %s223, %s224
      %p236 = scmp.eq.s32.totalorder %s25, 3
      %p237 = por %p235, %p236
      %p239 = scmp.ne.s32.totalorder %s224, %s238
      %p240 = scmp.eq.s32.totalorder %s25, 0
      %p241 = por %p239, %p240
      %s242 = ssub.s32 %s19, %s26
      %p243 = scmp.eq.s32.totalorder %s242, 0
      %s245 = sadd.s32 %s244, 1
      %s246 = scalar_select %p243, %s244, %s245
      %p249 = pneg %p243
      %p250 = scmp.eq.s32.totalorder %s19, 3
      %p251 = por %p249, %p250
      %p252 = scmp.ne.s32.totalorder %s244, %s247
      %p253 = scmp.eq.s32.totalorder %s19, 0
      %p254 = por %p252, %p253
      %p255 = scmp.ne.s32.totalorder %s244, %s247
      %p256 = scmp.eq.s32.totalorder %s24, 3
      %p257 = por %p255, %p256
      %p258 = scmp.ne.s32.totalorder %s247, %s248
      %p259 = scmp.eq.s32.totalorder %s24, 0
      %p260 = por %p258, %p259
      %p261 = scmp.ne.s32.totalorder %s247, %s248
      %p262 = scmp.eq.s32.totalorder %s25, 3
      %p263 = por %p261, %p262
      %p265 = scmp.ne.s32.totalorder %s248, %s264
      %p266 = scmp.eq.s32.totalorder %s25, 0
      %p267 = por %p265, %p266
      %p268 = scmp.le.s32.totalorder 1, %s19
      %p269 = scmp.lt.s32.totalorder %s19, 5
      %p270 = pnand %p268, %p269
      %p271 = pneg %p270
      // Predicated region
      $region9: #{tpu_custom_call.1} parent=5 // pred_check
        _
      $region10: #{tpu_custom_call.1} parent=5 // pred_check_branch
        %273 = sbr.rel (%p270) target = $region12
      $region11: #{tpu_custom_call.1} parent=5 // pred_region
        %s274 = ssub.s32 %s19, 1
        // Predicated region
        $region13: #{tpu_custom_call.1} parent=11 // pred_check
          %p275 = pneg %p66
        $region14: #{tpu_custom_call.1} parent=11 // pred_check_branch
          %277 = sbr.rel (%p275) target = $region16
        $region15: #{tpu_custom_call.1} parent=11 // pred_region
          _
        $region16: #{tpu_custom_call.1} parent=11 // pred_fallthru
          _
        // Predicated region
        $region17: #{tpu_custom_call.1} parent=11 // pred_check
          %p278 = pneg %p87
        $region18: #{tpu_custom_call.1} parent=11 // pred_check_branch
          %280 = sbr.rel (%p278) target = $region20
        $region19: #{tpu_custom_call.1} parent=11 // pred_region
          _
        $region20: #{tpu_custom_call.1} parent=11 // pred_fallthru
          _
        // Predicated region
        $region21: #{tpu_custom_call.1} parent=11 // pred_check
          %p281 = pneg %p108
        $region22: #{tpu_custom_call.1} parent=11 // pred_check_branch
          %283 = sbr.rel (%p281) target = $region24
        $region23: #{tpu_custom_call.1} parent=11 // pred_region
          _
        $region24: #{tpu_custom_call.1} parent=11 // pred_fallthru
          _
        // Predicated region
        $region25: #{tpu_custom_call.1} parent=11 // pred_check
          %p284 = pneg %p129
        $region26: #{tpu_custom_call.1} parent=11 // pred_check_branch
          %286 = sbr.rel (%p284) target = $region28
        $region27: #{tpu_custom_call.1} parent=11 // pred_region
          _
        $region28: #{tpu_custom_call.1} parent=11 // pred_fallthru
          _
        // Predicated region
        $region29: #{tpu_custom_call.1} parent=11 // pred_check
          %p287 = pneg %p150
        $region30: #{tpu_custom_call.1} parent=11 // pred_check_branch
          %289 = sbr.rel (%p287) target = $region32
        $region31: #{tpu_custom_call.1} parent=11 // pred_region
          _
        $region32: #{tpu_custom_call.1} parent=11 // pred_fallthru
          _
        // Predicated region
        $region33: #{tpu_custom_call.1} parent=11 // pred_check
          %p290 = pneg %p171
        $region34: #{tpu_custom_call.1} parent=11 // pred_check_branch
          %292 = sbr.rel (%p290) target = $region36
        $region35: #{tpu_custom_call.1} parent=11 // pred_region
          _
        $region36: #{tpu_custom_call.1} parent=11 // pred_fallthru
          _
        // Predicated region
        $region37: #{tpu_custom_call.1} parent=11 // pred_check
          %p293 = pneg %p192
        $region38: #{tpu_custom_call.1} parent=11 // pred_check_branch
          %295 = sbr.rel (%p293) target = $region40
        $region39: #{tpu_custom_call.1} parent=11 // pred_region
          _
        $region40: #{tpu_custom_call.1} parent=11 // pred_fallthru
          _
        // Predicated region
        $region41: #{tpu_custom_call.1} parent=11 // pred_check
          %p296 = pneg %p213
        $region42: #{tpu_custom_call.1} parent=11 // pred_check_branch
          %298 = sbr.rel (%p296) target = $region44
        $region43: #{tpu_custom_call.1} parent=11 // pred_region
          _
        $region44: #{tpu_custom_call.1} parent=11 // pred_fallthru
          _
        // Predicated region
        $region45: #{tpu_custom_call.1} parent=11 // pred_check
          %p299 = pneg %p234
        $region46: #{tpu_custom_call.1} parent=11 // pred_check_branch
          %301 = sbr.rel (%p299) target = $region48
        $region47: #{tpu_custom_call.1} parent=11 // pred_region
          _
        $region48: #{tpu_custom_call.1} parent=11 // pred_fallthru
          _
      $region12: #{tpu_custom_call.1} parent=5 // pred_fallthru
        _
      %p302 = scmp.lt.s32.totalorder %s19, 4
      // Predicated region
      $region49: #{tpu_custom_call.1} parent=5 // pred_check
        %p303 = pneg %p302
      $region50: #{tpu_custom_call.1} parent=5 // pred_check_branch
        %305 = sbr.rel (%p303) target = $region52
      $region51: #{tpu_custom_call.1} parent=5 // pred_region
        // Predicated region
        $region53: #{tpu_custom_call.1} parent=51 // pred_check
          %p306 = pneg %p39
        $region54: #{tpu_custom_call.1} parent=51 // pred_check_branch
          %308 = sbr.rel (%p306) target = $region56
        $region55: #{tpu_custom_call.1} parent=51 // pred_region
          %s309 = smul.u32 2, %s19
          %p310 = scmp.lt.s32.totalorder %s309, 7
          %s311 = scalar_select %p310, %s309, 7
          %s312 = smul.addr %s311, 2
          %s313 = smul.addr %s312, 8
          %s314 = scalar_lea.vmem %s0, %s313
          %s315 = smul.u32 2, %s19
        $region56: #{tpu_custom_call.1} parent=51 // pred_fallthru
          _
      $region52: #{tpu_custom_call.1} parent=5 // pred_fallthru
        _
      %p316 = scmp.le.s32.totalorder 1, %s19
      %p317 = scmp.lt.s32.totalorder %s19, 5
      %p318 = pnand %p316, %p317
      %p319 = pneg %p318
      // Predicated region
      $region57: #{tpu_custom_call.1} parent=5 // pred_check
        _
      $region58: #{tpu_custom_call.1} parent=5 // pred_check_branch
        %321 = sbr.rel (%p318) target = $region60
      $region59: #{tpu_custom_call.1} parent=5 // pred_region
        %s322 = ssub.s32 %s19, 1
        %s323 = smul.u32 2, %s24
        %p324 = scmp.lt.s32.totalorder %s323, 7
        %s325 = scalar_select %p324, %s323, 7
        %s326 = smul.addr %s325, 2
        %s327 = smul.addr %s326, 8
        %s328 = scalar_lea.vmem %s0, %s327
        %p329 = pneg %p45
        %p330 = pneg %p42
        %p331 = pneg %p66
        %p332 = pneg %p63
        %p333 = pneg %p87
        %p334 = pneg %p84
        %p335 = pneg %p108
        %p336 = pneg %p105
        %p337 = pneg %p129
        %p338 = pneg %p126
        %p339 = pneg %p150
        %p340 = pneg %p147
        %p341 = pneg %p171
        %p342 = pneg %p168
        %p343 = pneg %p192
        %p344 = pneg %p189
        %p345 = pneg %p213
        %p346 = pneg %p210
        %p347 = pneg %p234
        %p348 = pneg %p231
        %p349 = pneg %p260
        %p350 = pneg %p257
        %s351 = sand.u32 %s247, 1
        %s352 = scalar_lea.sflag [#allocation3], %s351
        %s353 = sand.u32 %s247, 1
        %s354 = smul.addr %s353, 32
        %s355 = scalar_lea.vmem [#allocation2], %s354
        %s356 = smul.u32 2, %s24
        %p357 = scmp.lt.s32.totalorder %s356, 7
        %s358 = scalar_select %p357, %s356, 7
        %s359 = smul.addr %s358, 2
        %s360 = smul.addr %s359, 8
        %s361 = scalar_lea.vmem %s0, %s360
        %s362 = smul.u32 2, %s24
        %s363 = smul.u32 2, %s24
        %v364 = vld [vmem:[%s361] sm:$0xff]
        %v365 = vld [vmem:[%s361 + $0x8] sm:$0xff]
        %v366 = vld [vmem:[%s361 + $0x10] sm:$0xff]
        %v367 = vld [vmem:[%s361 + $0x18] sm:$0xff]
        %v368 = vld [vmem:[%s1] sm:$0xff]
        %v369 = vld [vmem:[%s1 + $0x8] sm:$0xff]
        %v370 = vld [vmem:[%s1 + $0x10] sm:$0xff]
        %v371 = vld [vmem:[%s1 + $0x18] sm:$0xff]
        %v372 = vld [vmem:[%s5] sm:$0x1]
        %v374 = vlaneseq
        %v375 = vshrl.u32 %v374, 7
        %v376 = vsub.s32 0, %v375
        %v377 = vrot.slane %v372, %v376
        %vm379 = vcmask 261120
        %v381 = vsel %vm379, %v364, 0
        %v384 = vsel %vm379, %v365, 0
        %v387 = vsel %vm379, %v366, 0
        %v390 = vsel %vm379, %v367, 0
        %392 = vmatprep.subr.mxu0 0.0
        %393 = vmatpush1.msra.mxu0 0.0
        %394 = vmatprep.subr.mxu0 0.0
        %395 = vmatpush1.msra.mxu0 0.0
        %396 = vmatprep.subr.mxu0 0.0
        %397 = vmatpush1.msra.mxu0 0.0
        %398 = vmatprep.subr.mxu0 0.0
        %399 = vmatpush1.msra.mxu0 0.0
        %400 = vmatprep.subr.mxu0 0.0
        %401 = vmatpush1.msra.mxu0 0.0
        %402 = vmatprep.subr.mxu0 0.0
        %403 = vmatpush1.msra.mxu0 0.0
        %404 = vmatprep.subr.mxu0 0.0
        %405 = vmatpush1.msra.mxu0 0.0
        %406 = vmatprep.subr.mxu0 0.0
        %407 = vmatpush1.msra.mxu0 0.0
        %408 = vmatprep.subr.mxu0 0.0
        %409 = vmatpush1.msra.mxu0 0.0
        %410 = vmatprep.subr.mxu0 0.0
        %411 = vmatpush1.msra.mxu0 0.0
        %412 = vmatprep.subr.mxu0 0.0
        %413 = vmatpush1.msra.mxu0 0.0
        %414 = vmatprep.subr.mxu0 0.0
        %415 = vmatpush1.msra.mxu0 0.0
        %416 = vmatprep.subr.mxu0 0.0
        %417 = vmatpush1.msra.mxu0 %v371
        %418 = vmatprep.subr.mxu0 0.0
        %419 = vmatpush1.msra.mxu0 %v370
        %420 = vmatprep.subr.mxu0 0.0
        %421 = vmatpush1.msra.mxu0 %v369
        %422 = vmatprep.subr.mxu0 0.0
        %423 = vmatpush1.msra.mxu0 %v368
        %424 = vmatprep.subr.mxu0 0.0
        %425 = vmatpush2.msra.mxu0 0.0
        %426 = vmatprep.subr.mxu0 0.0
        %427 = vmatpush2.msra.mxu0 0.0
        %428 = vmatprep.subr.mxu0 0.0
        %429 = vmatpush2.msra.mxu0 0.0
        %430 = vmatprep.subr.mxu0 0.0
        %431 = vmatpush2.msra.mxu0 0.0
        %432 = vmatprep.subr.mxu0 0.0
        %433 = vmatpush2.msra.mxu0 0.0
        %434 = vmatprep.subr.mxu0 0.0
        %435 = vmatpush2.msra.mxu0 0.0
        %436 = vmatprep.subr.mxu0 0.0
        %437 = vmatpush2.msra.mxu0 0.0
        %438 = vmatprep.subr.mxu0 0.0
        %439 = vmatpush2.msra.mxu0 0.0
        %440 = vmatprep.subr.mxu0 0.0
        %441 = vmatpush2.msra.mxu0 0.0
        %442 = vmatprep.subr.mxu0 0.0
        %443 = vmatpush2.msra.mxu0 0.0
        %444 = vmatprep.subr.mxu0 0.0
        %445 = vmatpush2.msra.mxu0 0.0
        %446 = vmatprep.subr.mxu0 0.0
        %447 = vmatpush2.msra.mxu0 0.0
        %448 = vmatprep.subr.mxu0 0.0
        %449 = vmatpush2.msra.mxu0 0.0
        %450 = vmatprep.subr.mxu0 0.0
        %451 = vmatpush2.msra.mxu0 0.0
        %452 = vmatprep.subr.mxu0 0.0
        %453 = vmatpush2.msra.mxu0 0.0
        %454 = vmatprep.subr.mxu0 0.0
        %455 = vmatpush2.msra.mxu0 0.0
        %456 = vmatprep.mubr.f32.mxu0 0.0
        %457 = vmatmul.mubr.f32.gmra.mxu0 %v381
        %v458 = vpop.f32.mrf.mxu0
        %v459 = vadd.f32 %v377, %v458
        %v460 = vpop.f32.mrf.mxu0
        %461 = vmatprep.mubr.f32.mxu0 0.0
        %462 = vmatmul.mubr.f32.gmra.mxu0 %v384
        %v463 = vpop.f32.mrf.mxu0
        %v464 = vadd.f32 %v377, %v463
        %v465 = vpop.f32.mrf.mxu0
        %466 = vmatprep.mubr.f32.mxu0 0.0
        %467 = vmatmul.mubr.f32.gmra.mxu0 %v387
        %v468 = vpop.f32.mrf.mxu0
        %v469 = vadd.f32 %v377, %v468
        %v470 = vpop.f32.mrf.mxu0
        %471 = vmatprep.mubr.f32.mxu0 0.0
        %472 = vmatmul.mubr.f32.gmra.mxu0 %v390
        %v473 = vpop.f32.mrf.mxu0
        %v474 = vadd.f32 %v377, %v473
        %v475 = vpop.f32.mrf.mxu0
        %476 = vdwg.mxu0
        %v477 = vld [vmem:[%s2] sm:$0xff]
        %v478 = vld [vmem:[%s2 + $0x8] sm:$0xff]
        %v479 = vld [vmem:[%s2 + $0x10] sm:$0xff]
        %v480 = vld [vmem:[%s2 + $0x18] sm:$0xff]
        %v481 = vld [vmem:[%s6] sm:$0x1]
        %v483 = vlaneseq
        %v484 = vshrl.u32 %v483, 7
        %v485 = vsub.s32 0, %v484
        %v486 = vrot.slane %v481, %v485
        %488 = vmatprep.subr.mxu0 0.0
        %489 = vmatpush1.msra.mxu0 0.0
        %490 = vmatprep.subr.mxu0 0.0
        %491 = vmatpush1.msra.mxu0 0.0
        %492 = vmatprep.subr.mxu0 0.0
        %493 = vmatpush1.msra.mxu0 0.0
        %494 = vmatprep.subr.mxu0 0.0
        %495 = vmatpush1.msra.mxu0 0.0
        %496 = vmatprep.subr.mxu0 0.0
        %497 = vmatpush1.msra.mxu0 0.0
        %498 = vmatprep.subr.mxu0 0.0
        %499 = vmatpush1.msra.mxu0 0.0
        %500 = vmatprep.subr.mxu0 0.0
        %501 = vmatpush1.msra.mxu0 0.0
        %502 = vmatprep.subr.mxu0 0.0
        %503 = vmatpush1.msra.mxu0 0.0
        %504 = vmatprep.subr.mxu0 0.0
        %505 = vmatpush1.msra.mxu0 0.0
        %506 = vmatprep.subr.mxu0 0.0
        %507 = vmatpush1.msra.mxu0 0.0
        %508 = vmatprep.subr.mxu0 0.0
        %509 = vmatpush1.msra.mxu0 0.0
        %510 = vmatprep.subr.mxu0 0.0
        %511 = vmatpush1.msra.mxu0 0.0
        %512 = vmatprep.subr.mxu0 0.0
        %513 = vmatpush1.msra.mxu0 %v480
        %514 = vmatprep.subr.mxu0 0.0
        %515 = vmatpush1.msra.mxu0 %v479
        %516 = vmatprep.subr.mxu0 0.0
        %517 = vmatpush1.msra.mxu0 %v478
        %518 = vmatprep.subr.mxu0 0.0
        %519 = vmatpush1.msra.mxu0 %v477
        %520 = vmatprep.subr.mxu0 0.0
        %521 = vmatpush2.msra.mxu0 0.0
        %522 = vmatprep.subr.mxu0 0.0
        %523 = vmatpush2.msra.mxu0 0.0
        %524 = vmatprep.subr.mxu0 0.0
        %525 = vmatpush2.msra.mxu0 0.0
        %526 = vmatprep.subr.mxu0 0.0
        %527 = vmatpush2.msra.mxu0 0.0
        %528 = vmatprep.subr.mxu0 0.0
        %529 = vmatpush2.msra.mxu0 0.0
        %530 = vmatprep.subr.mxu0 0.0
        %531 = vmatpush2.msra.mxu0 0.0
        %532 = vmatprep.subr.mxu0 0.0
        %533 = vmatpush2.msra.mxu0 0.0
        %534 = vmatprep.subr.mxu0 0.0
        %535 = vmatpush2.msra.mxu0 0.0
        %536 = vmatprep.subr.mxu0 0.0
        %537 = vmatpush2.msra.mxu0 0.0
        %538 = vmatprep.subr.mxu0 0.0
        %539 = vmatpush2.msra.mxu0 0.0
        %540 = vmatprep.subr.mxu0 0.0
        %541 = vmatpush2.msra.mxu0 0.0
        %542 = vmatprep.subr.mxu0 0.0
        %543 = vmatpush2.msra.mxu0 0.0
        %544 = vmatprep.subr.mxu0 0.0
        %545 = vmatpush2.msra.mxu0 0.0
        %546 = vmatprep.subr.mxu0 0.0
        %547 = vmatpush2.msra.mxu0 0.0
        %548 = vmatprep.subr.mxu0 0.0
        %549 = vmatpush2.msra.mxu0 0.0
        %550 = vmatprep.subr.mxu0 0.0
        %551 = vmatpush2.msra.mxu0 0.0
        %552 = vmatprep.mubr.f32.mxu0 0.0
        %553 = vmatmul.mubr.f32.gmra.mxu0 %v381
        %v554 = vpop.f32.mrf.mxu0
        %v555 = vadd.f32 %v486, %v554
        %v556 = vpop.f32.mrf.mxu0
        %557 = vmatprep.mubr.f32.mxu0 0.0
        %558 = vmatmul.mubr.f32.gmra.mxu0 %v384
        %v559 = vpop.f32.mrf.mxu0
        %v560 = vadd.f32 %v486, %v559
        %v561 = vpop.f32.mrf.mxu0
        %562 = vmatprep.mubr.f32.mxu0 0.0
        %563 = vmatmul.mubr.f32.gmra.mxu0 %v387
        %v564 = vpop.f32.mrf.mxu0
        %v565 = vadd.f32 %v486, %v564
        %v566 = vpop.f32.mrf.mxu0
        %567 = vmatprep.mubr.f32.mxu0 0.0
        %568 = vmatmul.mubr.f32.gmra.mxu0 %v390
        %v569 = vpop.f32.mrf.mxu0
        %v570 = vadd.f32 %v486, %v569
        %v571 = vpop.f32.mrf.mxu0
        %572 = vdwg.mxu0
        %v573 = vld [vmem:[%s3] sm:$0xff]
        %v574 = vld [vmem:[%s3 + $0x8] sm:$0xff]
        %v575 = vld [vmem:[%s3 + $0x10] sm:$0xff]
        %v576 = vld [vmem:[%s3 + $0x18] sm:$0xff]
        %v577 = vld [vmem:[%s7] sm:$0x1]
        %v579 = vlaneseq
        %v580 = vshrl.u32 %v579, 7
        %v581 = vsub.s32 0, %v580
        %v582 = vrot.slane %v577, %v581
        %584 = vmatprep.subr.mxu0 0.0
        %585 = vmatpush1.msra.mxu0 0.0
        %586 = vmatprep.subr.mxu0 0.0
        %587 = vmatpush1.msra.mxu0 0.0
        %588 = vmatprep.subr.mxu0 0.0
        %589 = vmatpush1.msra.mxu0 0.0
        %590 = vmatprep.subr.mxu0 0.0
        %591 = vmatpush1.msra.mxu0 0.0
        %592 = vmatprep.subr.mxu0 0.0
        %593 = vmatpush1.msra.mxu0 0.0
        %594 = vmatprep.subr.mxu0 0.0
        %595 = vmatpush1.msra.mxu0 0.0
        %596 = vmatprep.subr.mxu0 0.0
        %597 = vmatpush1.msra.mxu0 0.0
        %598 = vmatprep.subr.mxu0 0.0
        %599 = vmatpush1.msra.mxu0 0.0
        %600 = vmatprep.subr.mxu0 0.0
        %601 = vmatpush1.msra.mxu0 0.0
        %602 = vmatprep.subr.mxu0 0.0
        %603 = vmatpush1.msra.mxu0 0.0
        %604 = vmatprep.subr.mxu0 0.0
        %605 = vmatpush1.msra.mxu0 0.0
        %606 = vmatprep.subr.mxu0 0.0
        %607 = vmatpush1.msra.mxu0 0.0
        %608 = vmatprep.subr.mxu0 0.0
        %609 = vmatpush1.msra.mxu0 %v576
        %610 = vmatprep.subr.mxu0 0.0
        %611 = vmatpush1.msra.mxu0 %v575
        %612 = vmatprep.subr.mxu0 0.0
        %613 = vmatpush1.msra.mxu0 %v574
        %614 = vmatprep.subr.mxu0 0.0
        %615 = vmatpush1.msra.mxu0 %v573
        %616 = vmatprep.subr.mxu0 0.0
        %617 = vmatpush2.msra.mxu0 0.0
        %618 = vmatprep.subr.mxu0 0.0
        %619 = vmatpush2.msra.mxu0 0.0
        %620 = vmatprep.subr.mxu0 0.0
        %621 = vmatpush2.msra.mxu0 0.0
        %622 = vmatprep.subr.mxu0 0.0
        %623 = vmatpush2.msra.mxu0 0.0
        %624 = vmatprep.subr.mxu0 0.0
        %625 = vmatpush2.msra.mxu0 0.0
        %626 = vmatprep.subr.mxu0 0.0
        %627 = vmatpush2.msra.mxu0 0.0
        %628 = vmatprep.subr.mxu0 0.0
        %629 = vmatpush2.msra.mxu0 0.0
        %630 = vmatprep.subr.mxu0 0.0
        %631 = vmatpush2.msra.mxu0 0.0
        %632 = vmatprep.subr.mxu0 0.0
        %633 = vmatpush2.msra.mxu0 0.0
        %634 = vmatprep.subr.mxu0 0.0
        %635 = vmatpush2.msra.mxu0 0.0
        %636 = vmatprep.subr.mxu0 0.0
        %637 = vmatpush2.msra.mxu0 0.0
        %638 = vmatprep.subr.mxu0 0.0
        %639 = vmatpush2.msra.mxu0 0.0
        %640 = vmatprep.subr.mxu0 0.0
        %641 = vmatpush2.msra.mxu0 0.0
        %642 = vmatprep.subr.mxu0 0.0
        %643 = vmatpush2.msra.mxu0 0.0
        %644 = vmatprep.subr.mxu0 0.0
        %645 = vmatpush2.msra.mxu0 0.0
        %646 = vmatprep.subr.mxu0 0.0
        %647 = vmatpush2.msra.mxu0 0.0
        %648 = vmatprep.mubr.f32.mxu0 0.0
        %649 = vmatmul.mubr.f32.gmra.mxu0 %v381
        %v650 = vpop.f32.mrf.mxu0
        %v651 = vadd.f32 %v582, %v650
        %v652 = vpop.f32.mrf.mxu0
        %653 = vmatprep.mubr.f32.mxu0 0.0
        %654 = vmatmul.mubr.f32.gmra.mxu0 %v384
        %v655 = vpop.f32.mrf.mxu0
        %v656 = vadd.f32 %v582, %v655
        %v657 = vpop.f32.mrf.mxu0
        %658 = vmatprep.mubr.f32.mxu0 0.0
        %659 = vmatmul.mubr.f32.gmra.mxu0 %v387
        %v660 = vpop.f32.mrf.mxu0
        %v661 = vadd.f32 %v582, %v660
        %v662 = vpop.f32.mrf.mxu0
        %663 = vmatprep.mubr.f32.mxu0 0.0
        %664 = vmatmul.mubr.f32.gmra.mxu0 %v390
        %v665 = vpop.f32.mrf.mxu0
        %v666 = vadd.f32 %v582, %v665
        %v667 = vpop.f32.mrf.mxu0
        %668 = vdwg.mxu0
        %v669 = vld [vmem:[%s9] sm:$0xff]
        %v670 = vld [vmem:[%s9 + $0x8] sm:$0xff]
        %vm671 = vcmask 64512
        %v673 = vsel %vm671, %v459, 0
        %v676 = vsel %vm671, %v464, 0
        %v679 = vsel %vm671, %v555, 0
        %v682 = vsel %vm671, %v560, 0
        %684 = vmatprep.subr.mxu0 0.0
        %685 = vmatpush1.xpose.msra.mxu0 0.0
        %686 = vmatprep.subr.mxu0 0.0
        %687 = vmatpush1.xpose.msra.mxu0 0.0
        %688 = vmatprep.subr.mxu0 0.0
        %689 = vmatpush1.xpose.msra.mxu0 0.0
        %690 = vmatprep.subr.mxu0 0.0
        %691 = vmatpush1.xpose.msra.mxu0 0.0
        %692 = vmatprep.subr.mxu0 0.0
        %693 = vmatpush1.xpose.msra.mxu0 0.0
        %694 = vmatprep.subr.mxu0 0.0
        %695 = vmatpush1.xpose.msra.mxu0 0.0
        %696 = vmatprep.subr.mxu0 0.0
        %697 = vmatpush1.xpose.msra.mxu0 0.0
        %698 = vmatprep.subr.mxu0 0.0
        %699 = vmatpush1.xpose.msra.mxu0 0.0
        %700 = vmatprep.subr.mxu0 0.0
        %701 = vmatpush1.xpose.msra.mxu0 0.0
        %702 = vmatprep.subr.mxu0 0.0
        %703 = vmatpush1.xpose.msra.mxu0 0.0
        %704 = vmatprep.subr.mxu0 0.0
        %705 = vmatpush1.xpose.msra.mxu0 0.0
        %706 = vmatprep.subr.mxu0 0.0
        %707 = vmatpush1.xpose.msra.mxu0 0.0
        %708 = vmatprep.subr.mxu0 0.0
        %709 = vmatpush1.xpose.msra.mxu0 0.0
        %710 = vmatprep.subr.mxu0 0.0
        %711 = vmatpush1.xpose.msra.mxu0 0.0
        %712 = vmatprep.subr.mxu0 0.0
        %713 = vmatpush1.xpose.msra.mxu0 %v682
        %714 = vmatprep.subr.mxu0 0.0
        %715 = vmatpush1.xpose.msra.mxu0 %v679
        %716 = vmatprep.subr.mxu0 0.0
        %717 = vmatpush2.xpose.msra.mxu0 0.0
        %718 = vmatprep.subr.mxu0 0.0
        %719 = vmatpush2.xpose.msra.mxu0 0.0
        %720 = vmatprep.subr.mxu0 0.0
        %721 = vmatpush2.xpose.msra.mxu0 0.0
        %722 = vmatprep.subr.mxu0 0.0
        %723 = vmatpush2.xpose.msra.mxu0 0.0
        %724 = vmatprep.subr.mxu0 0.0
        %725 = vmatpush2.xpose.msra.mxu0 0.0
        %726 = vmatprep.subr.mxu0 0.0
        %727 = vmatpush2.xpose.msra.mxu0 0.0
        %728 = vmatprep.subr.mxu0 0.0
        %729 = vmatpush2.xpose.msra.mxu0 0.0
        %730 = vmatprep.subr.mxu0 0.0
        %731 = vmatpush2.xpose.msra.mxu0 0.0
        %732 = vmatprep.subr.mxu0 0.0
        %733 = vmatpush2.xpose.msra.mxu0 0.0
        %734 = vmatprep.subr.mxu0 0.0
        %735 = vmatpush2.xpose.msra.mxu0 0.0
        %736 = vmatprep.subr.mxu0 0.0
        %737 = vmatpush2.xpose.msra.mxu0 0.0
        %738 = vmatprep.subr.mxu0 0.0
        %739 = vmatpush2.xpose.msra.mxu0 0.0
        %740 = vmatprep.subr.mxu0 0.0
        %741 = vmatpush2.xpose.msra.mxu0 0.0
        %742 = vmatprep.subr.mxu0 0.0
        %743 = vmatpush2.xpose.msra.mxu0 0.0
        %744 = vmatprep.subr.mxu0 0.0
        %745 = vmatpush2.xpose.msra.mxu0 0.0
        %746 = vmatprep.subr.mxu0 0.0
        %747 = vmatpush2.xpose.msra.mxu0 0.0
        %748 = vmatprep.mubr.f32.mxu0 0.0
        %749 = vmatmul.mubr.f32.gmra.mxu0 %v673
        %v750 = vpop.f32.mrf.mxu0
        %v751 = vadd.f32 %v669, %v750
        %v752 = vpop.f32.mrf.mxu0
        %753 = vmatprep.mubr.f32.mxu0 0.0
        %754 = vmatmul.mubr.f32.gmra.mxu0 %v676
        %v755 = vpop.f32.mrf.mxu0
        %v756 = vadd.f32 %v670, %v755
        %v757 = vpop.f32.mrf.mxu0
        %758 = vdwg.mxu0
        %v760 = vsel %vm671, %v469, 0
        %v763 = vsel %vm671, %v474, 0
        %v766 = vsel %vm671, %v565, 0
        %v769 = vsel %vm671, %v570, 0
        %771 = vmatprep.subr.mxu0 0.0
        %772 = vmatpush1.xpose.msra.mxu0 0.0
        %773 = vmatprep.subr.mxu0 0.0
        %774 = vmatpush1.xpose.msra.mxu0 0.0
        %775 = vmatprep.subr.mxu0 0.0
        %776 = vmatpush1.xpose.msra.mxu0 0.0
        %777 = vmatprep.subr.mxu0 0.0
        %778 = vmatpush1.xpose.msra.mxu0 0.0
        %779 = vmatprep.subr.mxu0 0.0
        %780 = vmatpush1.xpose.msra.mxu0 0.0
        %781 = vmatprep.subr.mxu0 0.0
        %782 = vmatpush1.xpose.msra.mxu0 0.0
        %783 = vmatprep.subr.mxu0 0.0
        %784 = vmatpush1.xpose.msra.mxu0 0.0
        %785 = vmatprep.subr.mxu0 0.0
        %786 = vmatpush1.xpose.msra.mxu0 0.0
        %787 = vmatprep.subr.mxu0 0.0
        %788 = vmatpush1.xpose.msra.mxu0 0.0
        %789 = vmatprep.subr.mxu0 0.0
        %790 = vmatpush1.xpose.msra.mxu0 0.0
        %791 = vmatprep.subr.mxu0 0.0
        %792 = vmatpush1.xpose.msra.mxu0 0.0
        %793 = vmatprep.subr.mxu0 0.0
        %794 = vmatpush1.xpose.msra.mxu0 0.0
        %795 = vmatprep.subr.mxu0 0.0
        %796 = vmatpush1.xpose.msra.mxu0 0.0
        %797 = vmatprep.subr.mxu0 0.0
        %798 = vmatpush1.xpose.msra.mxu0 0.0
        %799 = vmatprep.subr.mxu0 0.0
        %800 = vmatpush1.xpose.msra.mxu0 %v769
        %801 = vmatprep.subr.mxu0 0.0
        %802 = vmatpush1.xpose.msra.mxu0 %v766
        %803 = vmatprep.subr.mxu0 0.0
        %804 = vmatpush2.xpose.msra.mxu0 0.0
        %805 = vmatprep.subr.mxu0 0.0
        %806 = vmatpush2.xpose.msra.mxu0 0.0
        %807 = vmatprep.subr.mxu0 0.0
        %808 = vmatpush2.xpose.msra.mxu0 0.0
        %809 = vmatprep.subr.mxu0 0.0
        %810 = vmatpush2.xpose.msra.mxu0 0.0
        %811 = vmatprep.subr.mxu0 0.0
        %812 = vmatpush2.xpose.msra.mxu0 0.0
        %813 = vmatprep.subr.mxu0 0.0
        %814 = vmatpush2.xpose.msra.mxu0 0.0
        %815 = vmatprep.subr.mxu0 0.0
        %816 = vmatpush2.xpose.msra.mxu0 0.0
        %817 = vmatprep.subr.mxu0 0.0
        %818 = vmatpush2.xpose.msra.mxu0 0.0
        %819 = vmatprep.subr.mxu0 0.0
        %820 = vmatpush2.xpose.msra.mxu0 0.0
        %821 = vmatprep.subr.mxu0 0.0
        %822 = vmatpush2.xpose.msra.mxu0 0.0
        %823 = vmatprep.subr.mxu0 0.0
        %824 = vmatpush2.xpose.msra.mxu0 0.0
        %825 = vmatprep.subr.mxu0 0.0
        %826 = vmatpush2.xpose.msra.mxu0 0.0
        %827 = vmatprep.subr.mxu0 0.0
        %828 = vmatpush2.xpose.msra.mxu0 0.0
        %829 = vmatprep.subr.mxu0 0.0
        %830 = vmatpush2.xpose.msra.mxu0 0.0
        %831 = vmatprep.subr.mxu0 0.0
        %832 = vmatpush2.xpose.msra.mxu0 0.0
        %833 = vmatprep.subr.mxu0 0.0
        %834 = vmatpush2.xpose.msra.mxu0 0.0
        %835 = vmatprep.mubr.f32.mxu0 0.0
        %836 = vmatmul.mubr.f32.gmra.mxu0 %v760
        %v837 = vpop.f32.mrf.mxu0
        %v838 = vadd.f32 %v669, %v837
        %v839 = vpop.f32.mrf.mxu0
        %840 = vmatprep.mubr.f32.mxu0 0.0
        %841 = vmatmul.mubr.f32.gmra.mxu0 %v763
        %v842 = vpop.f32.mrf.mxu0
        %v843 = vadd.f32 %v670, %v842
        %v844 = vpop.f32.mrf.mxu0
        %845 = vdwg.mxu0
        %vm846 = vcmask 130048
        %v847 = vsel %vm846, %v751, -inf
        %848 = vmax.xlane.f32.xlu0 %v847
        %v849 = vpop.xlane.xlu0 %848
        %v850 = vsel %vm846, %v756, -inf
        %851 = vmax.xlane.f32.xlu0 %v850
        %v852 = vpop.xlane.xlu0 %851
        %v853 = vsel %vm846, %v838, -inf
        %854 = vmax.xlane.f32.xlu0 %v853
        %v855 = vpop.xlane.xlu0 %854
        %v856 = vsel %vm846, %v843, -inf
        %857 = vmax.xlane.f32.xlu0 %v856
        %v858 = vpop.xlane.xlu0 %857
        %v859 = vsub.f32 %v751, %v849
        %v860 = vsub.f32 %v756, %v852
        %v861 = vsub.f32 %v838, %v855
        %v862 = vsub.f32 %v843, %v858
        %v863 = vmul.f32 %v859, 1.442695
        %v864 = vpow.pop %v863
        %v865 = vmul.f32 %v860, 1.442695
        %v866 = vpow.pop %v865
        %v867 = vmul.f32 %v861, 1.442695
        %v868 = vpow.pop %v867
        %v869 = vmul.f32 %v862, 1.442695
        %v870 = vpow.pop %v869
        %v871 = vsel %vm846, %v864, 0.0
        %872 = vadd.xlane.f32.xlu0 %v871
        %v873 = vpop.xlane.xlu0 %872
        %v874 = vsel %vm846, %v866, 0.0
        %875 = vadd.xlane.f32.xlu0 %v874
        %v876 = vpop.xlane.xlu0 %875
        %v877 = vsel %vm846, %v868, 0.0
        %878 = vadd.xlane.f32.xlu0 %v877
        %v879 = vpop.xlane.xlu0 %878
        %v880 = vsel %vm846, %v870, 0.0
        %881 = vadd.xlane.f32.xlu0 %v880
        %v882 = vpop.xlane.xlu0 %881
        %v883 = vrcp.pop %v873
        %v884 = vrcp.pop %v876
        %v885 = vrcp.pop %v879
        %v886 = vrcp.pop %v882
        %v887 = vmul.f32 %v864, %v883
        %v888 = vmul.f32 %v866, %v884
        %v889 = vmul.f32 %v868, %v885
        %v890 = vmul.f32 %v870, %v886
        %v892 = vsel %vm846, %v887, 0
        %v895 = vsel %vm846, %v888, 0
        %897 = vmatprep.subr.mxu0 0.0
        %898 = vmatpush1.msra.mxu0 0.0
        %899 = vmatprep.subr.mxu0 0.0
        %900 = vmatpush1.msra.mxu0 0.0
        %901 = vmatprep.subr.mxu0 0.0
        %902 = vmatpush1.msra.mxu0 0.0
        %903 = vmatprep.subr.mxu0 0.0
        %904 = vmatpush1.msra.mxu0 0.0
        %905 = vmatprep.subr.mxu0 0.0
        %906 = vmatpush1.msra.mxu0 0.0
        %907 = vmatprep.subr.mxu0 0.0
        %908 = vmatpush1.msra.mxu0 0.0
        %909 = vmatprep.subr.mxu0 0.0
        %910 = vmatpush1.msra.mxu0 0.0
        %911 = vmatprep.subr.mxu0 0.0
        %912 = vmatpush1.msra.mxu0 0.0
        %913 = vmatprep.subr.mxu0 0.0
        %914 = vmatpush1.msra.mxu0 0.0
        %915 = vmatprep.subr.mxu0 0.0
        %916 = vmatpush1.msra.mxu0 0.0
        %917 = vmatprep.subr.mxu0 0.0
        %918 = vmatpush1.msra.mxu0 0.0
        %919 = vmatprep.subr.mxu0 0.0
        %920 = vmatpush1.msra.mxu0 0.0
        %921 = vmatprep.subr.mxu0 0.0
        %922 = vmatpush1.msra.mxu0 0.0
        %923 = vmatprep.subr.mxu0 0.0
        %924 = vmatpush1.msra.mxu0 0.0
        %925 = vmatprep.subr.mxu0 0.0
        %926 = vmatpush1.msra.mxu0 %v656
        %927 = vmatprep.subr.mxu0 0.0
        %928 = vmatpush1.msra.mxu0 %v651
        %929 = vmatprep.subr.mxu0 0.0
        %930 = vmatpush2.msra.mxu0 0.0
        %931 = vmatprep.subr.mxu0 0.0
        %932 = vmatpush2.msra.mxu0 0.0
        %933 = vmatprep.subr.mxu0 0.0
        %934 = vmatpush2.msra.mxu0 0.0
        %935 = vmatprep.subr.mxu0 0.0
        %936 = vmatpush2.msra.mxu0 0.0
        %937 = vmatprep.subr.mxu0 0.0
        %938 = vmatpush2.msra.mxu0 0.0
        %939 = vmatprep.subr.mxu0 0.0
        %940 = vmatpush2.msra.mxu0 0.0
        %941 = vmatprep.subr.mxu0 0.0
        %942 = vmatpush2.msra.mxu0 0.0
        %943 = vmatprep.subr.mxu0 0.0
        %944 = vmatpush2.msra.mxu0 0.0
        %945 = vmatprep.subr.mxu0 0.0
        %946 = vmatpush2.msra.mxu0 0.0
        %947 = vmatprep.subr.mxu0 0.0
        %948 = vmatpush2.msra.mxu0 0.0
        %949 = vmatprep.subr.mxu0 0.0
        %950 = vmatpush2.msra.mxu0 0.0
        %951 = vmatprep.subr.mxu0 0.0
        %952 = vmatpush2.msra.mxu0 0.0
        %953 = vmatprep.subr.mxu0 0.0
        %954 = vmatpush2.msra.mxu0 0.0
        %955 = vmatprep.subr.mxu0 0.0
        %956 = vmatpush2.msra.mxu0 0.0
        %957 = vmatprep.subr.mxu0 0.0
        %958 = vmatpush2.msra.mxu0 0.0
        %959 = vmatprep.subr.mxu0 0.0
        %960 = vmatpush2.msra.mxu0 0.0
        %961 = vmatprep.mubr.f32.mxu0 0.0
        %962 = vmatmul.mubr.f32.gmra.mxu0 %v892
        %v963 = vpop.f32.mrf.mxu0
        %v964 = vadd.f32 0.0, %v963
        %v965 = vpop.f32.mrf.mxu0
        %966 = vmatprep.mubr.f32.mxu0 0.0
        %967 = vmatmul.mubr.f32.gmra.mxu0 %v895
        %v968 = vpop.f32.mrf.mxu0
        %v969 = vadd.f32 0.0, %v968
        %v970 = vpop.f32.mrf.mxu0
        %971 = vdwg.mxu0
        %v973 = vsel %vm846, %v889, 0
        %v976 = vsel %vm846, %v890, 0
        %978 = vmatprep.subr.mxu0 0.0
        %979 = vmatpush1.msra.mxu0 0.0
        %980 = vmatprep.subr.mxu0 0.0
        %981 = vmatpush1.msra.mxu0 0.0
        %982 = vmatprep.subr.mxu0 0.0
        %983 = vmatpush1.msra.mxu0 0.0
        %984 = vmatprep.subr.mxu0 0.0
        %985 = vmatpush1.msra.mxu0 0.0
        %986 = vmatprep.subr.mxu0 0.0
        %987 = vmatpush1.msra.mxu0 0.0
        %988 = vmatprep.subr.mxu0 0.0
        %989 = vmatpush1.msra.mxu0 0.0
        %990 = vmatprep.subr.mxu0 0.0
        %991 = vmatpush1.msra.mxu0 0.0
        %992 = vmatprep.subr.mxu0 0.0
        %993 = vmatpush1.msra.mxu0 0.0
        %994 = vmatprep.subr.mxu0 0.0
        %995 = vmatpush1.msra.mxu0 0.0
        %996 = vmatprep.subr.mxu0 0.0
        %997 = vmatpush1.msra.mxu0 0.0
        %998 = vmatprep.subr.mxu0 0.0
        %999 = vmatpush1.msra.mxu0 0.0
        %1000 = vmatprep.subr.mxu0 0.0
        %1001 = vmatpush1.msra.mxu0 0.0
        %1002 = vmatprep.subr.mxu0 0.0
        %1003 = vmatpush1.msra.mxu0 0.0
        %1004 = vmatprep.subr.mxu0 0.0
        %1005 = vmatpush1.msra.mxu0 0.0
        %1006 = vmatprep.subr.mxu0 0.0
        %1007 = vmatpush1.msra.mxu0 %v666
        %1008 = vmatprep.subr.mxu0 0.0
        %1009 = vmatpush1.msra.mxu0 %v661
        %1010 = vmatprep.subr.mxu0 0.0
        %1011 = vmatpush2.msra.mxu0 0.0
        %1012 = vmatprep.subr.mxu0 0.0
        %1013 = vmatpush2.msra.mxu0 0.0
        %1014 = vmatprep.subr.mxu0 0.0
        %1015 = vmatpush2.msra.mxu0 0.0
        %1016 = vmatprep.subr.mxu0 0.0
        %1017 = vmatpush2.msra.mxu0 0.0
        %1018 = vmatprep.subr.mxu0 0.0
        %1019 = vmatpush2.msra.mxu0 0.0
        %1020 = vmatprep.subr.mxu0 0.0
        %1021 = vmatpush2.msra.mxu0 0.0
        %1022 = vmatprep.subr.mxu0 0.0
        %1023 = vmatpush2.msra.mxu0 0.0
        %1024 = vmatprep.subr.mxu0 0.0
        %1025 = vmatpush2.msra.mxu0 0.0
        %1026 = vmatprep.subr.mxu0 0.0
        %1027 = vmatpush2.msra.mxu0 0.0
        %1028 = vmatprep.subr.mxu0 0.0
        %1029 = vmatpush2.msra.mxu0 0.0
        %1030 = vmatprep.subr.mxu0 0.0
        %1031 = vmatpush2.msra.mxu0 0.0
        %1032 = vmatprep.subr.mxu0 0.0
        %1033 = vmatpush2.msra.mxu0 0.0
        %1034 = vmatprep.subr.mxu0 0.0
        %1035 = vmatpush2.msra.mxu0 0.0
        %1036 = vmatprep.subr.mxu0 0.0
        %1037 = vmatpush2.msra.mxu0 0.0
        %1038 = vmatprep.subr.mxu0 0.0
        %1039 = vmatpush2.msra.mxu0 0.0
        %1040 = vmatprep.subr.mxu0 0.0
        %1041 = vmatpush2.msra.mxu0 0.0
        %1042 = vmatprep.mubr.f32.mxu0 0.0
        %1043 = vmatmul.mubr.f32.gmra.mxu0 %v973
        %v1044 = vpop.f32.mrf.mxu0
        %v1045 = vadd.f32 0.0, %v1044
        %v1046 = vpop.f32.mrf.mxu0
        %1047 = vmatprep.mubr.f32.mxu0 0.0
        %1048 = vmatmul.mubr.f32.gmra.mxu0 %v976
        %v1049 = vpop.f32.mrf.mxu0
        %v1050 = vadd.f32 0.0, %v1049
        %v1051 = vpop.f32.mrf.mxu0
        %1052 = vdwg.mxu0
        %v1053 = vld [vmem:[%s4] sm:$0xff]
        %s1054 = scalar_lea.vmem %s1, 32
        %v1055 = vld [vmem:[%s1054] sm:$0xff]
        %v1056 = vld [vmem:[%s1054 + $0x8] sm:$0xff]
        %v1057 = vld [vmem:[%s1054 + $0x10] sm:$0xff]
        %v1058 = vld [vmem:[%s1054 + $0x18] sm:$0xff]
        %s1059 = scalar_lea.vmem %s5, 1
        %v1060 = vld [vmem:[%s1059] sm:$0x1]
        %v1062 = vlaneseq
        %v1063 = vshrl.u32 %v1062, 7
        %v1064 = vsub.s32 0, %v1063
        %v1065 = vrot.slane %v1060, %v1064
        %1067 = vmatprep.subr.mxu0 0.0
        %1068 = vmatpush1.msra.mxu0 0.0
        %1069 = vmatprep.subr.mxu0 0.0
        %1070 = vmatpush1.msra.mxu0 0.0
        %1071 = vmatprep.subr.mxu0 0.0
        %1072 = vmatpush1.msra.mxu0 0.0
        %1073 = vmatprep.subr.mxu0 0.0
        %1074 = vmatpush1.msra.mxu0 0.0
        %1075 = vmatprep.subr.mxu0 0.0
        %1076 = vmatpush1.msra.mxu0 0.0
        %1077 = vmatprep.subr.mxu0 0.0
        %1078 = vmatpush1.msra.mxu0 0.0
        %1079 = vmatprep.subr.mxu0 0.0
        %1080 = vmatpush1.msra.mxu0 0.0
        %1081 = vmatprep.subr.mxu0 0.0
        %1082 = vmatpush1.msra.mxu0 0.0
        %1083 = vmatprep.subr.mxu0 0.0
        %1084 = vmatpush1.msra.mxu0 0.0
        %1085 = vmatprep.subr.mxu0 0.0
        %1086 = vmatpush1.msra.mxu0 0.0
        %1087 = vmatprep.subr.mxu0 0.0
        %1088 = vmatpush1.msra.mxu0 0.0
        %1089 = vmatprep.subr.mxu0 0.0
        %1090 = vmatpush1.msra.mxu0 0.0
        %1091 = vmatprep.subr.mxu0 0.0
        %1092 = vmatpush1.msra.mxu0 %v1058
        %1093 = vmatprep.subr.mxu0 0.0
        %1094 = vmatpush1.msra.mxu0 %v1057
        %1095 = vmatprep.subr.mxu0 0.0
        %1096 = vmatpush1.msra.mxu0 %v1056
        %1097 = vmatprep.subr.mxu0 0.0
        %1098 = vmatpush1.msra.mxu0 %v1055
        %1099 = vmatprep.subr.mxu0 0.0
        %1100 = vmatpush2.msra.mxu0 0.0
        %1101 = vmatprep.subr.mxu0 0.0
        %1102 = vmatpush2.msra.mxu0 0.0
        %1103 = vmatprep.subr.mxu0 0.0
        %1104 = vmatpush2.msra.mxu0 0.0
        %1105 = vmatprep.subr.mxu0 0.0
        %1106 = vmatpush2.msra.mxu0 0.0
        %1107 = vmatprep.subr.mxu0 0.0
        %1108 = vmatpush2.msra.mxu0 0.0
        %1109 = vmatprep.subr.mxu0 0.0
        %1110 = vmatpush2.msra.mxu0 0.0
        %1111 = vmatprep.subr.mxu0 0.0
        %1112 = vmatpush2.msra.mxu0 0.0
        %1113 = vmatprep.subr.mxu0 0.0
        %1114 = vmatpush2.msra.mxu0 0.0
        %1115 = vmatprep.subr.mxu0 0.0
        %1116 = vmatpush2.msra.mxu0 0.0
        %1117 = vmatprep.subr.mxu0 0.0
        %1118 = vmatpush2.msra.mxu0 0.0
        %1119 = vmatprep.subr.mxu0 0.0
        %1120 = vmatpush2.msra.mxu0 0.0
        %1121 = vmatprep.subr.mxu0 0.0
        %1122 = vmatpush2.msra.mxu0 0.0
        %1123 = vmatprep.subr.mxu0 0.0
        %1124 = vmatpush2.msra.mxu0 0.0
        %1125 = vmatprep.subr.mxu0 0.0
        %1126 = vmatpush2.msra.mxu0 0.0
        %1127 = vmatprep.subr.mxu0 0.0
        %1128 = vmatpush2.msra.mxu0 0.0
        %1129 = vmatprep.subr.mxu0 0.0
        %1130 = vmatpush2.msra.mxu0 0.0
        %1131 = vmatprep.mubr.f32.mxu0 0.0
        %1132 = vmatmul.mubr.f32.gmra.mxu0 %v381
        %v1133 = vpop.f32.mrf.mxu0
        %v1134 = vadd.f32 %v1065, %v1133
        %v1135 = vpop.f32.mrf.mxu0
        %1136 = vmatprep.mubr.f32.mxu0 0.0
        %1137 = vmatmul.mubr.f32.gmra.mxu0 %v384
        %v1138 = vpop.f32.mrf.mxu0
        %v1139 = vadd.f32 %v1065, %v1138
        %v1140 = vpop.f32.mrf.mxu0
        %1141 = vmatprep.mubr.f32.mxu0 0.0
        %1142 = vmatmul.mubr.f32.gmra.mxu0 %v387
        %v1143 = vpop.f32.mrf.mxu0
        %v1144 = vadd.f32 %v1065, %v1143
        %v1145 = vpop.f32.mrf.mxu0
        %1146 = vmatprep.mubr.f32.mxu0 0.0
        %1147 = vmatmul.mubr.f32.gmra.mxu0 %v390
        %v1148 = vpop.f32.mrf.mxu0
        %v1149 = vadd.f32 %v1065, %v1148
        %v1150 = vpop.f32.mrf.mxu0
        %1151 = vdwg.mxu0
        %s1152 = scalar_lea.vmem %s2, 32
        %v1153 = vld [vmem:[%s1152] sm:$0xff]
        %v1154 = vld [vmem:[%s1152 + $0x8] sm:$0xff]
        %v1155 = vld [vmem:[%s1152 + $0x10] sm:$0xff]
        %v1156 = vld [vmem:[%s1152 + $0x18] sm:$0xff]
        %s1157 = scalar_lea.vmem %s6, 1
        %v1158 = vld [vmem:[%s1157] sm:$0x1]
        %v1160 = vlaneseq
        %v1161 = vshrl.u32 %v1160, 7
        %v1162 = vsub.s32 0, %v1161
        %v1163 = vrot.slane %v1158, %v1162
        %1165 = vmatprep.subr.mxu0 0.0
        %1166 = vmatpush1.msra.mxu0 0.0
        %1167 = vmatprep.subr.mxu0 0.0
        %1168 = vmatpush1.msra.mxu0 0.0
        %1169 = vmatprep.subr.mxu0 0.0
        %1170 = vmatpush1.msra.mxu0 0.0
        %1171 = vmatprep.subr.mxu0 0.0
        %1172 = vmatpush1.msra.mxu0 0.0
        %1173 = vmatprep.subr.mxu0 0.0
        %1174 = vmatpush1.msra.mxu0 0.0
        %1175 = vmatprep.subr.mxu0 0.0
        %1176 = vmatpush1.msra.mxu0 0.0
        %1177 = vmatprep.subr.mxu0 0.0
        %1178 = vmatpush1.msra.mxu0 0.0
        %1179 = vmatprep.subr.mxu0 0.0
        %1180 = vmatpush1.msra.mxu0 0.0
        %1181 = vmatprep.subr.mxu0 0.0
        %1182 = vmatpush1.msra.mxu0 0.0
        %1183 = vmatprep.subr.mxu0 0.0
        %1184 = vmatpush1.msra.mxu0 0.0
        %1185 = vmatprep.subr.mxu0 0.0
        %1186 = vmatpush1.msra.mxu0 0.0
        %1187 = vmatprep.subr.mxu0 0.0
        %1188 = vmatpush1.msra.mxu0 0.0
        %1189 = vmatprep.subr.mxu0 0.0
        %1190 = vmatpush1.msra.mxu0 %v1156
        %1191 = vmatprep.subr.mxu0 0.0
        %1192 = vmatpush1.msra.mxu0 %v1155
        %1193 = vmatprep.subr.mxu0 0.0
        %1194 = vmatpush1.msra.mxu0 %v1154
        %1195 = vmatprep.subr.mxu0 0.0
        %1196 = vmatpush1.msra.mxu0 %v1153
        %1197 = vmatprep.subr.mxu0 0.0
        %1198 = vmatpush2.msra.mxu0 0.0
        %1199 = vmatprep.subr.mxu0 0.0
        %1200 = vmatpush2.msra.mxu0 0.0
        %1201 = vmatprep.subr.mxu0 0.0
        %1202 = vmatpush2.msra.mxu0 0.0
        %1203 = vmatprep.subr.mxu0 0.0
        %1204 = vmatpush2.msra.mxu0 0.0
        %1205 = vmatprep.subr.mxu0 0.0
        %1206 = vmatpush2.msra.mxu0 0.0
        %1207 = vmatprep.subr.mxu0 0.0
        %1208 = vmatpush2.msra.mxu0 0.0
        %1209 = vmatprep.subr.mxu0 0.0
        %1210 = vmatpush2.msra.mxu0 0.0
        %1211 = vmatprep.subr.mxu0 0.0
        %1212 = vmatpush2.msra.mxu0 0.0
        %1213 = vmatprep.subr.mxu0 0.0
        %1214 = vmatpush2.msra.mxu0 0.0
        %1215 = vmatprep.subr.mxu0 0.0
        %1216 = vmatpush2.msra.mxu0 0.0
        %1217 = vmatprep.subr.mxu0 0.0
        %1218 = vmatpush2.msra.mxu0 0.0
        %1219 = vmatprep.subr.mxu0 0.0
        %1220 = vmatpush2.msra.mxu0 0.0
        %1221 = vmatprep.subr.mxu0 0.0
        %1222 = vmatpush2.msra.mxu0 0.0
        %1223 = vmatprep.subr.mxu0 0.0
        %1224 = vmatpush2.msra.mxu0 0.0
        %1225 = vmatprep.subr.mxu0 0.0
        %1226 = vmatpush2.msra.mxu0 0.0
        %1227 = vmatprep.subr.mxu0 0.0
        %1228 = vmatpush2.msra.mxu0 0.0
        %1229 = vmatprep.mubr.f32.mxu0 0.0
        %1230 = vmatmul.mubr.f32.gmra.mxu0 %v381
        %v1231 = vpop.f32.mrf.mxu0
        %v1232 = vadd.f32 %v1163, %v1231
        %v1233 = vpop.f32.mrf.mxu0
        %1234 = vmatprep.mubr.f32.mxu0 0.0
        %1235 = vmatmul.mubr.f32.gmra.mxu0 %v384
        %v1236 = vpop.f32.mrf.mxu0
        %v1237 = vadd.f32 %v1163, %v1236
        %v1238 = vpop.f32.mrf.mxu0
        %1239 = vmatprep.mubr.f32.mxu0 0.0
        %1240 = vmatmul.mubr.f32.gmra.mxu0 %v387
        %v1241 = vpop.f32.mrf.mxu0
        %v1242 = vadd.f32 %v1163, %v1241
        %v1243 = vpop.f32.mrf.mxu0
        %1244 = vmatprep.mubr.f32.mxu0 0.0
        %1245 = vmatmul.mubr.f32.gmra.mxu0 %v390
        %v1246 = vpop.f32.mrf.mxu0
        %v1247 = vadd.f32 %v1163, %v1246
        %v1248 = vpop.f32.mrf.mxu0
        %1249 = vdwg.mxu0
        %s1250 = scalar_lea.vmem %s3, 32
        %v1251 = vld [vmem:[%s1250] sm:$0xff]
        %v1252 = vld [vmem:[%s1250 + $0x8] sm:$0xff]
        %v1253 = vld [vmem:[%s1250 + $0x10] sm:$0xff]
        %v1254 = vld [vmem:[%s1250 + $0x18] sm:$0xff]
        %s1255 = scalar_lea.vmem %s7, 1
        %v1256 = vld [vmem:[%s1255] sm:$0x1]
        %v1258 = vlaneseq
        %v1259 = vshrl.u32 %v1258, 7
        %v1260 = vsub.s32 0, %v1259
        %v1261 = vrot.slane %v1256, %v1260
        %1263 = vmatprep.subr.mxu0 0.0
        %1264 = vmatpush1.msra.mxu0 0.0
        %1265 = vmatprep.subr.mxu0 0.0
        %1266 = vmatpush1.msra.mxu0 0.0
        %1267 = vmatprep.subr.mxu0 0.0
        %1268 = vmatpush1.msra.mxu0 0.0
        %1269 = vmatprep.subr.mxu0 0.0
        %1270 = vmatpush1.msra.mxu0 0.0
        %1271 = vmatprep.subr.mxu0 0.0
        %1272 = vmatpush1.msra.mxu0 0.0
        %1273 = vmatprep.subr.mxu0 0.0
        %1274 = vmatpush1.msra.mxu0 0.0
        %1275 = vmatprep.subr.mxu0 0.0
        %1276 = vmatpush1.msra.mxu0 0.0
        %1277 = vmatprep.subr.mxu0 0.0
        %1278 = vmatpush1.msra.mxu0 0.0
        %1279 = vmatprep.subr.mxu0 0.0
        %1280 = vmatpush1.msra.mxu0 0.0
        %1281 = vmatprep.subr.mxu0 0.0
        %1282 = vmatpush1.msra.mxu0 0.0
        %1283 = vmatprep.subr.mxu0 0.0
        %1284 = vmatpush1.msra.mxu0 0.0
        %1285 = vmatprep.subr.mxu0 0.0
        %1286 = vmatpush1.msra.mxu0 0.0
        %1287 = vmatprep.subr.mxu0 0.0
        %1288 = vmatpush1.msra.mxu0 %v1254
        %1289 = vmatprep.subr.mxu0 0.0
        %1290 = vmatpush1.msra.mxu0 %v1253
        %1291 = vmatprep.subr.mxu0 0.0
        %1292 = vmatpush1.msra.mxu0 %v1252
        %1293 = vmatprep.subr.mxu0 0.0
        %1294 = vmatpush1.msra.mxu0 %v1251
        %1295 = vmatprep.subr.mxu0 0.0
        %1296 = vmatpush2.msra.mxu0 0.0
        %1297 = vmatprep.subr.mxu0 0.0
        %1298 = vmatpush2.msra.mxu0 0.0
        %1299 = vmatprep.subr.mxu0 0.0
        %1300 = vmatpush2.msra.mxu0 0.0
        %1301 = vmatprep.subr.mxu0 0.0
        %1302 = vmatpush2.msra.mxu0 0.0
        %1303 = vmatprep.subr.mxu0 0.0
        %1304 = vmatpush2.msra.mxu0 0.0
        %1305 = vmatprep.subr.mxu0 0.0
        %1306 = vmatpush2.msra.mxu0 0.0
        %1307 = vmatprep.subr.mxu0 0.0
        %1308 = vmatpush2.msra.mxu0 0.0
        %1309 = vmatprep.subr.mxu0 0.0
        %1310 = vmatpush2.msra.mxu0 0.0
        %1311 = vmatprep.subr.mxu0 0.0
        %1312 = vmatpush2.msra.mxu0 0.0
        %1313 = vmatprep.subr.mxu0 0.0
        %1314 = vmatpush2.msra.mxu0 0.0
        %1315 = vmatprep.subr.mxu0 0.0
        %1316 = vmatpush2.msra.mxu0 0.0
        %1317 = vmatprep.subr.mxu0 0.0
        %1318 = vmatpush2.msra.mxu0 0.0
        %1319 = vmatprep.subr.mxu0 0.0
        %1320 = vmatpush2.msra.mxu0 0.0
        %1321 = vmatprep.subr.mxu0 0.0
        %1322 = vmatpush2.msra.mxu0 0.0
        %1323 = vmatprep.subr.mxu0 0.0
        %1324 = vmatpush2.msra.mxu0 0.0
        %1325 = vmatprep.subr.mxu0 0.0
        %1326 = vmatpush2.msra.mxu0 0.0
        %1327 = vmatprep.mubr.f32.mxu0 0.0
        %1328 = vmatmul.mubr.f32.gmra.mxu0 %v381
        %v1329 = vpop.f32.mrf.mxu0
        %v1330 = vadd.f32 %v1261, %v1329
        %v1331 = vpop.f32.mrf.mxu0
        %1332 = vmatprep.mubr.f32.mxu0 0.0
        %1333 = vmatmul.mubr.f32.gmra.mxu0 %v384
        %v1334 = vpop.f32.mrf.mxu0
        %v1335 = vadd.f32 %v1261, %v1334
        %v1336 = vpop.f32.mrf.mxu0
        %1337 = vmatprep.mubr.f32.mxu0 0.0
        %1338 = vmatmul.mubr.f32.gmra.mxu0 %v387
        %v1339 = vpop.f32.mrf.mxu0
        %v1340 = vadd.f32 %v1261, %v1339
        %v1341 = vpop.f32.mrf.mxu0
        %1342 = vmatprep.mubr.f32.mxu0 0.0
        %1343 = vmatmul.mubr.f32.gmra.mxu0 %v390
        %v1344 = vpop.f32.mrf.mxu0
        %v1345 = vadd.f32 %v1261, %v1344
        %v1346 = vpop.f32.mrf.mxu0
        %1347 = vdwg.mxu0
        %s1348 = scalar_lea.vmem %s9, 16
        %v1349 = vld [vmem:[%s1348] sm:$0xff]
        %v1350 = vld [vmem:[%s1348 + $0x8] sm:$0xff]
        %v1352 = vsel %vm671, %v1134, 0
        %v1355 = vsel %vm671, %v1139, 0
        %v1358 = vsel %vm671, %v1232, 0
        %v1361 = vsel %vm671, %v1237, 0
        %1363 = vmatprep.subr.mxu0 0.0
        %1364 = vmatpush1.xpose.msra.mxu0 0.0
        %1365 = vmatprep.subr.mxu0 0.0
        %1366 = vmatpush1.xpose.msra.mxu0 0.0
        %1367 = vmatprep.subr.mxu0 0.0
        %1368 = vmatpush1.xpose.msra.mxu0 0.0
        %1369 = vmatprep.subr.mxu0 0.0
        %1370 = vmatpush1.xpose.msra.mxu0 0.0
        %1371 = vmatprep.subr.mxu0 0.0
        %1372 = vmatpush1.xpose.msra.mxu0 0.0
        %1373 = vmatprep.subr.mxu0 0.0
        %1374 = vmatpush1.xpose.msra.mxu0 0.0
        %1375 = vmatprep.subr.mxu0 0.0
        %1376 = vmatpush1.xpose.msra.mxu0 0.0
        %1377 = vmatprep.subr.mxu0 0.0
        %1378 = vmatpush1.xpose.msra.mxu0 0.0
        %1379 = vmatprep.subr.mxu0 0.0
        %1380 = vmatpush1.xpose.msra.mxu0 0.0
        %1381 = vmatprep.subr.mxu0 0.0
        %1382 = vmatpush1.xpose.msra.mxu0 0.0
        %1383 = vmatprep.subr.mxu0 0.0
        %1384 = vmatpush1.xpose.msra.mxu0 0.0
        %1385 = vmatprep.subr.mxu0 0.0
        %1386 = vmatpush1.xpose.msra.mxu0 0.0
        %1387 = vmatprep.subr.mxu0 0.0
        %1388 = vmatpush1.xpose.msra.mxu0 0.0
        %1389 = vmatprep.subr.mxu0 0.0
        %1390 = vmatpush1.xpose.msra.mxu0 0.0
        %1391 = vmatprep.subr.mxu0 0.0
        %1392 = vmatpush1.xpose.msra.mxu0 %v1361
        %1393 = vmatprep.subr.mxu0 0.0
        %1394 = vmatpush1.xpose.msra.mxu0 %v1358
        %1395 = vmatprep.subr.mxu0 0.0
        %1396 = vmatpush2.xpose.msra.mxu0 0.0
        %1397 = vmatprep.subr.mxu0 0.0
        %1398 = vmatpush2.xpose.msra.mxu0 0.0
        %1399 = vmatprep.subr.mxu0 0.0
        %1400 = vmatpush2.xpose.msra.mxu0 0.0
        %1401 = vmatprep.subr.mxu0 0.0
        %1402 = vmatpush2.xpose.msra.mxu0 0.0
        %1403 = vmatprep.subr.mxu0 0.0
        %1404 = vmatpush2.xpose.msra.mxu0 0.0
        %1405 = vmatprep.subr.mxu0 0.0
        %1406 = vmatpush2.xpose.msra.mxu0 0.0
        %1407 = vmatprep.subr.mxu0 0.0
        %1408 = vmatpush2.xpose.msra.mxu0 0.0
        %1409 = vmatprep.subr.mxu0 0.0
        %1410 = vmatpush2.xpose.msra.mxu0 0.0
        %1411 = vmatprep.subr.mxu0 0.0
        %1412 = vmatpush2.xpose.msra.mxu0 0.0
        %1413 = vmatprep.subr.mxu0 0.0
        %1414 = vmatpush2.xpose.msra.mxu0 0.0
        %1415 = vmatprep.subr.mxu0 0.0
        %1416 = vmatpush2.xpose.msra.mxu0 0.0
        %1417 = vmatprep.subr.mxu0 0.0
        %1418 = vmatpush2.xpose.msra.mxu0 0.0
        %1419 = vmatprep.subr.mxu0 0.0
        %1420 = vmatpush2.xpose.msra.mxu0 0.0
        %1421 = vmatprep.subr.mxu0 0.0
        %1422 = vmatpush2.xpose.msra.mxu0 0.0
        %1423 = vmatprep.subr.mxu0 0.0
        %1424 = vmatpush2.xpose.msra.mxu0 0.0
        %1425 = vmatprep.subr.mxu0 0.0
        %1426 = vmatpush2.xpose.msra.mxu0 0.0
        %1427 = vmatprep.mubr.f32.mxu0 0.0
        %1428 = vmatmul.mubr.f32.gmra.mxu0 %v1352
        %v1429 = vpop.f32.mrf.mxu0
        %v1430 = vadd.f32 %v1349, %v1429
        %v1431 = vpop.f32.mrf.mxu0
        %1432 = vmatprep.mubr.f32.mxu0 0.0
        %1433 = vmatmul.mubr.f32.gmra.mxu0 %v1355
        %v1434 = vpop.f32.mrf.mxu0
        %v1435 = vadd.f32 %v1350, %v1434
        %v1436 = vpop.f32.mrf.mxu0
        %1437 = vdwg.mxu0
        %v1439 = vsel %vm671, %v1144, 0
        %v1442 = vsel %vm671, %v1149, 0
        %v1445 = vsel %vm671, %v1242, 0
        %v1448 = vsel %vm671, %v1247, 0
        %1450 = vmatprep.subr.mxu0 0.0
        %1451 = vmatpush1.xpose.msra.mxu0 0.0
        %1452 = vmatprep.subr.mxu0 0.0
        %1453 = vmatpush1.xpose.msra.mxu0 0.0
        %1454 = vmatprep.subr.mxu0 0.0
        %1455 = vmatpush1.xpose.msra.mxu0 0.0
        %1456 = vmatprep.subr.mxu0 0.0
        %1457 = vmatpush1.xpose.msra.mxu0 0.0
        %1458 = vmatprep.subr.mxu0 0.0
        %1459 = vmatpush1.xpose.msra.mxu0 0.0
        %1460 = vmatprep.subr.mxu0 0.0
        %1461 = vmatpush1.xpose.msra.mxu0 0.0
        %1462 = vmatprep.subr.mxu0 0.0
        %1463 = vmatpush1.xpose.msra.mxu0 0.0
        %1464 = vmatprep.subr.mxu0 0.0
        %1465 = vmatpush1.xpose.msra.mxu0 0.0
        %1466 = vmatprep.subr.mxu0 0.0
        %1467 = vmatpush1.xpose.msra.mxu0 0.0
        %1468 = vmatprep.subr.mxu0 0.0
        %1469 = vmatpush1.xpose.msra.mxu0 0.0
        %1470 = vmatprep.subr.mxu0 0.0
        %1471 = vmatpush1.xpose.msra.mxu0 0.0
        %1472 = vmatprep.subr.mxu0 0.0
        %1473 = vmatpush1.xpose.msra.mxu0 0.0
        %1474 = vmatprep.subr.mxu0 0.0
        %1475 = vmatpush1.xpose.msra.mxu0 0.0
        %1476 = vmatprep.subr.mxu0 0.0
        %1477 = vmatpush1.xpose.msra.mxu0 0.0
        %1478 = vmatprep.subr.mxu0 0.0
        %1479 = vmatpush1.xpose.msra.mxu0 %v1448
        %1480 = vmatprep.subr.mxu0 0.0
        %1481 = vmatpush1.xpose.msra.mxu0 %v1445
        %1482 = vmatprep.subr.mxu0 0.0
        %1483 = vmatpush2.xpose.msra.mxu0 0.0
        %1484 = vmatprep.subr.mxu0 0.0
        %1485 = vmatpush2.xpose.msra.mxu0 0.0
        %1486 = vmatprep.subr.mxu0 0.0
        %1487 = vmatpush2.xpose.msra.mxu0 0.0
        %1488 = vmatprep.subr.mxu0 0.0
        %1489 = vmatpush2.xpose.msra.mxu0 0.0
        %1490 = vmatprep.subr.mxu0 0.0
        %1491 = vmatpush2.xpose.msra.mxu0 0.0
        %1492 = vmatprep.subr.mxu0 0.0
        %1493 = vmatpush2.xpose.msra.mxu0 0.0
        %1494 = vmatprep.subr.mxu0 0.0
        %1495 = vmatpush2.xpose.msra.mxu0 0.0
        %1496 = vmatprep.subr.mxu0 0.0
        %1497 = vmatpush2.xpose.msra.mxu0 0.0
        %1498 = vmatprep.subr.mxu0 0.0
        %1499 = vmatpush2.xpose.msra.mxu0 0.0
        %1500 = vmatprep.subr.mxu0 0.0
        %1501 = vmatpush2.xpose.msra.mxu0 0.0
        %1502 = vmatprep.subr.mxu0 0.0
        %1503 = vmatpush2.xpose.msra.mxu0 0.0
        %1504 = vmatprep.subr.mxu0 0.0
        %1505 = vmatpush2.xpose.msra.mxu0 0.0
        %1506 = vmatprep.subr.mxu0 0.0
        %1507 = vmatpush2.xpose.msra.mxu0 0.0
        %1508 = vmatprep.subr.mxu0 0.0
        %1509 = vmatpush2.xpose.msra.mxu0 0.0
        %1510 = vmatprep.subr.mxu0 0.0
        %1511 = vmatpush2.xpose.msra.mxu0 0.0
        %1512 = vmatprep.subr.mxu0 0.0
        %1513 = vmatpush2.xpose.msra.mxu0 0.0
        %1514 = vmatprep.mubr.f32.mxu0 0.0
        %1515 = vmatmul.mubr.f32.gmra.mxu0 %v1439
        %v1516 = vpop.f32.mrf.mxu0
        %v1517 = vadd.f32 %v1349, %v1516
        %v1518 = vpop.f32.mrf.mxu0
        %1519 = vmatprep.mubr.f32.mxu0 0.0
        %1520 = vmatmul.mubr.f32.gmra.mxu0 %v1442
        %v1521 = vpop.f32.mrf.mxu0
        %v1522 = vadd.f32 %v1350, %v1521
        %v1523 = vpop.f32.mrf.mxu0
        %1524 = vdwg.mxu0
        %v1525 = vsel %vm846, %v1430, -inf
        %1526 = vmax.xlane.f32.xlu0 %v1525
        %v1527 = vpop.xlane.xlu0 %1526
        %v1528 = vsel %vm846, %v1435, -inf
        %1529 = vmax.xlane.f32.xlu0 %v1528
        %v1530 = vpop.xlane.xlu0 %1529
        %v1531 = vsel %vm846, %v1517, -inf
        %1532 = vmax.xlane.f32.xlu0 %v1531
        %v1533 = vpop.xlane.xlu0 %1532
        %v1534 = vsel %vm846, %v1522, -inf
        %1535 = vmax.xlane.f32.xlu0 %v1534
        %v1536 = vpop.xlane.xlu0 %1535
        %v1537 = vsub.f32 %v1430, %v1527
        %v1538 = vsub.f32 %v1435, %v1530
        %v1539 = vsub.f32 %v1517, %v1533
        %v1540 = vsub.f32 %v1522, %v1536
        %v1541 = vmul.f32 %v1537, 1.442695
        %v1542 = vpow.pop %v1541
        %v1543 = vmul.f32 %v1538, 1.442695
        %v1544 = vpow.pop %v1543
        %v1545 = vmul.f32 %v1539, 1.442695
        %v1546 = vpow.pop %v1545
        %v1547 = vmul.f32 %v1540, 1.442695
        %v1548 = vpow.pop %v1547
        %v1549 = vsel %vm846, %v1542, 0.0
        %1550 = vadd.xlane.f32.xlu0 %v1549
        %v1551 = vpop.xlane.xlu0 %1550
        %v1552 = vsel %vm846, %v1544, 0.0
        %1553 = vadd.xlane.f32.xlu0 %v1552
        %v1554 = vpop.xlane.xlu0 %1553
        %v1555 = vsel %vm846, %v1546, 0.0
        %1556 = vadd.xlane.f32.xlu0 %v1555
        %v1557 = vpop.xlane.xlu0 %1556
        %v1558 = vsel %vm846, %v1548, 0.0
        %1559 = vadd.xlane.f32.xlu0 %v1558
        %v1560 = vpop.xlane.xlu0 %1559
        %v1561 = vrcp.pop %v1551
        %v1562 = vrcp.pop %v1554
        %v1563 = vrcp.pop %v1557
        %v1564 = vrcp.pop %v1560
        %v1565 = vmul.f32 %v1542, %v1561
        %v1566 = vmul.f32 %v1544, %v1562
        %v1567 = vmul.f32 %v1546, %v1563
        %v1568 = vmul.f32 %v1548, %v1564
        %v1570 = vsel %vm846, %v1565, 0
        %v1573 = vsel %vm846, %v1566, 0
        %1575 = vmatprep.subr.mxu0 0.0
        %1576 = vmatpush1.msra.mxu0 0.0
        %1577 = vmatprep.subr.mxu0 0.0
        %1578 = vmatpush1.msra.mxu0 0.0
        %1579 = vmatprep.subr.mxu0 0.0
        %1580 = vmatpush1.msra.mxu0 0.0
        %1581 = vmatprep.subr.mxu0 0.0
        %1582 = vmatpush1.msra.mxu0 0.0
        %1583 = vmatprep.subr.mxu0 0.0
        %1584 = vmatpush1.msra.mxu0 0.0
        %1585 = vmatprep.subr.mxu0 0.0
        %1586 = vmatpush1.msra.mxu0 0.0
        %1587 = vmatprep.subr.mxu0 0.0
        %1588 = vmatpush1.msra.mxu0 0.0
        %1589 = vmatprep.subr.mxu0 0.0
        %1590 = vmatpush1.msra.mxu0 0.0
        %1591 = vmatprep.subr.mxu0 0.0
        %1592 = vmatpush1.msra.mxu0 0.0
        %1593 = vmatprep.subr.mxu0 0.0
        %1594 = vmatpush1.msra.mxu0 0.0
        %1595 = vmatprep.subr.mxu0 0.0
        %1596 = vmatpush1.msra.mxu0 0.0
        %1597 = vmatprep.subr.mxu0 0.0
        %1598 = vmatpush1.msra.mxu0 0.0
        %1599 = vmatprep.subr.mxu0 0.0
        %1600 = vmatpush1.msra.mxu0 0.0
        %1601 = vmatprep.subr.mxu0 0.0
        %1602 = vmatpush1.msra.mxu0 0.0
        %1603 = vmatprep.subr.mxu0 0.0
        %1604 = vmatpush1.msra.mxu0 %v1335
        %1605 = vmatprep.subr.mxu0 0.0
        %1606 = vmatpush1.msra.mxu0 %v1330
        %1607 = vmatprep.subr.mxu0 0.0
        %1608 = vmatpush2.msra.mxu0 0.0
        %1609 = vmatprep.subr.mxu0 0.0
        %1610 = vmatpush2.msra.mxu0 0.0
        %1611 = vmatprep.subr.mxu0 0.0
        %1612 = vmatpush2.msra.mxu0 0.0
        %1613 = vmatprep.subr.mxu0 0.0
        %1614 = vmatpush2.msra.mxu0 0.0
        %1615 = vmatprep.subr.mxu0 0.0
        %1616 = vmatpush2.msra.mxu0 0.0
        %1617 = vmatprep.subr.mxu0 0.0
        %1618 = vmatpush2.msra.mxu0 0.0
        %1619 = vmatprep.subr.mxu0 0.0
        %1620 = vmatpush2.msra.mxu0 0.0
        %1621 = vmatprep.subr.mxu0 0.0
        %1622 = vmatpush2.msra.mxu0 0.0
        %1623 = vmatprep.subr.mxu0 0.0
        %1624 = vmatpush2.msra.mxu0 0.0
        %1625 = vmatprep.subr.mxu0 0.0
        %1626 = vmatpush2.msra.mxu0 0.0
        %1627 = vmatprep.subr.mxu0 0.0
        %1628 = vmatpush2.msra.mxu0 0.0
        %1629 = vmatprep.subr.mxu0 0.0
        %1630 = vmatpush2.msra.mxu0 0.0
        %1631 = vmatprep.subr.mxu0 0.0
        %1632 = vmatpush2.msra.mxu0 0.0
        %1633 = vmatprep.subr.mxu0 0.0
        %1634 = vmatpush2.msra.mxu0 0.0
        %1635 = vmatprep.subr.mxu0 0.0
        %1636 = vmatpush2.msra.mxu0 0.0
        %1637 = vmatprep.subr.mxu0 0.0
        %1638 = vmatpush2.msra.mxu0 0.0
        %1639 = vmatprep.mubr.f32.mxu0 0.0
        %1640 = vmatmul.mubr.f32.gmra.mxu0 %v1570
        %v1641 = vpop.f32.mrf.mxu0
        %v1642 = vadd.f32 0.0, %v1641
        %v1643 = vpop.f32.mrf.mxu0
        %1644 = vmatprep.mubr.f32.mxu0 0.0
        %1645 = vmatmul.mubr.f32.gmra.mxu0 %v1573
        %v1646 = vpop.f32.mrf.mxu0
        %v1647 = vadd.f32 0.0, %v1646
        %v1648 = vpop.f32.mrf.mxu0
        %1649 = vdwg.mxu0
        %v1651 = vsel %vm846, %v1567, 0
        %v1654 = vsel %vm846, %v1568, 0
        %1656 = vmatprep.subr.mxu0 0.0
        %1657 = vmatpush1.msra.mxu0 0.0
        %1658 = vmatprep.subr.mxu0 0.0
        %1659 = vmatpush1.msra.mxu0 0.0
        %1660 = vmatprep.subr.mxu0 0.0
        %1661 = vmatpush1.msra.mxu0 0.0
        %1662 = vmatprep.subr.mxu0 0.0
        %1663 = vmatpush1.msra.mxu0 0.0
        %1664 = vmatprep.subr.mxu0 0.0
        %1665 = vmatpush1.msra.mxu0 0.0
        %1666 = vmatprep.subr.mxu0 0.0
        %1667 = vmatpush1.msra.mxu0 0.0
        %1668 = vmatprep.subr.mxu0 0.0
        %1669 = vmatpush1.msra.mxu0 0.0
        %1670 = vmatprep.subr.mxu0 0.0
        %1671 = vmatpush1.msra.mxu0 0.0
        %1672 = vmatprep.subr.mxu0 0.0
        %1673 = vmatpush1.msra.mxu0 0.0
        %1674 = vmatprep.subr.mxu0 0.0
        %1675 = vmatpush1.msra.mxu0 0.0
        %1676 = vmatprep.subr.mxu0 0.0
        %1677 = vmatpush1.msra.mxu0 0.0
        %1678 = vmatprep.subr.mxu0 0.0
        %1679 = vmatpush1.msra.mxu0 0.0
        %1680 = vmatprep.subr.mxu0 0.0
        %1681 = vmatpush1.msra.mxu0 0.0
        %1682 = vmatprep.subr.mxu0 0.0
        %1683 = vmatpush1.msra.mxu0 0.0
        %1684 = vmatprep.subr.mxu0 0.0
        %1685 = vmatpush1.msra.mxu0 %v1345
        %1686 = vmatprep.subr.mxu0 0.0
        %1687 = vmatpush1.msra.mxu0 %v1340
        %1688 = vmatprep.subr.mxu0 0.0
        %1689 = vmatpush2.msra.mxu0 0.0
        %1690 = vmatprep.subr.mxu0 0.0
        %1691 = vmatpush2.msra.mxu0 0.0
        %1692 = vmatprep.subr.mxu0 0.0
        %1693 = vmatpush2.msra.mxu0 0.0
        %1694 = vmatprep.subr.mxu0 0.0
        %1695 = vmatpush2.msra.mxu0 0.0
        %1696 = vmatprep.subr.mxu0 0.0
        %1697 = vmatpush2.msra.mxu0 0.0
        %1698 = vmatprep.subr.mxu0 0.0
        %1699 = vmatpush2.msra.mxu0 0.0
        %1700 = vmatprep.subr.mxu0 0.0
        %1701 = vmatpush2.msra.mxu0 0.0
        %1702 = vmatprep.subr.mxu0 0.0
        %1703 = vmatpush2.msra.mxu0 0.0
        %1704 = vmatprep.subr.mxu0 0.0
        %1705 = vmatpush2.msra.mxu0 0.0
        %1706 = vmatprep.subr.mxu0 0.0
        %1707 = vmatpush2.msra.mxu0 0.0
        %1708 = vmatprep.subr.mxu0 0.0
        %1709 = vmatpush2.msra.mxu0 0.0
        %1710 = vmatprep.subr.mxu0 0.0
        %1711 = vmatpush2.msra.mxu0 0.0
        %1712 = vmatprep.subr.mxu0 0.0
        %1713 = vmatpush2.msra.mxu0 0.0
        %1714 = vmatprep.subr.mxu0 0.0
        %1715 = vmatpush2.msra.mxu0 0.0
        %1716 = vmatprep.subr.mxu0 0.0
        %1717 = vmatpush2.msra.mxu0 0.0
        %1718 = vmatprep.subr.mxu0 0.0
        %1719 = vmatpush2.msra.mxu0 0.0
        %1720 = vmatprep.mubr.f32.mxu0 0.0
        %1721 = vmatmul.mubr.f32.gmra.mxu0 %v1651
        %v1722 = vpop.f32.mrf.mxu0
        %v1723 = vadd.f32 0.0, %v1722
        %v1724 = vpop.f32.mrf.mxu0
        %1725 = vmatprep.mubr.f32.mxu0 0.0
        %1726 = vmatmul.mubr.f32.gmra.mxu0 %v1654
        %v1727 = vpop.f32.mrf.mxu0
        %v1728 = vadd.f32 0.0, %v1727
        %v1729 = vpop.f32.mrf.mxu0
        %1730 = vdwg.mxu0
        %s1731 = scalar_lea.vmem %s4, 8
        %v1732 = vld [vmem:[%s1731] sm:$0xff]
        %v1734 = vsel %vm671, %v1642, 0
        %v1737 = vsel %vm671, %v1647, 0
        %v1740 = vsel %vm671, %v1723, 0
        %v1743 = vsel %vm671, %v1728, 0
        %1745 = vmatprep.subr.mxu0 0.0
        %1746 = vmatpush1.msra.mxu0 0.0
        %1747 = vmatprep.subr.mxu0 0.0
        %1748 = vmatpush1.msra.mxu0 0.0
        %1749 = vmatprep.subr.mxu0 0.0
        %1750 = vmatpush1.msra.mxu0 0.0
        %1751 = vmatprep.subr.mxu0 0.0
        %1752 = vmatpush1.msra.mxu0 0.0
        %1753 = vmatprep.subr.mxu0 0.0
        %1754 = vmatpush1.msra.mxu0 0.0
        %1755 = vmatprep.subr.mxu0 0.0
        %1756 = vmatpush1.msra.mxu0 0.0
        %1757 = vmatprep.subr.mxu0 0.0
        %1758 = vmatpush1.msra.mxu0 0.0
        %1759 = vmatprep.subr.mxu0 0.0
        %1760 = vmatpush1.msra.mxu0 0.0
        %1761 = vmatprep.subr.mxu0 0.0
        %1762 = vmatpush1.msra.mxu0 0.0
        %1763 = vmatprep.subr.mxu0 0.0
        %1764 = vmatpush1.msra.mxu0 0.0
        %1765 = vmatprep.subr.mxu0 0.0
        %1766 = vmatpush1.msra.mxu0 0.0
        %1767 = vmatprep.subr.mxu0 0.0
        %1768 = vmatpush1.msra.mxu0 0.0
        %1769 = vmatprep.subr.mxu0 0.0
        %1770 = vmatpush1.msra.mxu0 0.0
        %1771 = vmatprep.subr.mxu0 0.0
        %1772 = vmatpush1.msra.mxu0 0.0
        %1773 = vmatprep.subr.mxu0 0.0
        %1774 = vmatpush1.msra.mxu0 0.0
        %1775 = vmatprep.subr.mxu0 0.0
        %1776 = vmatpush1.msra.mxu0 %v1732
        %1777 = vmatprep.subr.mxu0 0.0
        %1778 = vmatpush2.msra.mxu0 0.0
        %1779 = vmatprep.subr.mxu0 0.0
        %1780 = vmatpush2.msra.mxu0 0.0
        %1781 = vmatprep.subr.mxu0 0.0
        %1782 = vmatpush2.msra.mxu0 0.0
        %1783 = vmatprep.subr.mxu0 0.0
        %1784 = vmatpush2.msra.mxu0 0.0
        %1785 = vmatprep.subr.mxu0 0.0
        %1786 = vmatpush2.msra.mxu0 0.0
        %1787 = vmatprep.subr.mxu0 0.0
        %1788 = vmatpush2.msra.mxu0 0.0
        %1789 = vmatprep.subr.mxu0 0.0
        %1790 = vmatpush2.msra.mxu0 0.0
        %1791 = vmatprep.subr.mxu0 0.0
        %1792 = vmatpush2.msra.mxu0 0.0
        %1793 = vmatprep.subr.mxu0 0.0
        %1794 = vmatpush2.msra.mxu0 0.0
        %1795 = vmatprep.subr.mxu0 0.0
        %1796 = vmatpush2.msra.mxu0 0.0
        %1797 = vmatprep.subr.mxu0 0.0
        %1798 = vmatpush2.msra.mxu0 0.0
        %1799 = vmatprep.subr.mxu0 0.0
        %1800 = vmatpush2.msra.mxu0 0.0
        %1801 = vmatprep.subr.mxu0 0.0
        %1802 = vmatpush2.msra.mxu0 0.0
        %1803 = vmatprep.subr.mxu0 0.0
        %1804 = vmatpush2.msra.mxu0 0.0
        %1805 = vmatprep.subr.mxu0 0.0
        %1806 = vmatpush2.msra.mxu0 0.0
        %1807 = vmatprep.subr.mxu0 0.0
        %1808 = vmatpush2.msra.mxu0 0.0
        %1809 = vmatprep.mubr.f32.mxu0 0.0
        %1810 = vmatmul.mubr.f32.gmra.mxu0 %v1734
        %v1811 = vpop.f32.mrf.mxu0
        %v1812 = vadd.f32 0.0, %v1811
        %v1813 = vpop.f32.mrf.mxu0
        %1814 = vmatprep.mubr.f32.mxu0 0.0
        %1815 = vmatmul.mubr.f32.gmra.mxu0 %v1737
        %v1816 = vpop.f32.mrf.mxu0
        %v1817 = vadd.f32 0.0, %v1816
        %v1818 = vpop.f32.mrf.mxu0
        %1819 = vmatprep.mubr.f32.mxu0 0.0
        %1820 = vmatmul.mubr.f32.gmra.mxu0 %v1740
        %v1821 = vpop.f32.mrf.mxu0
        %v1822 = vadd.f32 0.0, %v1821
        %v1823 = vpop.f32.mrf.mxu0
        %1824 = vmatprep.mubr.f32.mxu0 0.0
        %1825 = vmatmul.mubr.f32.gmra.mxu0 %v1743
        %v1826 = vpop.f32.mrf.mxu0
        %v1827 = vadd.f32 0.0, %v1826
        %v1828 = vpop.f32.mrf.mxu0
        %1829 = vdwg.mxu0
        %v1831 = vsel %vm671, %v964, 0
        %v1834 = vsel %vm671, %v969, 0
        %v1837 = vsel %vm671, %v1045, 0
        %v1840 = vsel %vm671, %v1050, 0
        %1842 = vmatprep.subr.mxu0 0.0
        %1843 = vmatpush1.msra.mxu0 0.0
        %1844 = vmatprep.subr.mxu0 0.0
        %1845 = vmatpush1.msra.mxu0 0.0
        %1846 = vmatprep.subr.mxu0 0.0
        %1847 = vmatpush1.msra.mxu0 0.0
        %1848 = vmatprep.subr.mxu0 0.0
        %1849 = vmatpush1.msra.mxu0 0.0
        %1850 = vmatprep.subr.mxu0 0.0
        %1851 = vmatpush1.msra.mxu0 0.0
        %1852 = vmatprep.subr.mxu0 0.0
        %1853 = vmatpush1.msra.mxu0 0.0
        %1854 = vmatprep.subr.mxu0 0.0
        %1855 = vmatpush1.msra.mxu0 0.0
        %1856 = vmatprep.subr.mxu0 0.0
        %1857 = vmatpush1.msra.mxu0 0.0
        %1858 = vmatprep.subr.mxu0 0.0
        %1859 = vmatpush1.msra.mxu0 0.0
        %1860 = vmatprep.subr.mxu0 0.0
        %1861 = vmatpush1.msra.mxu0 0.0
        %1862 = vmatprep.subr.mxu0 0.0
        %1863 = vmatpush1.msra.mxu0 0.0
        %1864 = vmatprep.subr.mxu0 0.0
        %1865 = vmatpush1.msra.mxu0 0.0
        %1866 = vmatprep.subr.mxu0 0.0
        %1867 = vmatpush1.msra.mxu0 0.0
        %1868 = vmatprep.subr.mxu0 0.0
        %1869 = vmatpush1.msra.mxu0 0.0
        %1870 = vmatprep.subr.mxu0 0.0
        %1871 = vmatpush1.msra.mxu0 0.0
        %1872 = vmatprep.subr.mxu0 0.0
        %1873 = vmatpush1.msra.mxu0 %v1053
        %1874 = vmatprep.subr.mxu0 0.0
        %1875 = vmatpush2.msra.mxu0 0.0
        %1876 = vmatprep.subr.mxu0 0.0
        %1877 = vmatpush2.msra.mxu0 0.0
        %1878 = vmatprep.subr.mxu0 0.0
        %1879 = vmatpush2.msra.mxu0 0.0
        %1880 = vmatprep.subr.mxu0 0.0
        %1881 = vmatpush2.msra.mxu0 0.0
        %1882 = vmatprep.subr.mxu0 0.0
        %1883 = vmatpush2.msra.mxu0 0.0
        %1884 = vmatprep.subr.mxu0 0.0
        %1885 = vmatpush2.msra.mxu0 0.0
        %1886 = vmatprep.subr.mxu0 0.0
        %1887 = vmatpush2.msra.mxu0 0.0
        %1888 = vmatprep.subr.mxu0 0.0
        %1889 = vmatpush2.msra.mxu0 0.0
        %1890 = vmatprep.subr.mxu0 0.0
        %1891 = vmatpush2.msra.mxu0 0.0
        %1892 = vmatprep.subr.mxu0 0.0
        %1893 = vmatpush2.msra.mxu0 0.0
        %1894 = vmatprep.subr.mxu0 0.0
        %1895 = vmatpush2.msra.mxu0 0.0
        %1896 = vmatprep.subr.mxu0 0.0
        %1897 = vmatpush2.msra.mxu0 0.0
        %1898 = vmatprep.subr.mxu0 0.0
        %1899 = vmatpush2.msra.mxu0 0.0
        %1900 = vmatprep.subr.mxu0 0.0
        %1901 = vmatpush2.msra.mxu0 0.0
        %1902 = vmatprep.subr.mxu0 0.0
        %1903 = vmatpush2.msra.mxu0 0.0
        %1904 = vmatprep.subr.mxu0 0.0
        %1905 = vmatpush2.msra.mxu0 0.0
        %1906 = vmatprep.mubr.f32.mxu0 0.0
        %1907 = vmatmul.mubr.f32.gmra.mxu0 %v1831
        %v1908 = vpop.f32.mrf.mxu0
        %v1909 = vadd.f32 %v1812, %v1908
        %v1910 = vpop.f32.mrf.mxu0
        %1911 = vmatprep.mubr.f32.mxu0 0.0
        %1912 = vmatmul.mubr.f32.gmra.mxu0 %v1834
        %v1913 = vpop.f32.mrf.mxu0
        %v1914 = vadd.f32 %v1817, %v1913
        %v1915 = vpop.f32.mrf.mxu0
        %1916 = vmatprep.mubr.f32.mxu0 0.0
        %1917 = vmatmul.mubr.f32.gmra.mxu0 %v1837
        %v1918 = vpop.f32.mrf.mxu0
        %v1919 = vadd.f32 %v1822, %v1918
        %v1920 = vpop.f32.mrf.mxu0
        %1921 = vmatprep.mubr.f32.mxu0 0.0
        %1922 = vmatmul.mubr.f32.gmra.mxu0 %v1840
        %v1923 = vpop.f32.mrf.mxu0
        %v1924 = vadd.f32 %v1827, %v1923
        %v1925 = vpop.f32.mrf.mxu0
        %1926 = vdwg.mxu0
        %s1927 = scalar_lea.vmem %s1, 64
        %v1928 = vld [vmem:[%s1927] sm:$0xff]
        %v1929 = vld [vmem:[%s1927 + $0x8] sm:$0xff]
        %v1930 = vld [vmem:[%s1927 + $0x10] sm:$0xff]
        %v1931 = vld [vmem:[%s1927 + $0x18] sm:$0xff]
        %s1932 = scalar_lea.vmem %s5, 2
        %v1933 = vld [vmem:[%s1932] sm:$0x1]
        %v1935 = vlaneseq
        %v1936 = vshrl.u32 %v1935, 7
        %v1937 = vsub.s32 0, %v1936
        %v1938 = vrot.slane %v1933, %v1937
        %1940 = vmatprep.subr.mxu0 0.0
        %1941 = vmatpush1.msra.mxu0 0.0
        %1942 = vmatprep.subr.mxu0 0.0
        %1943 = vmatpush1.msra.mxu0 0.0
        %1944 = vmatprep.subr.mxu0 0.0
        %1945 = vmatpush1.msra.mxu0 0.0
        %1946 = vmatprep.subr.mxu0 0.0
        %1947 = vmatpush1.msra.mxu0 0.0
        %1948 = vmatprep.subr.mxu0 0.0
        %1949 = vmatpush1.msra.mxu0 0.0
        %1950 = vmatprep.subr.mxu0 0.0
        %1951 = vmatpush1.msra.mxu0 0.0
        %1952 = vmatprep.subr.mxu0 0.0
        %1953 = vmatpush1.msra.mxu0 0.0
        %1954 = vmatprep.subr.mxu0 0.0
        %1955 = vmatpush1.msra.mxu0 0.0
        %1956 = vmatprep.subr.mxu0 0.0
        %1957 = vmatpush1.msra.mxu0 0.0
        %1958 = vmatprep.subr.mxu0 0.0
        %1959 = vmatpush1.msra.mxu0 0.0
        %1960 = vmatprep.subr.mxu0 0.0
        %1961 = vmatpush1.msra.mxu0 0.0
        %1962 = vmatprep.subr.mxu0 0.0
        %1963 = vmatpush1.msra.mxu0 0.0
        %1964 = vmatprep.subr.mxu0 0.0
        %1965 = vmatpush1.msra.mxu0 %v1931
        %1966 = vmatprep.subr.mxu0 0.0
        %1967 = vmatpush1.msra.mxu0 %v1930
        %1968 = vmatprep.subr.mxu0 0.0
        %1969 = vmatpush1.msra.mxu0 %v1929
        %1970 = vmatprep.subr.mxu0 0.0
        %1971 = vmatpush1.msra.mxu0 %v1928
        %1972 = vmatprep.subr.mxu0 0.0
        %1973 = vmatpush2.msra.mxu0 0.0
        %1974 = vmatprep.subr.mxu0 0.0
        %1975 = vmatpush2.msra.mxu0 0.0
        %1976 = vmatprep.subr.mxu0 0.0
        %1977 = vmatpush2.msra.mxu0 0.0
        %1978 = vmatprep.subr.mxu0 0.0
        %1979 = vmatpush2.msra.mxu0 0.0
        %1980 = vmatprep.subr.mxu0 0.0
        %1981 = vmatpush2.msra.mxu0 0.0
        %1982 = vmatprep.subr.mxu0 0.0
        %1983 = vmatpush2.msra.mxu0 0.0
        %1984 = vmatprep.subr.mxu0 0.0
        %1985 = vmatpush2.msra.mxu0 0.0
        %1986 = vmatprep.subr.mxu0 0.0
        %1987 = vmatpush2.msra.mxu0 0.0
        %1988 = vmatprep.subr.mxu0 0.0
        %1989 = vmatpush2.msra.mxu0 0.0
        %1990 = vmatprep.subr.mxu0 0.0
        %1991 = vmatpush2.msra.mxu0 0.0
        %1992 = vmatprep.subr.mxu0 0.0
        %1993 = vmatpush2.msra.mxu0 0.0
        %1994 = vmatprep.subr.mxu0 0.0
        %1995 = vmatpush2.msra.mxu0 0.0
        %1996 = vmatprep.subr.mxu0 0.0
        %1997 = vmatpush2.msra.mxu0 0.0
        %1998 = vmatprep.subr.mxu0 0.0
        %1999 = vmatpush2.msra.mxu0 0.0
        %2000 = vmatprep.subr.mxu0 0.0
        %2001 = vmatpush2.msra.mxu0 0.0
        %2002 = vmatprep.subr.mxu0 0.0
        %2003 = vmatpush2.msra.mxu0 0.0
        %2004 = vmatprep.mubr.f32.mxu0 0.0
        %2005 = vmatmul.mubr.f32.gmra.mxu0 %v381
        %v2006 = vpop.f32.mrf.mxu0
        %v2007 = vadd.f32 %v1938, %v2006
        %v2008 = vpop.f32.mrf.mxu0
        %2009 = vmatprep.mubr.f32.mxu0 0.0
        %2010 = vmatmul.mubr.f32.gmra.mxu0 %v384
        %v2011 = vpop.f32.mrf.mxu0
        %v2012 = vadd.f32 %v1938, %v2011
        %v2013 = vpop.f32.mrf.mxu0
        %2014 = vmatprep.mubr.f32.mxu0 0.0
        %2015 = vmatmul.mubr.f32.gmra.mxu0 %v387
        %v2016 = vpop.f32.mrf.mxu0
        %v2017 = vadd.f32 %v1938, %v2016
        %v2018 = vpop.f32.mrf.mxu0
        %2019 = vmatprep.mubr.f32.mxu0 0.0
        %2020 = vmatmul.mubr.f32.gmra.mxu0 %v390
        %v2021 = vpop.f32.mrf.mxu0
        %v2022 = vadd.f32 %v1938, %v2021
        %v2023 = vpop.f32.mrf.mxu0
        %2024 = vdwg.mxu0
        %s2025 = scalar_lea.vmem %s2, 64
        %v2026 = vld [vmem:[%s2025] sm:$0xff]
        %v2027 = vld [vmem:[%s2025 + $0x8] sm:$0xff]
        %v2028 = vld [vmem:[%s2025 + $0x10] sm:$0xff]
        %v2029 = vld [vmem:[%s2025 + $0x18] sm:$0xff]
        %s2030 = scalar_lea.vmem %s6, 2
        %v2031 = vld [vmem:[%s2030] sm:$0x1]
        %v2033 = vlaneseq
        %v2034 = vshrl.u32 %v2033, 7
        %v2035 = vsub.s32 0, %v2034
        %v2036 = vrot.slane %v2031, %v2035
        %2038 = vmatprep.subr.mxu0 0.0
        %2039 = vmatpush1.msra.mxu0 0.0
        %2040 = vmatprep.subr.mxu0 0.0
        %2041 = vmatpush1.msra.mxu0 0.0
        %2042 = vmatprep.subr.mxu0 0.0
        %2043 = vmatpush1.msra.mxu0 0.0
        %2044 = vmatprep.subr.mxu0 0.0
        %2045 = vmatpush1.msra.mxu0 0.0
        %2046 = vmatprep.subr.mxu0 0.0
        %2047 = vmatpush1.msra.mxu0 0.0
        %2048 = vmatprep.subr.mxu0 0.0
        %2049 = vmatpush1.msra.mxu0 0.0
        %2050 = vmatprep.subr.mxu0 0.0
        %2051 = vmatpush1.msra.mxu0 0.0
        %2052 = vmatprep.subr.mxu0 0.0
        %2053 = vmatpush1.msra.mxu0 0.0
        %2054 = vmatprep.subr.mxu0 0.0
        %2055 = vmatpush1.msra.mxu0 0.0
        %2056 = vmatprep.subr.mxu0 0.0
        %2057 = vmatpush1.msra.mxu0 0.0
        %2058 = vmatprep.subr.mxu0 0.0
        %2059 = vmatpush1.msra.mxu0 0.0
        %2060 = vmatprep.subr.mxu0 0.0
        %2061 = vmatpush1.msra.mxu0 0.0
        %2062 = vmatprep.subr.mxu0 0.0
        %2063 = vmatpush1.msra.mxu0 %v2029
        %2064 = vmatprep.subr.mxu0 0.0
        %2065 = vmatpush1.msra.mxu0 %v2028
        %2066 = vmatprep.subr.mxu0 0.0
        %2067 = vmatpush1.msra.mxu0 %v2027
        %2068 = vmatprep.subr.mxu0 0.0
        %2069 = vmatpush1.msra.mxu0 %v2026
        %2070 = vmatprep.subr.mxu0 0.0
        %2071 = vmatpush2.msra.mxu0 0.0
        %2072 = vmatprep.subr.mxu0 0.0
        %2073 = vmatpush2.msra.mxu0 0.0
        %2074 = vmatprep.subr.mxu0 0.0
        %2075 = vmatpush2.msra.mxu0 0.0
        %2076 = vmatprep.subr.mxu0 0.0
        %2077 = vmatpush2.msra.mxu0 0.0
        %2078 = vmatprep.subr.mxu0 0.0
        %2079 = vmatpush2.msra.mxu0 0.0
        %2080 = vmatprep.subr.mxu0 0.0
        %2081 = vmatpush2.msra.mxu0 0.0
        %2082 = vmatprep.subr.mxu0 0.0
        %2083 = vmatpush2.msra.mxu0 0.0
        %2084 = vmatprep.subr.mxu0 0.0
        %2085 = vmatpush2.msra.mxu0 0.0
        %2086 = vmatprep.subr.mxu0 0.0
        %2087 = vmatpush2.msra.mxu0 0.0
        %2088 = vmatprep.subr.mxu0 0.0
        %2089 = vmatpush2.msra.mxu0 0.0
        %2090 = vmatprep.subr.mxu0 0.0
        %2091 = vmatpush2.msra.mxu0 0.0
        %2092 = vmatprep.subr.mxu0 0.0
        %2093 = vmatpush2.msra.mxu0 0.0
        %2094 = vmatprep.subr.mxu0 0.0
        %2095 = vmatpush2.msra.mxu0 0.0
        %2096 = vmatprep.subr.mxu0 0.0
        %2097 = vmatpush2.msra.mxu0 0.0
        %2098 = vmatprep.subr.mxu0 0.0
        %2099 = vmatpush2.msra.mxu0 0.0
        %2100 = vmatprep.subr.mxu0 0.0
        %2101 = vmatpush2.msra.mxu0 0.0
        %2102 = vmatprep.mubr.f32.mxu0 0.0
        %2103 = vmatmul.mubr.f32.gmra.mxu0 %v381
        %v2104 = vpop.f32.mrf.mxu0
        %v2105 = vadd.f32 %v2036, %v2104
        %v2106 = vpop.f32.mrf.mxu0
        %2107 = vmatprep.mubr.f32.mxu0 0.0
        %2108 = vmatmul.mubr.f32.gmra.mxu0 %v384
        %v2109 = vpop.f32.mrf.mxu0
        %v2110 = vadd.f32 %v2036, %v2109
        %v2111 = vpop.f32.mrf.mxu0
        %2112 = vmatprep.mubr.f32.mxu0 0.0
        %2113 = vmatmul.mubr.f32.gmra.mxu0 %v387
        %v2114 = vpop.f32.mrf.mxu0
        %v2115 = vadd.f32 %v2036, %v2114
        %v2116 = vpop.f32.mrf.mxu0
        %2117 = vmatprep.mubr.f32.mxu0 0.0
        %2118 = vmatmul.mubr.f32.gmra.mxu0 %v390
        %v2119 = vpop.f32.mrf.mxu0
        %v2120 = vadd.f32 %v2036, %v2119
        %v2121 = vpop.f32.mrf.mxu0
        %2122 = vdwg.mxu0
        %s2123 = scalar_lea.vmem %s3, 64
        %v2124 = vld [vmem:[%s2123] sm:$0xff]
        %v2125 = vld [vmem:[%s2123 + $0x8] sm:$0xff]
        %v2126 = vld [vmem:[%s2123 + $0x10] sm:$0xff]
        %v2127 = vld [vmem:[%s2123 + $0x18] sm:$0xff]
        %s2128 = scalar_lea.vmem %s7, 2
        %v2129 = vld [vmem:[%s2128] sm:$0x1]
        %v2131 = vlaneseq
        %v2132 = vshrl.u32 %v2131, 7
        %v2133 = vsub.s32 0, %v2132
        %v2134 = vrot.slane %v2129, %v2133
        %2136 = vmatprep.subr.mxu0 0.0
        %2137 = vmatpush1.msra.mxu0 0.0
        %2138 = vmatprep.subr.mxu0 0.0
        %2139 = vmatpush1.msra.mxu0 0.0
        %2140 = vmatprep.subr.mxu0 0.0
        %2141 = vmatpush1.msra.mxu0 0.0
        %2142 = vmatprep.subr.mxu0 0.0
        %2143 = vmatpush1.msra.mxu0 0.0
        %2144 = vmatprep.subr.mxu0 0.0
        %2145 = vmatpush1.msra.mxu0 0.0
        %2146 = vmatprep.subr.mxu0 0.0
        %2147 = vmatpush1.msra.mxu0 0.0
        %2148 = vmatprep.subr.mxu0 0.0
        %2149 = vmatpush1.msra.mxu0 0.0
        %2150 = vmatprep.subr.mxu0 0.0
        %2151 = vmatpush1.msra.mxu0 0.0
        %2152 = vmatprep.subr.mxu0 0.0
        %2153 = vmatpush1.msra.mxu0 0.0
        %2154 = vmatprep.subr.mxu0 0.0
        %2155 = vmatpush1.msra.mxu0 0.0
        %2156 = vmatprep.subr.mxu0 0.0
        %2157 = vmatpush1.msra.mxu0 0.0
        %2158 = vmatprep.subr.mxu0 0.0
        %2159 = vmatpush1.msra.mxu0 0.0
        %2160 = vmatprep.subr.mxu0 0.0
        %2161 = vmatpush1.msra.mxu0 %v2127
        %2162 = vmatprep.subr.mxu0 0.0
        %2163 = vmatpush1.msra.mxu0 %v2126
        %2164 = vmatprep.subr.mxu0 0.0
        %2165 = vmatpush1.msra.mxu0 %v2125
        %2166 = vmatprep.subr.mxu0 0.0
        %2167 = vmatpush1.msra.mxu0 %v2124
        %2168 = vmatprep.subr.mxu0 0.0
        %2169 = vmatpush2.msra.mxu0 0.0
        %2170 = vmatprep.subr.mxu0 0.0
        %2171 = vmatpush2.msra.mxu0 0.0
        %2172 = vmatprep.subr.mxu0 0.0
        %2173 = vmatpush2.msra.mxu0 0.0
        %2174 = vmatprep.subr.mxu0 0.0
        %2175 = vmatpush2.msra.mxu0 0.0
        %2176 = vmatprep.subr.mxu0 0.0
        %2177 = vmatpush2.msra.mxu0 0.0
        %2178 = vmatprep.subr.mxu0 0.0
        %2179 = vmatpush2.msra.mxu0 0.0
        %2180 = vmatprep.subr.mxu0 0.0
        %2181 = vmatpush2.msra.mxu0 0.0
        %2182 = vmatprep.subr.mxu0 0.0
        %2183 = vmatpush2.msra.mxu0 0.0
        %2184 = vmatprep.subr.mxu0 0.0
        %2185 = vmatpush2.msra.mxu0 0.0
        %2186 = vmatprep.subr.mxu0 0.0
        %2187 = vmatpush2.msra.mxu0 0.0
        %2188 = vmatprep.subr.mxu0 0.0
        %2189 = vmatpush2.msra.mxu0 0.0
        %2190 = vmatprep.subr.mxu0 0.0
        %2191 = vmatpush2.msra.mxu0 0.0
        %2192 = vmatprep.subr.mxu0 0.0
        %2193 = vmatpush2.msra.mxu0 0.0
        %2194 = vmatprep.subr.mxu0 0.0
        %2195 = vmatpush2.msra.mxu0 0.0
        %2196 = vmatprep.subr.mxu0 0.0
        %2197 = vmatpush2.msra.mxu0 0.0
        %2198 = vmatprep.subr.mxu0 0.0
        %2199 = vmatpush2.msra.mxu0 0.0
        %2200 = vmatprep.mubr.f32.mxu0 0.0
        %2201 = vmatmul.mubr.f32.gmra.mxu0 %v381
        %v2202 = vpop.f32.mrf.mxu0
        %v2203 = vadd.f32 %v2134, %v2202
        %v2204 = vpop.f32.mrf.mxu0
        %2205 = vmatprep.mubr.f32.mxu0 0.0
        %2206 = vmatmul.mubr.f32.gmra.mxu0 %v384
        %v2207 = vpop.f32.mrf.mxu0
        %v2208 = vadd.f32 %v2134, %v2207
        %v2209 = vpop.f32.mrf.mxu0
        %2210 = vmatprep.mubr.f32.mxu0 0.0
        %2211 = vmatmul.mubr.f32.gmra.mxu0 %v387
        %v2212 = vpop.f32.mrf.mxu0
        %v2213 = vadd.f32 %v2134, %v2212
        %v2214 = vpop.f32.mrf.mxu0
        %2215 = vmatprep.mubr.f32.mxu0 0.0
        %2216 = vmatmul.mubr.f32.gmra.mxu0 %v390
        %v2217 = vpop.f32.mrf.mxu0
        %v2218 = vadd.f32 %v2134, %v2217
        %v2219 = vpop.f32.mrf.mxu0
        %2220 = vdwg.mxu0
        %s2221 = scalar_lea.vmem %s9, 32
        %v2222 = vld [vmem:[%s2221] sm:$0xff]
        %v2223 = vld [vmem:[%s2221 + $0x8] sm:$0xff]
        %v2225 = vsel %vm671, %v2007, 0
        %v2228 = vsel %vm671, %v2012, 0
        %v2231 = vsel %vm671, %v2105, 0
        %v2234 = vsel %vm671, %v2110, 0
        %2236 = vmatprep.subr.mxu0 0.0
        %2237 = vmatpush1.xpose.msra.mxu0 0.0
        %2238 = vmatprep.subr.mxu0 0.0
        %2239 = vmatpush1.xpose.msra.mxu0 0.0
        %2240 = vmatprep.subr.mxu0 0.0
        %2241 = vmatpush1.xpose.msra.mxu0 0.0
        %2242 = vmatprep.subr.mxu0 0.0
        %2243 = vmatpush1.xpose.msra.mxu0 0.0
        %2244 = vmatprep.subr.mxu0 0.0
        %2245 = vmatpush1.xpose.msra.mxu0 0.0
        %2246 = vmatprep.subr.mxu0 0.0
        %2247 = vmatpush1.xpose.msra.mxu0 0.0
        %2248 = vmatprep.subr.mxu0 0.0
        %2249 = vmatpush1.xpose.msra.mxu0 0.0
        %2250 = vmatprep.subr.mxu0 0.0
        %2251 = vmatpush1.xpose.msra.mxu0 0.0
        %2252 = vmatprep.subr.mxu0 0.0
        %2253 = vmatpush1.xpose.msra.mxu0 0.0
        %2254 = vmatprep.subr.mxu0 0.0
        %2255 = vmatpush1.xpose.msra.mxu0 0.0
        %2256 = vmatprep.subr.mxu0 0.0
        %2257 = vmatpush1.xpose.msra.mxu0 0.0
        %2258 = vmatprep.subr.mxu0 0.0
        %2259 = vmatpush1.xpose.msra.mxu0 0.0
        %2260 = vmatprep.subr.mxu0 0.0
        %2261 = vmatpush1.xpose.msra.mxu0 0.0
        %2262 = vmatprep.subr.mxu0 0.0
        %2263 = vmatpush1.xpose.msra.mxu0 0.0
        %2264 = vmatprep.subr.mxu0 0.0
        %2265 = vmatpush1.xpose.msra.mxu0 %v2234
        %2266 = vmatprep.subr.mxu0 0.0
        %2267 = vmatpush1.xpose.msra.mxu0 %v2231
        %2268 = vmatprep.subr.mxu0 0.0
        %2269 = vmatpush2.xpose.msra.mxu0 0.0
        %2270 = vmatprep.subr.mxu0 0.0
        %2271 = vmatpush2.xpose.msra.mxu0 0.0
        %2272 = vmatprep.subr.mxu0 0.0
        %2273 = vmatpush2.xpose.msra.mxu0 0.0
        %2274 = vmatprep.subr.mxu0 0.0
        %2275 = vmatpush2.xpose.msra.mxu0 0.0
        %2276 = vmatprep.subr.mxu0 0.0
        %2277 = vmatpush2.xpose.msra.mxu0 0.0
        %2278 = vmatprep.subr.mxu0 0.0
        %2279 = vmatpush2.xpose.msra.mxu0 0.0
        %2280 = vmatprep.subr.mxu0 0.0
        %2281 = vmatpush2.xpose.msra.mxu0 0.0
        %2282 = vmatprep.subr.mxu0 0.0
        %2283 = vmatpush2.xpose.msra.mxu0 0.0
        %2284 = vmatprep.subr.mxu0 0.0
        %2285 = vmatpush2.xpose.msra.mxu0 0.0
        %2286 = vmatprep.subr.mxu0 0.0
        %2287 = vmatpush2.xpose.msra.mxu0 0.0
        %2288 = vmatprep.subr.mxu0 0.0
        %2289 = vmatpush2.xpose.msra.mxu0 0.0
        %2290 = vmatprep.subr.mxu0 0.0
        %2291 = vmatpush2.xpose.msra.mxu0 0.0
        %2292 = vmatprep.subr.mxu0 0.0
        %2293 = vmatpush2.xpose.msra.mxu0 0.0
        %2294 = vmatprep.subr.mxu0 0.0
        %2295 = vmatpush2.xpose.msra.mxu0 0.0
        %2296 = vmatprep.subr.mxu0 0.0
        %2297 = vmatpush2.xpose.msra.mxu0 0.0
        %2298 = vmatprep.subr.mxu0 0.0
        %2299 = vmatpush2.xpose.msra.mxu0 0.0
        %2300 = vmatprep.mubr.f32.mxu0 0.0
        %2301 = vmatmul.mubr.f32.gmra.mxu0 %v2225
        %v2302 = vpop.f32.mrf.mxu0
        %v2303 = vadd.f32 %v2222, %v2302
        %v2304 = vpop.f32.mrf.mxu0
        %2305 = vmatprep.mubr.f32.mxu0 0.0
        %2306 = vmatmul.mubr.f32.gmra.mxu0 %v2228
        %v2307 = vpop.f32.mrf.mxu0
        %v2308 = vadd.f32 %v2223, %v2307
        %v2309 = vpop.f32.mrf.mxu0
        %2310 = vdwg.mxu0
        %v2312 = vsel %vm671, %v2017, 0
        %v2315 = vsel %vm671, %v2022, 0
        %v2318 = vsel %vm671, %v2115, 0
        %v2321 = vsel %vm671, %v2120, 0
        %2323 = vmatprep.subr.mxu0 0.0
        %2324 = vmatpush1.xpose.msra.mxu0 0.0
        %2325 = vmatprep.subr.mxu0 0.0
        %2326 = vmatpush1.xpose.msra.mxu0 0.0
        %2327 = vmatprep.subr.mxu0 0.0
        %2328 = vmatpush1.xpose.msra.mxu0 0.0
        %2329 = vmatprep.subr.mxu0 0.0
        %2330 = vmatpush1.xpose.msra.mxu0 0.0
        %2331 = vmatprep.subr.mxu0 0.0
        %2332 = vmatpush1.xpose.msra.mxu0 0.0
        %2333 = vmatprep.subr.mxu0 0.0
        %2334 = vmatpush1.xpose.msra.mxu0 0.0
        %2335 = vmatprep.subr.mxu0 0.0
        %2336 = vmatpush1.xpose.msra.mxu0 0.0
        %2337 = vmatprep.subr.mxu0 0.0
        %2338 = vmatpush1.xpose.msra.mxu0 0.0
        %2339 = vmatprep.subr.mxu0 0.0
        %2340 = vmatpush1.xpose.msra.mxu0 0.0
        %2341 = vmatprep.subr.mxu0 0.0
        %2342 = vmatpush1.xpose.msra.mxu0 0.0
        %2343 = vmatprep.subr.mxu0 0.0
        %2344 = vmatpush1.xpose.msra.mxu0 0.0
        %2345 = vmatprep.subr.mxu0 0.0
        %2346 = vmatpush1.xpose.msra.mxu0 0.0
        %2347 = vmatprep.subr.mxu0 0.0
        %2348 = vmatpush1.xpose.msra.mxu0 0.0
        %2349 = vmatprep.subr.mxu0 0.0
        %2350 = vmatpush1.xpose.msra.mxu0 0.0
        %2351 = vmatprep.subr.mxu0 0.0
        %2352 = vmatpush1.xpose.msra.mxu0 %v2321
        %2353 = vmatprep.subr.mxu0 0.0
        %2354 = vmatpush1.xpose.msra.mxu0 %v2318
        %2355 = vmatprep.subr.mxu0 0.0
        %2356 = vmatpush2.xpose.msra.mxu0 0.0
        %2357 = vmatprep.subr.mxu0 0.0
        %2358 = vmatpush2.xpose.msra.mxu0 0.0
        %2359 = vmatprep.subr.mxu0 0.0
        %2360 = vmatpush2.xpose.msra.mxu0 0.0
        %2361 = vmatprep.subr.mxu0 0.0
        %2362 = vmatpush2.xpose.msra.mxu0 0.0
        %2363 = vmatprep.subr.mxu0 0.0
        %2364 = vmatpush2.xpose.msra.mxu0 0.0
        %2365 = vmatprep.subr.mxu0 0.0
        %2366 = vmatpush2.xpose.msra.mxu0 0.0
        %2367 = vmatprep.subr.mxu0 0.0
        %2368 = vmatpush2.xpose.msra.mxu0 0.0
        %2369 = vmatprep.subr.mxu0 0.0
        %2370 = vmatpush2.xpose.msra.mxu0 0.0
        %2371 = vmatprep.subr.mxu0 0.0
        %2372 = vmatpush2.xpose.msra.mxu0 0.0
        %2373 = vmatprep.subr.mxu0 0.0
        %2374 = vmatpush2.xpose.msra.mxu0 0.0
        %2375 = vmatprep.subr.mxu0 0.0
        %2376 = vmatpush2.xpose.msra.mxu0 0.0
        %2377 = vmatprep.subr.mxu0 0.0
        %2378 = vmatpush2.xpose.msra.mxu0 0.0
        %2379 = vmatprep.subr.mxu0 0.0
        %2380 = vmatpush2.xpose.msra.mxu0 0.0
        %2381 = vmatprep.subr.mxu0 0.0
        %2382 = vmatpush2.xpose.msra.mxu0 0.0
        %2383 = vmatprep.subr.mxu0 0.0
        %2384 = vmatpush2.xpose.msra.mxu0 0.0
        %2385 = vmatprep.subr.mxu0 0.0
        %2386 = vmatpush2.xpose.msra.mxu0 0.0
        %2387 = vmatprep.mubr.f32.mxu0 0.0
        %2388 = vmatmul.mubr.f32.gmra.mxu0 %v2312
        %v2389 = vpop.f32.mrf.mxu0
        %v2390 = vadd.f32 %v2222, %v2389
        %v2391 = vpop.f32.mrf.mxu0
        %2392 = vmatprep.mubr.f32.mxu0 0.0
        %2393 = vmatmul.mubr.f32.gmra.mxu0 %v2315
        %v2394 = vpop.f32.mrf.mxu0
        %v2395 = vadd.f32 %v2223, %v2394
        %v2396 = vpop.f32.mrf.mxu0
        %2397 = vdwg.mxu0
        %v2398 = vsel %vm846, %v2303, -inf
        %2399 = vmax.xlane.f32.xlu0 %v2398
        %v2400 = vpop.xlane.xlu0 %2399
        %v2401 = vsel %vm846, %v2308, -inf
        %2402 = vmax.xlane.f32.xlu0 %v2401
        %v2403 = vpop.xlane.xlu0 %2402
        %v2404 = vsel %vm846, %v2390, -inf
        %2405 = vmax.xlane.f32.xlu0 %v2404
        %v2406 = vpop.xlane.xlu0 %2405
        %v2407 = vsel %vm846, %v2395, -inf
        %2408 = vmax.xlane.f32.xlu0 %v2407
        %v2409 = vpop.xlane.xlu0 %2408
        %v2410 = vsub.f32 %v2303, %v2400
        %v2411 = vsub.f32 %v2308, %v2403
        %v2412 = vsub.f32 %v2390, %v2406
        %v2413 = vsub.f32 %v2395, %v2409
        %v2414 = vmul.f32 %v2410, 1.442695
        %v2415 = vpow.pop %v2414
        %v2416 = vmul.f32 %v2411, 1.442695
        %v2417 = vpow.pop %v2416
        %v2418 = vmul.f32 %v2412, 1.442695
        %v2419 = vpow.pop %v2418
        %v2420 = vmul.f32 %v2413, 1.442695
        %v2421 = vpow.pop %v2420
        %v2422 = vsel %vm846, %v2415, 0.0
        %2423 = vadd.xlane.f32.xlu0 %v2422
        %v2424 = vpop.xlane.xlu0 %2423
        %v2425 = vsel %vm846, %v2417, 0.0
        %2426 = vadd.xlane.f32.xlu0 %v2425
        %v2427 = vpop.xlane.xlu0 %2426
        %v2428 = vsel %vm846, %v2419, 0.0
        %2429 = vadd.xlane.f32.xlu0 %v2428
        %v2430 = vpop.xlane.xlu0 %2429
        %v2431 = vsel %vm846, %v2421, 0.0
        %2432 = vadd.xlane.f32.xlu0 %v2431
        %v2433 = vpop.xlane.xlu0 %2432
        %v2434 = vrcp.pop %v2424
        %v2435 = vrcp.pop %v2427
        %v2436 = vrcp.pop %v2430
        %v2437 = vrcp.pop %v2433
        %v2438 = vmul.f32 %v2415, %v2434
        %v2439 = vmul.f32 %v2417, %v2435
        %v2440 = vmul.f32 %v2419, %v2436
        %v2441 = vmul.f32 %v2421, %v2437
        %v2443 = vsel %vm846, %v2438, 0
        %v2446 = vsel %vm846, %v2439, 0
        %2448 = vmatprep.subr.mxu0 0.0
        %2449 = vmatpush1.msra.mxu0 0.0
        %2450 = vmatprep.subr.mxu0 0.0
        %2451 = vmatpush1.msra.mxu0 0.0
        %2452 = vmatprep.subr.mxu0 0.0
        %2453 = vmatpush1.msra.mxu0 0.0
        %2454 = vmatprep.subr.mxu0 0.0
        %2455 = vmatpush1.msra.mxu0 0.0
        %2456 = vmatprep.subr.mxu0 0.0
        %2457 = vmatpush1.msra.mxu0 0.0
        %2458 = vmatprep.subr.mxu0 0.0
        %2459 = vmatpush1.msra.mxu0 0.0
        %2460 = vmatprep.subr.mxu0 0.0
        %2461 = vmatpush1.msra.mxu0 0.0
        %2462 = vmatprep.subr.mxu0 0.0
        %2463 = vmatpush1.msra.mxu0 0.0
        %2464 = vmatprep.subr.mxu0 0.0
        %2465 = vmatpush1.msra.mxu0 0.0
        %2466 = vmatprep.subr.mxu0 0.0
        %2467 = vmatpush1.msra.mxu0 0.0
        %2468 = vmatprep.subr.mxu0 0.0
        %2469 = vmatpush1.msra.mxu0 0.0
        %2470 = vmatprep.subr.mxu0 0.0
        %2471 = vmatpush1.msra.mxu0 0.0
        %2472 = vmatprep.subr.mxu0 0.0
        %2473 = vmatpush1.msra.mxu0 0.0
        %2474 = vmatprep.subr.mxu0 0.0
        %2475 = vmatpush1.msra.mxu0 0.0
        %2476 = vmatprep.subr.mxu0 0.0
        %2477 = vmatpush1.msra.mxu0 %v2208
        %2478 = vmatprep.subr.mxu0 0.0
        %2479 = vmatpush1.msra.mxu0 %v2203
        %2480 = vmatprep.subr.mxu0 0.0
        %2481 = vmatpush2.msra.mxu0 0.0
        %2482 = vmatprep.subr.mxu0 0.0
        %2483 = vmatpush2.msra.mxu0 0.0
        %2484 = vmatprep.subr.mxu0 0.0
        %2485 = vmatpush2.msra.mxu0 0.0
        %2486 = vmatprep.subr.mxu0 0.0
        %2487 = vmatpush2.msra.mxu0 0.0
        %2488 = vmatprep.subr.mxu0 0.0
        %2489 = vmatpush2.msra.mxu0 0.0
        %2490 = vmatprep.subr.mxu0 0.0
        %2491 = vmatpush2.msra.mxu0 0.0
        %2492 = vmatprep.subr.mxu0 0.0
        %2493 = vmatpush2.msra.mxu0 0.0
        %2494 = vmatprep.subr.mxu0 0.0
        %2495 = vmatpush2.msra.mxu0 0.0
        %2496 = vmatprep.subr.mxu0 0.0
        %2497 = vmatpush2.msra.mxu0 0.0
        %2498 = vmatprep.subr.mxu0 0.0
        %2499 = vmatpush2.msra.mxu0 0.0
        %2500 = vmatprep.subr.mxu0 0.0
        %2501 = vmatpush2.msra.mxu0 0.0
        %2502 = vmatprep.subr.mxu0 0.0
        %2503 = vmatpush2.msra.mxu0 0.0
        %2504 = vmatprep.subr.mxu0 0.0
        %2505 = vmatpush2.msra.mxu0 0.0
        %2506 = vmatprep.subr.mxu0 0.0
        %2507 = vmatpush2.msra.mxu0 0.0
        %2508 = vmatprep.subr.mxu0 0.0
        %2509 = vmatpush2.msra.mxu0 0.0
        %2510 = vmatprep.subr.mxu0 0.0
        %2511 = vmatpush2.msra.mxu0 0.0
        %2512 = vmatprep.mubr.f32.mxu0 0.0
        %2513 = vmatmul.mubr.f32.gmra.mxu0 %v2443
        %v2514 = vpop.f32.mrf.mxu0
        %v2515 = vadd.f32 0.0, %v2514
        %v2516 = vpop.f32.mrf.mxu0
        %2517 = vmatprep.mubr.f32.mxu0 0.0
        %2518 = vmatmul.mubr.f32.gmra.mxu0 %v2446
        %v2519 = vpop.f32.mrf.mxu0
        %v2520 = vadd.f32 0.0, %v2519
        %v2521 = vpop.f32.mrf.mxu0
        %2522 = vdwg.mxu0
        %v2524 = vsel %vm846, %v2440, 0
        %v2527 = vsel %vm846, %v2441, 0
        %2529 = vmatprep.subr.mxu0 0.0
        %2530 = vmatpush1.msra.mxu0 0.0
        %2531 = vmatprep.subr.mxu0 0.0
        %2532 = vmatpush1.msra.mxu0 0.0
        %2533 = vmatprep.subr.mxu0 0.0
        %2534 = vmatpush1.msra.mxu0 0.0
        %2535 = vmatprep.subr.mxu0 0.0
        %2536 = vmatpush1.msra.mxu0 0.0
        %2537 = vmatprep.subr.mxu0 0.0
        %2538 = vmatpush1.msra.mxu0 0.0
        %2539 = vmatprep.subr.mxu0 0.0
        %2540 = vmatpush1.msra.mxu0 0.0
        %2541 = vmatprep.subr.mxu0 0.0
        %2542 = vmatpush1.msra.mxu0 0.0
        %2543 = vmatprep.subr.mxu0 0.0
        %2544 = vmatpush1.msra.mxu0 0.0
        %2545 = vmatprep.subr.mxu0 0.0
        %2546 = vmatpush1.msra.mxu0 0.0
        %2547 = vmatprep.subr.mxu0 0.0
        %2548 = vmatpush1.msra.mxu0 0.0
        %2549 = vmatprep.subr.mxu0 0.0
        %2550 = vmatpush1.msra.mxu0 0.0
        %2551 = vmatprep.subr.mxu0 0.0
        %2552 = vmatpush1.msra.mxu0 0.0
        %2553 = vmatprep.subr.mxu0 0.0
        %2554 = vmatpush1.msra.mxu0 0.0
        %2555 = vmatprep.subr.mxu0 0.0
        %2556 = vmatpush1.msra.mxu0 0.0
        %2557 = vmatprep.subr.mxu0 0.0
        %2558 = vmatpush1.msra.mxu0 %v2218
        %2559 = vmatprep.subr.mxu0 0.0
        %2560 = vmatpush1.msra.mxu0 %v2213
        %2561 = vmatprep.subr.mxu0 0.0
        %2562 = vmatpush2.msra.mxu0 0.0
        %2563 = vmatprep.subr.mxu0 0.0
        %2564 = vmatpush2.msra.mxu0 0.0
        %2565 = vmatprep.subr.mxu0 0.0
        %2566 = vmatpush2.msra.mxu0 0.0
        %2567 = vmatprep.subr.mxu0 0.0
        %2568 = vmatpush2.msra.mxu0 0.0
        %2569 = vmatprep.subr.mxu0 0.0
        %2570 = vmatpush2.msra.mxu0 0.0
        %2571 = vmatprep.subr.mxu0 0.0
        %2572 = vmatpush2.msra.mxu0 0.0
        %2573 = vmatprep.subr.mxu0 0.0
        %2574 = vmatpush2.msra.mxu0 0.0
        %2575 = vmatprep.subr.mxu0 0.0
        %2576 = vmatpush2.msra.mxu0 0.0
        %2577 = vmatprep.subr.mxu0 0.0
        %2578 = vmatpush2.msra.mxu0 0.0
        %2579 = vmatprep.subr.mxu0 0.0
        %2580 = vmatpush2.msra.mxu0 0.0
        %2581 = vmatprep.subr.mxu0 0.0
        %2582 = vmatpush2.msra.mxu0 0.0
        %2583 = vmatprep.subr.mxu0 0.0
        %2584 = vmatpush2.msra.mxu0 0.0
        %2585 = vmatprep.subr.mxu0 0.0
        %2586 = vmatpush2.msra.mxu0 0.0
        %2587 = vmatprep.subr.mxu0 0.0
        %2588 = vmatpush2.msra.mxu0 0.0
        %2589 = vmatprep.subr.mxu0 0.0
        %2590 = vmatpush2.msra.mxu0 0.0
        %2591 = vmatprep.subr.mxu0 0.0
        %2592 = vmatpush2.msra.mxu0 0.0
        %2593 = vmatprep.mubr.f32.mxu0 0.0
        %2594 = vmatmul.mubr.f32.gmra.mxu0 %v2524
        %v2595 = vpop.f32.mrf.mxu0
        %v2596 = vadd.f32 0.0, %v2595
        %v2597 = vpop.f32.mrf.mxu0
        %2598 = vmatprep.mubr.f32.mxu0 0.0
        %2599 = vmatmul.mubr.f32.gmra.mxu0 %v2527
        %v2600 = vpop.f32.mrf.mxu0
        %v2601 = vadd.f32 0.0, %v2600
        %v2602 = vpop.f32.mrf.mxu0
        %2603 = vdwg.mxu0
        %s2604 = scalar_lea.vmem %s4, 16
        %v2605 = vld [vmem:[%s2604] sm:$0xff]
        %v2607 = vsel %vm671, %v2515, 0
        %v2610 = vsel %vm671, %v2520, 0
        %v2613 = vsel %vm671, %v2596, 0
        %v2616 = vsel %vm671, %v2601, 0
        %2618 = vmatprep.subr.mxu0 0.0
        %2619 = vmatpush1.msra.mxu0 0.0
        %2620 = vmatprep.subr.mxu0 0.0
        %2621 = vmatpush1.msra.mxu0 0.0
        %2622 = vmatprep.subr.mxu0 0.0
        %2623 = vmatpush1.msra.mxu0 0.0
        %2624 = vmatprep.subr.mxu0 0.0
        %2625 = vmatpush1.msra.mxu0 0.0
        %2626 = vmatprep.subr.mxu0 0.0
        %2627 = vmatpush1.msra.mxu0 0.0
        %2628 = vmatprep.subr.mxu0 0.0
        %2629 = vmatpush1.msra.mxu0 0.0
        %2630 = vmatprep.subr.mxu0 0.0
        %2631 = vmatpush1.msra.mxu0 0.0
        %2632 = vmatprep.subr.mxu0 0.0
        %2633 = vmatpush1.msra.mxu0 0.0
        %2634 = vmatprep.subr.mxu0 0.0
        %2635 = vmatpush1.msra.mxu0 0.0
        %2636 = vmatprep.subr.mxu0 0.0
        %2637 = vmatpush1.msra.mxu0 0.0
        %2638 = vmatprep.subr.mxu0 0.0
        %2639 = vmatpush1.msra.mxu0 0.0
        %2640 = vmatprep.subr.mxu0 0.0
        %2641 = vmatpush1.msra.mxu0 0.0
        %2642 = vmatprep.subr.mxu0 0.0
        %2643 = vmatpush1.msra.mxu0 0.0
        %2644 = vmatprep.subr.mxu0 0.0
        %2645 = vmatpush1.msra.mxu0 0.0
        %2646 = vmatprep.subr.mxu0 0.0
        %2647 = vmatpush1.msra.mxu0 0.0
        %2648 = vmatprep.subr.mxu0 0.0
        %2649 = vmatpush1.msra.mxu0 %v2605
        %2650 = vmatprep.subr.mxu0 0.0
        %2651 = vmatpush2.msra.mxu0 0.0
        %2652 = vmatprep.subr.mxu0 0.0
        %2653 = vmatpush2.msra.mxu0 0.0
        %2654 = vmatprep.subr.mxu0 0.0
        %2655 = vmatpush2.msra.mxu0 0.0
        %2656 = vmatprep.subr.mxu0 0.0
        %2657 = vmatpush2.msra.mxu0 0.0
        %2658 = vmatprep.subr.mxu0 0.0
        %2659 = vmatpush2.msra.mxu0 0.0
        %2660 = vmatprep.subr.mxu0 0.0
        %2661 = vmatpush2.msra.mxu0 0.0
        %2662 = vmatprep.subr.mxu0 0.0
        %2663 = vmatpush2.msra.mxu0 0.0
        %2664 = vmatprep.subr.mxu0 0.0
        %2665 = vmatpush2.msra.mxu0 0.0
        %2666 = vmatprep.subr.mxu0 0.0
        %2667 = vmatpush2.msra.mxu0 0.0
        %2668 = vmatprep.subr.mxu0 0.0
        %2669 = vmatpush2.msra.mxu0 0.0
        %2670 = vmatprep.subr.mxu0 0.0
        %2671 = vmatpush2.msra.mxu0 0.0
        %2672 = vmatprep.subr.mxu0 0.0
        %2673 = vmatpush2.msra.mxu0 0.0
        %2674 = vmatprep.subr.mxu0 0.0
        %2675 = vmatpush2.msra.mxu0 0.0
        %2676 = vmatprep.subr.mxu0 0.0
        %2677 = vmatpush2.msra.mxu0 0.0
        %2678 = vmatprep.subr.mxu0 0.0
        %2679 = vmatpush2.msra.mxu0 0.0
        %2680 = vmatprep.subr.mxu0 0.0
        %2681 = vmatpush2.msra.mxu0 0.0
        %2682 = vmatprep.mubr.f32.mxu0 0.0
        %2683 = vmatmul.mubr.f32.gmra.mxu0 %v2607
        %v2684 = vpop.f32.mrf.mxu0
        %v2685 = vadd.f32 0.0, %v2684
        %v2686 = vpop.f32.mrf.mxu0
        %2687 = vmatprep.mubr.f32.mxu0 0.0
        %2688 = vmatmul.mubr.f32.gmra.mxu0 %v2610
        %v2689 = vpop.f32.mrf.mxu0
        %v2690 = vadd.f32 0.0, %v2689
        %v2691 = vpop.f32.mrf.mxu0
        %2692 = vmatprep.mubr.f32.mxu0 0.0
        %2693 = vmatmul.mubr.f32.gmra.mxu0 %v2613
        %v2694 = vpop.f32.mrf.mxu0
        %v2695 = vadd.f32 0.0, %v2694
        %v2696 = vpop.f32.mrf.mxu0
        %2697 = vmatprep.mubr.f32.mxu0 0.0
        %2698 = vmatmul.mubr.f32.gmra.mxu0 %v2616
        %v2699 = vpop.f32.mrf.mxu0
        %v2700 = vadd.f32 0.0, %v2699
        %v2701 = vpop.f32.mrf.mxu0
        %2702 = vdwg.mxu0
        %v2703 = vadd.f32 %v1909, %v2685
        %v2704 = vadd.f32 %v1914, %v2690
        %v2705 = vadd.f32 %v1919, %v2695
        %v2706 = vadd.f32 %v1924, %v2700
        %s2707 = scalar_lea.vmem %s1, 96
        %v2708 = vld [vmem:[%s2707] sm:$0xff]
        %v2709 = vld [vmem:[%s2707 + $0x8] sm:$0xff]
        %v2710 = vld [vmem:[%s2707 + $0x10] sm:$0xff]
        %v2711 = vld [vmem:[%s2707 + $0x18] sm:$0xff]
        %s2712 = scalar_lea.vmem %s5, 3
        %v2713 = vld [vmem:[%s2712] sm:$0x1]
        %v2715 = vlaneseq
        %v2716 = vshrl.u32 %v2715, 7
        %v2717 = vsub.s32 0, %v2716
        %v2718 = vrot.slane %v2713, %v2717
        %2720 = vmatprep.subr.mxu0 0.0
        %2721 = vmatpush1.msra.mxu0 0.0
        %2722 = vmatprep.subr.mxu0 0.0
        %2723 = vmatpush1.msra.mxu0 0.0
        %2724 = vmatprep.subr.mxu0 0.0
        %2725 = vmatpush1.msra.mxu0 0.0
        %2726 = vmatprep.subr.mxu0 0.0
        %2727 = vmatpush1.msra.mxu0 0.0
        %2728 = vmatprep.subr.mxu0 0.0
        %2729 = vmatpush1.msra.mxu0 0.0
        %2730 = vmatprep.subr.mxu0 0.0
        %2731 = vmatpush1.msra.mxu0 0.0
        %2732 = vmatprep.subr.mxu0 0.0
        %2733 = vmatpush1.msra.mxu0 0.0
        %2734 = vmatprep.subr.mxu0 0.0
        %2735 = vmatpush1.msra.mxu0 0.0
        %2736 = vmatprep.subr.mxu0 0.0
        %2737 = vmatpush1.msra.mxu0 0.0
        %2738 = vmatprep.subr.mxu0 0.0
        %2739 = vmatpush1.msra.mxu0 0.0
        %2740 = vmatprep.subr.mxu0 0.0
        %2741 = vmatpush1.msra.mxu0 0.0
        %2742 = vmatprep.subr.mxu0 0.0
        %2743 = vmatpush1.msra.mxu0 0.0
        %2744 = vmatprep.subr.mxu0 0.0
        %2745 = vmatpush1.msra.mxu0 %v2711
        %2746 = vmatprep.subr.mxu0 0.0
        %2747 = vmatpush1.msra.mxu0 %v2710
        %2748 = vmatprep.subr.mxu0 0.0
        %2749 = vmatpush1.msra.mxu0 %v2709
        %2750 = vmatprep.subr.mxu0 0.0
        %2751 = vmatpush1.msra.mxu0 %v2708
        %2752 = vmatprep.subr.mxu0 0.0
        %2753 = vmatpush2.msra.mxu0 0.0
        %2754 = vmatprep.subr.mxu0 0.0
        %2755 = vmatpush2.msra.mxu0 0.0
        %2756 = vmatprep.subr.mxu0 0.0
        %2757 = vmatpush2.msra.mxu0 0.0
        %2758 = vmatprep.subr.mxu0 0.0
        %2759 = vmatpush2.msra.mxu0 0.0
        %2760 = vmatprep.subr.mxu0 0.0
        %2761 = vmatpush2.msra.mxu0 0.0
        %2762 = vmatprep.subr.mxu0 0.0
        %2763 = vmatpush2.msra.mxu0 0.0
        %2764 = vmatprep.subr.mxu0 0.0
        %2765 = vmatpush2.msra.mxu0 0.0
        %2766 = vmatprep.subr.mxu0 0.0
        %2767 = vmatpush2.msra.mxu0 0.0
        %2768 = vmatprep.subr.mxu0 0.0
        %2769 = vmatpush2.msra.mxu0 0.0
        %2770 = vmatprep.subr.mxu0 0.0
        %2771 = vmatpush2.msra.mxu0 0.0
        %2772 = vmatprep.subr.mxu0 0.0
        %2773 = vmatpush2.msra.mxu0 0.0
        %2774 = vmatprep.subr.mxu0 0.0
        %2775 = vmatpush2.msra.mxu0 0.0
        %2776 = vmatprep.subr.mxu0 0.0
        %2777 = vmatpush2.msra.mxu0 0.0
        %2778 = vmatprep.subr.mxu0 0.0
        %2779 = vmatpush2.msra.mxu0 0.0
        %2780 = vmatprep.subr.mxu0 0.0
        %2781 = vmatpush2.msra.mxu0 0.0
        %2782 = vmatprep.subr.mxu0 0.0
        %2783 = vmatpush2.msra.mxu0 0.0
        %2784 = vmatprep.mubr.f32.mxu0 0.0
        %2785 = vmatmul.mubr.f32.gmra.mxu0 %v381
        %v2786 = vpop.f32.mrf.mxu0
        %v2787 = vadd.f32 %v2718, %v2786
        %v2788 = vpop.f32.mrf.mxu0
        %2789 = vmatprep.mubr.f32.mxu0 0.0
        %2790 = vmatmul.mubr.f32.gmra.mxu0 %v384
        %v2791 = vpop.f32.mrf.mxu0
        %v2792 = vadd.f32 %v2718, %v2791
        %v2793 = vpop.f32.mrf.mxu0
        %2794 = vmatprep.mubr.f32.mxu0 0.0
        %2795 = vmatmul.mubr.f32.gmra.mxu0 %v387
        %v2796 = vpop.f32.mrf.mxu0
        %v2797 = vadd.f32 %v2718, %v2796
        %v2798 = vpop.f32.mrf.mxu0
        %2799 = vmatprep.mubr.f32.mxu0 0.0
        %2800 = vmatmul.mubr.f32.gmra.mxu0 %v390
        %v2801 = vpop.f32.mrf.mxu0
        %v2802 = vadd.f32 %v2718, %v2801
        %v2803 = vpop.f32.mrf.mxu0
        %2804 = vdwg.mxu0
        %s2805 = scalar_lea.vmem %s2, 96
        %v2806 = vld [vmem:[%s2805] sm:$0xff]
        %v2807 = vld [vmem:[%s2805 + $0x8] sm:$0xff]
        %v2808 = vld [vmem:[%s2805 + $0x10] sm:$0xff]
        %v2809 = vld [vmem:[%s2805 + $0x18] sm:$0xff]
        %s2810 = scalar_lea.vmem %s6, 3
        %v2811 = vld [vmem:[%s2810] sm:$0x1]
        %v2813 = vlaneseq
        %v2814 = vshrl.u32 %v2813, 7
        %v2815 = vsub.s32 0, %v2814
        %v2816 = vrot.slane %v2811, %v2815
        %2818 = vmatprep.subr.mxu0 0.0
        %2819 = vmatpush1.msra.mxu0 0.0
        %2820 = vmatprep.subr.mxu0 0.0
        %2821 = vmatpush1.msra.mxu0 0.0
        %2822 = vmatprep.subr.mxu0 0.0
        %2823 = vmatpush1.msra.mxu0 0.0
        %2824 = vmatprep.subr.mxu0 0.0
        %2825 = vmatpush1.msra.mxu0 0.0
        %2826 = vmatprep.subr.mxu0 0.0
        %2827 = vmatpush1.msra.mxu0 0.0
        %2828 = vmatprep.subr.mxu0 0.0
        %2829 = vmatpush1.msra.mxu0 0.0
        %2830 = vmatprep.subr.mxu0 0.0
        %2831 = vmatpush1.msra.mxu0 0.0
        %2832 = vmatprep.subr.mxu0 0.0
        %2833 = vmatpush1.msra.mxu0 0.0
        %2834 = vmatprep.subr.mxu0 0.0
        %2835 = vmatpush1.msra.mxu0 0.0
        %2836 = vmatprep.subr.mxu0 0.0
        %2837 = vmatpush1.msra.mxu0 0.0
        %2838 = vmatprep.subr.mxu0 0.0
        %2839 = vmatpush1.msra.mxu0 0.0
        %2840 = vmatprep.subr.mxu0 0.0
        %2841 = vmatpush1.msra.mxu0 0.0
        %2842 = vmatprep.subr.mxu0 0.0
        %2843 = vmatpush1.msra.mxu0 %v2809
        %2844 = vmatprep.subr.mxu0 0.0
        %2845 = vmatpush1.msra.mxu0 %v2808
        %2846 = vmatprep.subr.mxu0 0.0
        %2847 = vmatpush1.msra.mxu0 %v2807
        %2848 = vmatprep.subr.mxu0 0.0
        %2849 = vmatpush1.msra.mxu0 %v2806
        %2850 = vmatprep.subr.mxu0 0.0
        %2851 = vmatpush2.msra.mxu0 0.0
        %2852 = vmatprep.subr.mxu0 0.0
        %2853 = vmatpush2.msra.mxu0 0.0
        %2854 = vmatprep.subr.mxu0 0.0
        %2855 = vmatpush2.msra.mxu0 0.0
        %2856 = vmatprep.subr.mxu0 0.0
        %2857 = vmatpush2.msra.mxu0 0.0
        %2858 = vmatprep.subr.mxu0 0.0
        %2859 = vmatpush2.msra.mxu0 0.0
        %2860 = vmatprep.subr.mxu0 0.0
        %2861 = vmatpush2.msra.mxu0 0.0
        %2862 = vmatprep.subr.mxu0 0.0
        %2863 = vmatpush2.msra.mxu0 0.0
        %2864 = vmatprep.subr.mxu0 0.0
        %2865 = vmatpush2.msra.mxu0 0.0
        %2866 = vmatprep.subr.mxu0 0.0
        %2867 = vmatpush2.msra.mxu0 0.0
        %2868 = vmatprep.subr.mxu0 0.0
        %2869 = vmatpush2.msra.mxu0 0.0
        %2870 = vmatprep.subr.mxu0 0.0
        %2871 = vmatpush2.msra.mxu0 0.0
        %2872 = vmatprep.subr.mxu0 0.0
        %2873 = vmatpush2.msra.mxu0 0.0
        %2874 = vmatprep.subr.mxu0 0.0
        %2875 = vmatpush2.msra.mxu0 0.0
        %2876 = vmatprep.subr.mxu0 0.0
        %2877 = vmatpush2.msra.mxu0 0.0
        %2878 = vmatprep.subr.mxu0 0.0
        %2879 = vmatpush2.msra.mxu0 0.0
        %2880 = vmatprep.subr.mxu0 0.0
        %2881 = vmatpush2.msra.mxu0 0.0
        %2882 = vmatprep.mubr.f32.mxu0 0.0
        %2883 = vmatmul.mubr.f32.gmra.mxu0 %v381
        %v2884 = vpop.f32.mrf.mxu0
        %v2885 = vadd.f32 %v2816, %v2884
        %v2886 = vpop.f32.mrf.mxu0
        %2887 = vmatprep.mubr.f32.mxu0 0.0
        %2888 = vmatmul.mubr.f32.gmra.mxu0 %v384
        %v2889 = vpop.f32.mrf.mxu0
        %v2890 = vadd.f32 %v2816, %v2889
        %v2891 = vpop.f32.mrf.mxu0
        %2892 = vmatprep.mubr.f32.mxu0 0.0
        %2893 = vmatmul.mubr.f32.gmra.mxu0 %v387
        %v2894 = vpop.f32.mrf.mxu0
        %v2895 = vadd.f32 %v2816, %v2894
        %v2896 = vpop.f32.mrf.mxu0
        %2897 = vmatprep.mubr.f32.mxu0 0.0
        %2898 = vmatmul.mubr.f32.gmra.mxu0 %v390
        %v2899 = vpop.f32.mrf.mxu0
        %v2900 = vadd.f32 %v2816, %v2899
        %v2901 = vpop.f32.mrf.mxu0
        %2902 = vdwg.mxu0
        %s2903 = scalar_lea.vmem %s3, 96
        %v2904 = vld [vmem:[%s2903] sm:$0xff]
        %v2905 = vld [vmem:[%s2903 + $0x8] sm:$0xff]
        %v2906 = vld [vmem:[%s2903 + $0x10] sm:$0xff]
        %v2907 = vld [vmem:[%s2903 + $0x18] sm:$0xff]
        %s2908 = scalar_lea.vmem %s7, 3
        %v2909 = vld [vmem:[%s2908] sm:$0x1]
        %v2911 = vlaneseq
        %v2912 = vshrl.u32 %v2911, 7
        %v2913 = vsub.s32 0, %v2912
        %v2914 = vrot.slane %v2909, %v2913
        %2916 = vmatprep.subr.mxu0 0.0
        %2917 = vmatpush1.msra.mxu0 0.0
        %2918 = vmatprep.subr.mxu0 0.0
        %2919 = vmatpush1.msra.mxu0 0.0
        %2920 = vmatprep.subr.mxu0 0.0
        %2921 = vmatpush1.msra.mxu0 0.0
        %2922 = vmatprep.subr.mxu0 0.0
        %2923 = vmatpush1.msra.mxu0 0.0
        %2924 = vmatprep.subr.mxu0 0.0
        %2925 = vmatpush1.msra.mxu0 0.0
        %2926 = vmatprep.subr.mxu0 0.0
        %2927 = vmatpush1.msra.mxu0 0.0
        %2928 = vmatprep.subr.mxu0 0.0
        %2929 = vmatpush1.msra.mxu0 0.0
        %2930 = vmatprep.subr.mxu0 0.0
        %2931 = vmatpush1.msra.mxu0 0.0
        %2932 = vmatprep.subr.mxu0 0.0
        %2933 = vmatpush1.msra.mxu0 0.0
        %2934 = vmatprep.subr.mxu0 0.0
        %2935 = vmatpush1.msra.mxu0 0.0
        %2936 = vmatprep.subr.mxu0 0.0
        %2937 = vmatpush1.msra.mxu0 0.0
        %2938 = vmatprep.subr.mxu0 0.0
        %2939 = vmatpush1.msra.mxu0 0.0
        %2940 = vmatprep.subr.mxu0 0.0
        %2941 = vmatpush1.msra.mxu0 %v2907
        %2942 = vmatprep.subr.mxu0 0.0
        %2943 = vmatpush1.msra.mxu0 %v2906
        %2944 = vmatprep.subr.mxu0 0.0
        %2945 = vmatpush1.msra.mxu0 %v2905
        %2946 = vmatprep.subr.mxu0 0.0
        %2947 = vmatpush1.msra.mxu0 %v2904
        %2948 = vmatprep.subr.mxu0 0.0
        %2949 = vmatpush2.msra.mxu0 0.0
        %2950 = vmatprep.subr.mxu0 0.0
        %2951 = vmatpush2.msra.mxu0 0.0
        %2952 = vmatprep.subr.mxu0 0.0
        %2953 = vmatpush2.msra.mxu0 0.0
        %2954 = vmatprep.subr.mxu0 0.0
        %2955 = vmatpush2.msra.mxu0 0.0
        %2956 = vmatprep.subr.mxu0 0.0
        %2957 = vmatpush2.msra.mxu0 0.0
        %2958 = vmatprep.subr.mxu0 0.0
        %2959 = vmatpush2.msra.mxu0 0.0
        %2960 = vmatprep.subr.mxu0 0.0
        %2961 = vmatpush2.msra.mxu0 0.0
        %2962 = vmatprep.subr.mxu0 0.0
        %2963 = vmatpush2.msra.mxu0 0.0
        %2964 = vmatprep.subr.mxu0 0.0
        %2965 = vmatpush2.msra.mxu0 0.0
        %2966 = vmatprep.subr.mxu0 0.0
        %2967 = vmatpush2.msra.mxu0 0.0
        %2968 = vmatprep.subr.mxu0 0.0
        %2969 = vmatpush2.msra.mxu0 0.0
        %2970 = vmatprep.subr.mxu0 0.0
        %2971 = vmatpush2.msra.mxu0 0.0
        %2972 = vmatprep.subr.mxu0 0.0
        %2973 = vmatpush2.msra.mxu0 0.0
        %2974 = vmatprep.subr.mxu0 0.0
        %2975 = vmatpush2.msra.mxu0 0.0
        %2976 = vmatprep.subr.mxu0 0.0
        %2977 = vmatpush2.msra.mxu0 0.0
        %2978 = vmatprep.subr.mxu0 0.0
        %2979 = vmatpush2.msra.mxu0 0.0
        %2980 = vmatprep.mubr.f32.mxu0 0.0
        %2981 = vmatmul.mubr.f32.gmra.mxu0 %v381
        %v2982 = vpop.f32.mrf.mxu0
        %v2983 = vadd.f32 %v2914, %v2982
        %v2984 = vpop.f32.mrf.mxu0
        %2985 = vmatprep.mubr.f32.mxu0 0.0
        %2986 = vmatmul.mubr.f32.gmra.mxu0 %v384
        %v2987 = vpop.f32.mrf.mxu0
        %v2988 = vadd.f32 %v2914, %v2987
        %v2989 = vpop.f32.mrf.mxu0
        %2990 = vmatprep.mubr.f32.mxu0 0.0
        %2991 = vmatmul.mubr.f32.gmra.mxu0 %v387
        %v2992 = vpop.f32.mrf.mxu0
        %v2993 = vadd.f32 %v2914, %v2992
        %v2994 = vpop.f32.mrf.mxu0
        %2995 = vmatprep.mubr.f32.mxu0 0.0
        %2996 = vmatmul.mubr.f32.gmra.mxu0 %v390
        %v2997 = vpop.f32.mrf.mxu0
        %v2998 = vadd.f32 %v2914, %v2997
        %v2999 = vpop.f32.mrf.mxu0
        %3000 = vdwg.mxu0
        %s3001 = scalar_lea.vmem %s9, 48
        %v3002 = vld [vmem:[%s3001] sm:$0xff]
        %v3003 = vld [vmem:[%s3001 + $0x8] sm:$0xff]
        %v3005 = vsel %vm671, %v2787, 0
        %v3008 = vsel %vm671, %v2792, 0
        %v3011 = vsel %vm671, %v2885, 0
        %v3014 = vsel %vm671, %v2890, 0
        %3016 = vmatprep.subr.mxu0 0.0
        %3017 = vmatpush1.xpose.msra.mxu0 0.0
        %3018 = vmatprep.subr.mxu0 0.0
        %3019 = vmatpush1.xpose.msra.mxu0 0.0
        %3020 = vmatprep.subr.mxu0 0.0
        %3021 = vmatpush1.xpose.msra.mxu0 0.0
        %3022 = vmatprep.subr.mxu0 0.0
        %3023 = vmatpush1.xpose.msra.mxu0 0.0
        %3024 = vmatprep.subr.mxu0 0.0
        %3025 = vmatpush1.xpose.msra.mxu0 0.0
        %3026 = vmatprep.subr.mxu0 0.0
        %3027 = vmatpush1.xpose.msra.mxu0 0.0
        %3028 = vmatprep.subr.mxu0 0.0
        %3029 = vmatpush1.xpose.msra.mxu0 0.0
        %3030 = vmatprep.subr.mxu0 0.0
        %3031 = vmatpush1.xpose.msra.mxu0 0.0
        %3032 = vmatprep.subr.mxu0 0.0
        %3033 = vmatpush1.xpose.msra.mxu0 0.0
        %3034 = vmatprep.subr.mxu0 0.0
        %3035 = vmatpush1.xpose.msra.mxu0 0.0
        %3036 = vmatprep.subr.mxu0 0.0
        %3037 = vmatpush1.xpose.msra.mxu0 0.0
        %3038 = vmatprep.subr.mxu0 0.0
        %3039 = vmatpush1.xpose.msra.mxu0 0.0
        %3040 = vmatprep.subr.mxu0 0.0
        %3041 = vmatpush1.xpose.msra.mxu0 0.0
        %3042 = vmatprep.subr.mxu0 0.0
        %3043 = vmatpush1.xpose.msra.mxu0 0.0
        %3044 = vmatprep.subr.mxu0 0.0
        %3045 = vmatpush1.xpose.msra.mxu0 %v3014
        %3046 = vmatprep.subr.mxu0 0.0
        %3047 = vmatpush1.xpose.msra.mxu0 %v3011
        %3048 = vmatprep.subr.mxu0 0.0
        %3049 = vmatpush2.xpose.msra.mxu0 0.0
        %3050 = vmatprep.subr.mxu0 0.0
        %3051 = vmatpush2.xpose.msra.mxu0 0.0
        %3052 = vmatprep.subr.mxu0 0.0
        %3053 = vmatpush2.xpose.msra.mxu0 0.0
        %3054 = vmatprep.subr.mxu0 0.0
        %3055 = vmatpush2.xpose.msra.mxu0 0.0
        %3056 = vmatprep.subr.mxu0 0.0
        %3057 = vmatpush2.xpose.msra.mxu0 0.0
        %3058 = vmatprep.subr.mxu0 0.0
        %3059 = vmatpush2.xpose.msra.mxu0 0.0
        %3060 = vmatprep.subr.mxu0 0.0
        %3061 = vmatpush2.xpose.msra.mxu0 0.0
        %3062 = vmatprep.subr.mxu0 0.0
        %3063 = vmatpush2.xpose.msra.mxu0 0.0
        %3064 = vmatprep.subr.mxu0 0.0
        %3065 = vmatpush2.xpose.msra.mxu0 0.0
        %3066 = vmatprep.subr.mxu0 0.0
        %3067 = vmatpush2.xpose.msra.mxu0 0.0
        %3068 = vmatprep.subr.mxu0 0.0
        %3069 = vmatpush2.xpose.msra.mxu0 0.0
        %3070 = vmatprep.subr.mxu0 0.0
        %3071 = vmatpush2.xpose.msra.mxu0 0.0
        %3072 = vmatprep.subr.mxu0 0.0
        %3073 = vmatpush2.xpose.msra.mxu0 0.0
        %3074 = vmatprep.subr.mxu0 0.0
        %3075 = vmatpush2.xpose.msra.mxu0 0.0
        %3076 = vmatprep.subr.mxu0 0.0
        %3077 = vmatpush2.xpose.msra.mxu0 0.0
        %3078 = vmatprep.subr.mxu0 0.0
        %3079 = vmatpush2.xpose.msra.mxu0 0.0
        %3080 = vmatprep.mubr.f32.mxu0 0.0
        %3081 = vmatmul.mubr.f32.gmra.mxu0 %v3005
        %v3082 = vpop.f32.mrf.mxu0
        %v3083 = vadd.f32 %v3002, %v3082
        %v3084 = vpop.f32.mrf.mxu0
        %3085 = vmatprep.mubr.f32.mxu0 0.0
        %3086 = vmatmul.mubr.f32.gmra.mxu0 %v3008
        %v3087 = vpop.f32.mrf.mxu0
        %v3088 = vadd.f32 %v3003, %v3087
        %v3089 = vpop.f32.mrf.mxu0
        %3090 = vdwg.mxu0
        %v3092 = vsel %vm671, %v2797, 0
        %v3095 = vsel %vm671, %v2802, 0
        %v3098 = vsel %vm671, %v2895, 0
        %v3101 = vsel %vm671, %v2900, 0
        %3103 = vmatprep.subr.mxu0 0.0
        %3104 = vmatpush1.xpose.msra.mxu0 0.0
        %3105 = vmatprep.subr.mxu0 0.0
        %3106 = vmatpush1.xpose.msra.mxu0 0.0
        %3107 = vmatprep.subr.mxu0 0.0
        %3108 = vmatpush1.xpose.msra.mxu0 0.0
        %3109 = vmatprep.subr.mxu0 0.0
        %3110 = vmatpush1.xpose.msra.mxu0 0.0
        %3111 = vmatprep.subr.mxu0 0.0
        %3112 = vmatpush1.xpose.msra.mxu0 0.0
        %3113 = vmatprep.subr.mxu0 0.0
        %3114 = vmatpush1.xpose.msra.mxu0 0.0
        %3115 = vmatprep.subr.mxu0 0.0
        %3116 = vmatpush1.xpose.msra.mxu0 0.0
        %3117 = vmatprep.subr.mxu0 0.0
        %3118 = vmatpush1.xpose.msra.mxu0 0.0
        %3119 = vmatprep.subr.mxu0 0.0
        %3120 = vmatpush1.xpose.msra.mxu0 0.0
        %3121 = vmatprep.subr.mxu0 0.0
        %3122 = vmatpush1.xpose.msra.mxu0 0.0
        %3123 = vmatprep.subr.mxu0 0.0
        %3124 = vmatpush1.xpose.msra.mxu0 0.0
        %3125 = vmatprep.subr.mxu0 0.0
        %3126 = vmatpush1.xpose.msra.mxu0 0.0
        %3127 = vmatprep.subr.mxu0 0.0
        %3128 = vmatpush1.xpose.msra.mxu0 0.0
        %3129 = vmatprep.subr.mxu0 0.0
        %3130 = vmatpush1.xpose.msra.mxu0 0.0
        %3131 = vmatprep.subr.mxu0 0.0
        %3132 = vmatpush1.xpose.msra.mxu0 %v3101
        %3133 = vmatprep.subr.mxu0 0.0
        %3134 = vmatpush1.xpose.msra.mxu0 %v3098
        %3135 = vmatprep.subr.mxu0 0.0
        %3136 = vmatpush2.xpose.msra.mxu0 0.0
        %3137 = vmatprep.subr.mxu0 0.0
        %3138 = vmatpush2.xpose.msra.mxu0 0.0
        %3139 = vmatprep.subr.mxu0 0.0
        %3140 = vmatpush2.xpose.msra.mxu0 0.0
        %3141 = vmatprep.subr.mxu0 0.0
        %3142 = vmatpush2.xpose.msra.mxu0 0.0
        %3143 = vmatprep.subr.mxu0 0.0
        %3144 = vmatpush2.xpose.msra.mxu0 0.0
        %3145 = vmatprep.subr.mxu0 0.0
        %3146 = vmatpush2.xpose.msra.mxu0 0.0
        %3147 = vmatprep.subr.mxu0 0.0
        %3148 = vmatpush2.xpose.msra.mxu0 0.0
        %3149 = vmatprep.subr.mxu0 0.0
        %3150 = vmatpush2.xpose.msra.mxu0 0.0
        %3151 = vmatprep.subr.mxu0 0.0
        %3152 = vmatpush2.xpose.msra.mxu0 0.0
        %3153 = vmatprep.subr.mxu0 0.0
        %3154 = vmatpush2.xpose.msra.mxu0 0.0
        %3155 = vmatprep.subr.mxu0 0.0
        %3156 = vmatpush2.xpose.msra.mxu0 0.0
        %3157 = vmatprep.subr.mxu0 0.0
        %3158 = vmatpush2.xpose.msra.mxu0 0.0
        %3159 = vmatprep.subr.mxu0 0.0
        %3160 = vmatpush2.xpose.msra.mxu0 0.0
        %3161 = vmatprep.subr.mxu0 0.0
        %3162 = vmatpush2.xpose.msra.mxu0 0.0
        %3163 = vmatprep.subr.mxu0 0.0
        %3164 = vmatpush2.xpose.msra.mxu0 0.0
        %3165 = vmatprep.subr.mxu0 0.0
        %3166 = vmatpush2.xpose.msra.mxu0 0.0
        %3167 = vmatprep.mubr.f32.mxu0 0.0
        %3168 = vmatmul.mubr.f32.gmra.mxu0 %v3092
        %v3169 = vpop.f32.mrf.mxu0
        %v3170 = vadd.f32 %v3002, %v3169
        %v3171 = vpop.f32.mrf.mxu0
        %3172 = vmatprep.mubr.f32.mxu0 0.0
        %3173 = vmatmul.mubr.f32.gmra.mxu0 %v3095
        %v3174 = vpop.f32.mrf.mxu0
        %v3175 = vadd.f32 %v3003, %v3174
        %v3176 = vpop.f32.mrf.mxu0
        %3177 = vdwg.mxu0
        %v3178 = vsel %vm846, %v3083, -inf
        %3179 = vmax.xlane.f32.xlu0 %v3178
        %v3180 = vpop.xlane.xlu0 %3179
        %v3181 = vsel %vm846, %v3088, -inf
        %3182 = vmax.xlane.f32.xlu0 %v3181
        %v3183 = vpop.xlane.xlu0 %3182
        %v3184 = vsel %vm846, %v3170, -inf
        %3185 = vmax.xlane.f32.xlu0 %v3184
        %v3186 = vpop.xlane.xlu0 %3185
        %v3187 = vsel %vm846, %v3175, -inf
        %3188 = vmax.xlane.f32.xlu0 %v3187
        %v3189 = vpop.xlane.xlu0 %3188
        %v3190 = vsub.f32 %v3083, %v3180
        %v3191 = vsub.f32 %v3088, %v3183
        %v3192 = vsub.f32 %v3170, %v3186
        %v3193 = vsub.f32 %v3175, %v3189
        %v3194 = vmul.f32 %v3190, 1.442695
        %v3195 = vpow.pop %v3194
        %v3196 = vmul.f32 %v3191, 1.442695
        %v3197 = vpow.pop %v3196
        %v3198 = vmul.f32 %v3192, 1.442695
        %v3199 = vpow.pop %v3198
        %v3200 = vmul.f32 %v3193, 1.442695
        %v3201 = vpow.pop %v3200
        %v3202 = vsel %vm846, %v3195, 0.0
        %3203 = vadd.xlane.f32.xlu0 %v3202
        %v3204 = vpop.xlane.xlu0 %3203
        %v3205 = vsel %vm846, %v3197, 0.0
        %3206 = vadd.xlane.f32.xlu0 %v3205
        %v3207 = vpop.xlane.xlu0 %3206
        %v3208 = vsel %vm846, %v3199, 0.0
        %3209 = vadd.xlane.f32.xlu0 %v3208
        %v3210 = vpop.xlane.xlu0 %3209
        %v3211 = vsel %vm846, %v3201, 0.0
        %3212 = vadd.xlane.f32.xlu0 %v3211
        %v3213 = vpop.xlane.xlu0 %3212
        %v3214 = vrcp.pop %v3204
        %v3215 = vrcp.pop %v3207
        %v3216 = vrcp.pop %v3210
        %v3217 = vrcp.pop %v3213
        %v3218 = vmul.f32 %v3195, %v3214
        %v3219 = vmul.f32 %v3197, %v3215
        %v3220 = vmul.f32 %v3199, %v3216
        %v3221 = vmul.f32 %v3201, %v3217
        %v3223 = vsel %vm846, %v3218, 0
        %v3226 = vsel %vm846, %v3219, 0
        %3228 = vmatprep.subr.mxu0 0.0
        %3229 = vmatpush1.msra.mxu0 0.0
        %3230 = vmatprep.subr.mxu0 0.0
        %3231 = vmatpush1.msra.mxu0 0.0
        %3232 = vmatprep.subr.mxu0 0.0
        %3233 = vmatpush1.msra.mxu0 0.0
        %3234 = vmatprep.subr.mxu0 0.0
        %3235 = vmatpush1.msra.mxu0 0.0
        %3236 = vmatprep.subr.mxu0 0.0
        %3237 = vmatpush1.msra.mxu0 0.0
        %3238 = vmatprep.subr.mxu0 0.0
        %3239 = vmatpush1.msra.mxu0 0.0
        %3240 = vmatprep.subr.mxu0 0.0
        %3241 = vmatpush1.msra.mxu0 0.0
        %3242 = vmatprep.subr.mxu0 0.0
        %3243 = vmatpush1.msra.mxu0 0.0
        %3244 = vmatprep.subr.mxu0 0.0
        %3245 = vmatpush1.msra.mxu0 0.0
        %3246 = vmatprep.subr.mxu0 0.0
        %3247 = vmatpush1.msra.mxu0 0.0
        %3248 = vmatprep.subr.mxu0 0.0
        %3249 = vmatpush1.msra.mxu0 0.0
        %3250 = vmatprep.subr.mxu0 0.0
        %3251 = vmatpush1.msra.mxu0 0.0
        %3252 = vmatprep.subr.mxu0 0.0
        %3253 = vmatpush1.msra.mxu0 0.0
        %3254 = vmatprep.subr.mxu0 0.0
        %3255 = vmatpush1.msra.mxu0 0.0
        %3256 = vmatprep.subr.mxu0 0.0
        %3257 = vmatpush1.msra.mxu0 %v2988
        %3258 = vmatprep.subr.mxu0 0.0
        %3259 = vmatpush1.msra.mxu0 %v2983
        %3260 = vmatprep.subr.mxu0 0.0
        %3261 = vmatpush2.msra.mxu0 0.0
        %3262 = vmatprep.subr.mxu0 0.0
        %3263 = vmatpush2.msra.mxu0 0.0
        %3264 = vmatprep.subr.mxu0 0.0
        %3265 = vmatpush2.msra.mxu0 0.0
        %3266 = vmatprep.subr.mxu0 0.0
        %3267 = vmatpush2.msra.mxu0 0.0
        %3268 = vmatprep.subr.mxu0 0.0
        %3269 = vmatpush2.msra.mxu0 0.0
        %3270 = vmatprep.subr.mxu0 0.0
        %3271 = vmatpush2.msra.mxu0 0.0
        %3272 = vmatprep.subr.mxu0 0.0
        %3273 = vmatpush2.msra.mxu0 0.0
        %3274 = vmatprep.subr.mxu0 0.0
        %3275 = vmatpush2.msra.mxu0 0.0
        %3276 = vmatprep.subr.mxu0 0.0
        %3277 = vmatpush2.msra.mxu0 0.0
        %3278 = vmatprep.subr.mxu0 0.0
        %3279 = vmatpush2.msra.mxu0 0.0
        %3280 = vmatprep.subr.mxu0 0.0
        %3281 = vmatpush2.msra.mxu0 0.0
        %3282 = vmatprep.subr.mxu0 0.0
        %3283 = vmatpush2.msra.mxu0 0.0
        %3284 = vmatprep.subr.mxu0 0.0
        %3285 = vmatpush2.msra.mxu0 0.0
        %3286 = vmatprep.subr.mxu0 0.0
        %3287 = vmatpush2.msra.mxu0 0.0
        %3288 = vmatprep.subr.mxu0 0.0
        %3289 = vmatpush2.msra.mxu0 0.0
        %3290 = vmatprep.subr.mxu0 0.0
        %3291 = vmatpush2.msra.mxu0 0.0
        %3292 = vmatprep.mubr.f32.mxu0 0.0
        %3293 = vmatmul.mubr.f32.gmra.mxu0 %v3223
        %v3294 = vpop.f32.mrf.mxu0
        %v3295 = vadd.f32 0.0, %v3294
        %v3296 = vpop.f32.mrf.mxu0
        %3297 = vmatprep.mubr.f32.mxu0 0.0
        %3298 = vmatmul.mubr.f32.gmra.mxu0 %v3226
        %v3299 = vpop.f32.mrf.mxu0
        %v3300 = vadd.f32 0.0, %v3299
        %v3301 = vpop.f32.mrf.mxu0
        %3302 = vdwg.mxu0
        %v3304 = vsel %vm846, %v3220, 0
        %v3307 = vsel %vm846, %v3221, 0
        %3309 = vmatprep.subr.mxu0 0.0
        %3310 = vmatpush1.msra.mxu0 0.0
        %3311 = vmatprep.subr.mxu0 0.0
        %3312 = vmatpush1.msra.mxu0 0.0
        %3313 = vmatprep.subr.mxu0 0.0
        %3314 = vmatpush1.msra.mxu0 0.0
        %3315 = vmatprep.subr.mxu0 0.0
        %3316 = vmatpush1.msra.mxu0 0.0
        %3317 = vmatprep.subr.mxu0 0.0
        %3318 = vmatpush1.msra.mxu0 0.0
        %3319 = vmatprep.subr.mxu0 0.0
        %3320 = vmatpush1.msra.mxu0 0.0
        %3321 = vmatprep.subr.mxu0 0.0
        %3322 = vmatpush1.msra.mxu0 0.0
        %3323 = vmatprep.subr.mxu0 0.0
        %3324 = vmatpush1.msra.mxu0 0.0
        %3325 = vmatprep.subr.mxu0 0.0
        %3326 = vmatpush1.msra.mxu0 0.0
        %3327 = vmatprep.subr.mxu0 0.0
        %3328 = vmatpush1.msra.mxu0 0.0
        %3329 = vmatprep.subr.mxu0 0.0
        %3330 = vmatpush1.msra.mxu0 0.0
        %3331 = vmatprep.subr.mxu0 0.0
        %3332 = vmatpush1.msra.mxu0 0.0
        %3333 = vmatprep.subr.mxu0 0.0
        %3334 = vmatpush1.msra.mxu0 0.0
        %3335 = vmatprep.subr.mxu0 0.0
        %3336 = vmatpush1.msra.mxu0 0.0
        %3337 = vmatprep.subr.mxu0 0.0
        %3338 = vmatpush1.msra.mxu0 %v2998
        %3339 = vmatprep.subr.mxu0 0.0
        %3340 = vmatpush1.msra.mxu0 %v2993
        %3341 = vmatprep.subr.mxu0 0.0
        %3342 = vmatpush2.msra.mxu0 0.0
        %3343 = vmatprep.subr.mxu0 0.0
        %3344 = vmatpush2.msra.mxu0 0.0
        %3345 = vmatprep.subr.mxu0 0.0
        %3346 = vmatpush2.msra.mxu0 0.0
        %3347 = vmatprep.subr.mxu0 0.0
        %3348 = vmatpush2.msra.mxu0 0.0
        %3349 = vmatprep.subr.mxu0 0.0
        %3350 = vmatpush2.msra.mxu0 0.0
        %3351 = vmatprep.subr.mxu0 0.0
        %3352 = vmatpush2.msra.mxu0 0.0
        %3353 = vmatprep.subr.mxu0 0.0
        %3354 = vmatpush2.msra.mxu0 0.0
        %3355 = vmatprep.subr.mxu0 0.0
        %3356 = vmatpush2.msra.mxu0 0.0
        %3357 = vmatprep.subr.mxu0 0.0
        %3358 = vmatpush2.msra.mxu0 0.0
        %3359 = vmatprep.subr.mxu0 0.0
        %3360 = vmatpush2.msra.mxu0 0.0
        %3361 = vmatprep.subr.mxu0 0.0
        %3362 = vmatpush2.msra.mxu0 0.0
        %3363 = vmatprep.subr.mxu0 0.0
        %3364 = vmatpush2.msra.mxu0 0.0
        %3365 = vmatprep.subr.mxu0 0.0
        %3366 = vmatpush2.msra.mxu0 0.0
        %3367 = vmatprep.subr.mxu0 0.0
        %3368 = vmatpush2.msra.mxu0 0.0
        %3369 = vmatprep.subr.mxu0 0.0
        %3370 = vmatpush2.msra.mxu0 0.0
        %3371 = vmatprep.subr.mxu0 0.0
        %3372 = vmatpush2.msra.mxu0 0.0
        %3373 = vmatprep.mubr.f32.mxu0 0.0
        %3374 = vmatmul.mubr.f32.gmra.mxu0 %v3304
        %v3375 = vpop.f32.mrf.mxu0
        %v3376 = vadd.f32 0.0, %v3375
        %v3377 = vpop.f32.mrf.mxu0
        %3378 = vmatprep.mubr.f32.mxu0 0.0
        %3379 = vmatmul.mubr.f32.gmra.mxu0 %v3307
        %v3380 = vpop.f32.mrf.mxu0
        %v3381 = vadd.f32 0.0, %v3380
        %v3382 = vpop.f32.mrf.mxu0
        %3383 = vdwg.mxu0
        %s3384 = scalar_lea.vmem %s4, 24
        %v3385 = vld [vmem:[%s3384] sm:$0xff]
        %v3387 = vsel %vm671, %v3295, 0
        %v3390 = vsel %vm671, %v3300, 0
        %v3393 = vsel %vm671, %v3376, 0
        %v3396 = vsel %vm671, %v3381, 0
        %3398 = vmatprep.subr.mxu0 0.0
        %3399 = vmatpush1.msra.mxu0 0.0
        %3400 = vmatprep.subr.mxu0 0.0
        %3401 = vmatpush1.msra.mxu0 0.0
        %3402 = vmatprep.subr.mxu0 0.0
        %3403 = vmatpush1.msra.mxu0 0.0
        %3404 = vmatprep.subr.mxu0 0.0
        %3405 = vmatpush1.msra.mxu0 0.0
        %3406 = vmatprep.subr.mxu0 0.0
        %3407 = vmatpush1.msra.mxu0 0.0
        %3408 = vmatprep.subr.mxu0 0.0
        %3409 = vmatpush1.msra.mxu0 0.0
        %3410 = vmatprep.subr.mxu0 0.0
        %3411 = vmatpush1.msra.mxu0 0.0
        %3412 = vmatprep.subr.mxu0 0.0
        %3413 = vmatpush1.msra.mxu0 0.0
        %3414 = vmatprep.subr.mxu0 0.0
        %3415 = vmatpush1.msra.mxu0 0.0
        %3416 = vmatprep.subr.mxu0 0.0
        %3417 = vmatpush1.msra.mxu0 0.0
        %3418 = vmatprep.subr.mxu0 0.0
        %3419 = vmatpush1.msra.mxu0 0.0
        %3420 = vmatprep.subr.mxu0 0.0
        %3421 = vmatpush1.msra.mxu0 0.0
        %3422 = vmatprep.subr.mxu0 0.0
        %3423 = vmatpush1.msra.mxu0 0.0
        %3424 = vmatprep.subr.mxu0 0.0
        %3425 = vmatpush1.msra.mxu0 0.0
        %3426 = vmatprep.subr.mxu0 0.0
        %3427 = vmatpush1.msra.mxu0 0.0
        %3428 = vmatprep.subr.mxu0 0.0
        %3429 = vmatpush1.msra.mxu0 %v3385
        %3430 = vmatprep.subr.mxu0 0.0
        %3431 = vmatpush2.msra.mxu0 0.0
        %3432 = vmatprep.subr.mxu0 0.0
        %3433 = vmatpush2.msra.mxu0 0.0
        %3434 = vmatprep.subr.mxu0 0.0
        %3435 = vmatpush2.msra.mxu0 0.0
        %3436 = vmatprep.subr.mxu0 0.0
        %3437 = vmatpush2.msra.mxu0 0.0
        %3438 = vmatprep.subr.mxu0 0.0
        %3439 = vmatpush2.msra.mxu0 0.0
        %3440 = vmatprep.subr.mxu0 0.0
        %3441 = vmatpush2.msra.mxu0 0.0
        %3442 = vmatprep.subr.mxu0 0.0
        %3443 = vmatpush2.msra.mxu0 0.0
        %3444 = vmatprep.subr.mxu0 0.0
        %3445 = vmatpush2.msra.mxu0 0.0
        %3446 = vmatprep.subr.mxu0 0.0
        %3447 = vmatpush2.msra.mxu0 0.0
        %3448 = vmatprep.subr.mxu0 0.0
        %3449 = vmatpush2.msra.mxu0 0.0
        %3450 = vmatprep.subr.mxu0 0.0
        %3451 = vmatpush2.msra.mxu0 0.0
        %3452 = vmatprep.subr.mxu0 0.0
        %3453 = vmatpush2.msra.mxu0 0.0
        %3454 = vmatprep.subr.mxu0 0.0
        %3455 = vmatpush2.msra.mxu0 0.0
        %3456 = vmatprep.subr.mxu0 0.0
        %3457 = vmatpush2.msra.mxu0 0.0
        %3458 = vmatprep.subr.mxu0 0.0
        %3459 = vmatpush2.msra.mxu0 0.0
        %3460 = vmatprep.subr.mxu0 0.0
        %3461 = vmatpush2.msra.mxu0 0.0
        %3462 = vmatprep.mubr.f32.mxu0 0.0
        %3463 = vmatmul.mubr.f32.gmra.mxu0 %v3387
        %v3464 = vpop.f32.mrf.mxu0
        %v3465 = vadd.f32 0.0, %v3464
        %v3466 = vpop.f32.mrf.mxu0
        %3467 = vmatprep.mubr.f32.mxu0 0.0
        %3468 = vmatmul.mubr.f32.gmra.mxu0 %v3390
        %v3469 = vpop.f32.mrf.mxu0
        %v3470 = vadd.f32 0.0, %v3469
        %v3471 = vpop.f32.mrf.mxu0
        %3472 = vmatprep.mubr.f32.mxu0 0.0
        %3473 = vmatmul.mubr.f32.gmra.mxu0 %v3393
        %v3474 = vpop.f32.mrf.mxu0
        %v3475 = vadd.f32 0.0, %v3474
        %v3476 = vpop.f32.mrf.mxu0
        %3477 = vmatprep.mubr.f32.mxu0 0.0
        %3478 = vmatmul.mubr.f32.gmra.mxu0 %v3396
        %v3479 = vpop.f32.mrf.mxu0
        %v3480 = vadd.f32 0.0, %v3479
        %v3481 = vpop.f32.mrf.mxu0
        %3482 = vdwg.mxu0
        %v3483 = vadd.f32 %v2703, %v3465
        %v3484 = vadd.f32 %v2704, %v3470
        %v3485 = vadd.f32 %v2705, %v3475
        %v3486 = vadd.f32 %v2706, %v3480
        %v3487 = vld [vmem:[%s8] sm:$0x1]
        %v3489 = vlaneseq
        %v3490 = vshrl.u32 %v3489, 7
        %v3491 = vsub.s32 0, %v3490
        %v3492 = vrot.slane %v3487, %v3491
        %v3494 = vadd.f32 %v3483, %v3492
        %v3495 = vadd.f32 %v3484, %v3492
        %v3496 = vadd.f32 %v3485, %v3492
        %v3497 = vadd.f32 %v3486, %v3492
        %3498 = vst.msk [vmem:[%s355] sm:$0xff] %vm379, %v3494
        %3499 = vst.msk [vmem:[%s355 + $0x8] sm:$0xff] %vm379, %v3495
        %3500 = vst.msk [vmem:[%s355 + $0x10] sm:$0xff] %vm379, %v3496
        %3501 = vst.msk [vmem:[%s355 + $0x18] sm:$0xff] %vm379, %v3497
        %s3502 = sand.u32 %s247, 1
        %s3503 = scalar_lea.sflag [#allocation3], %s3502
        %s3504 = sand.u32 %s247, 1
        %s3505 = smul.addr %s3504, 32
        %s3506 = scalar_lea.vmem [#allocation2], %s3505
        // Predicated region
        $region61: #{tpu_custom_call.1} parent=59 // pred_check
          %p3507 = pneg %p257
        $region62: #{tpu_custom_call.1} parent=59 // pred_check_branch
          %3509 = sbr.rel (%p3507) target = $region64
        $region63: #{tpu_custom_call.1} parent=59 // pred_region
          %s3510 = smul.u32 2, %s24
          %s3512 = ssub.s32 512, 512
          %3513 = vsyncadd %s3503, %s3512
          %s3514 = smul.addr %s3510, 2
          %s3515 = smul.addr %s3514, 128
          %s3516 = scalar_lea.hbm %s10, %s3515
          %s3517 = sshll.u32 %s3506, 4
          %s3518 = int_to_ptr.vmem [resolvable:$true] %s3517
          %3523 = dma.vmem_to_hbm [thread:$0]  %s3518, 512, %s3516, %s3503, 128, 128, 8
        $region64: #{tpu_custom_call.1} parent=59 // pred_fallthru
          _
      $region60: #{tpu_custom_call.1} parent=5 // pred_fallthru
        _
      %p3524 = scmp.le.s32.totalorder 2, %s19
      // Predicated region
      $region65: #{tpu_custom_call.1} parent=5 // pred_check
        %p3525 = pneg %p3524
      $region66: #{tpu_custom_call.1} parent=5 // pred_check_branch
        %3527 = sbr.rel (%p3525) target = $region68
      $region67: #{tpu_custom_call.1} parent=5 // pred_region
        %s3528 = ssub.s32 %s19, 2
        // Predicated region
        $region69: #{tpu_custom_call.1} parent=67 // pred_check
          %p3529 = pneg %p263
        $region70: #{tpu_custom_call.1} parent=67 // pred_check_branch
          %3531 = sbr.rel (%p3529) target = $region72
        $region71: #{tpu_custom_call.1} parent=67 // pred_region
          %s3532 = sand.u32 %s248, 1
          %s3533 = scalar_lea.sflag [#allocation3], %s3532
          %s3534 = sand.u32 %s248, 1
          %s3535 = smul.addr %s3534, 32
          %s3536 = scalar_lea.vmem [#allocation2], %s3535
          %3537 = dma.done %s3533, 512
        $region72: #{tpu_custom_call.1} parent=67 // pred_fallthru
          _
      $region68: #{tpu_custom_call.1} parent=5 // pred_fallthru
        _
    $region6: #{tpu_custom_call.1} parent=1 // loop_footer
      %s23 = sadd.s32 1, %s19
    $region7: #{tpu_custom_call.1} parent=1 // loop_footer_branch
      %18 = sbr.rel target = $region3
    $region8: #{tpu_custom_call.1} parent=1 // loop_exit
      _
    %3538 = vsyncpa [#allocation3], 1
    %s3539 = scalar_lea.sflag [#allocation3], 1
    %3540 = vsyncpa %s3539, 1

</llo_original>
